<compile_context>
chip_gen: v5e
topology: v5e:2x2
jax: 0.10.0
libtpu: 0.0.40
codegen_flags: <defaults>
</compile_context>

<pallas_src>
import functools

import jax
import jax.numpy as jnp
from jax.experimental import pallas as pl
from jax.experimental.pallas import tpu as pltpu


_VMEM_LIMIT = 32 * 1024 * 1024  # safe on v5e/v6e/v7x; far above actual per-tile usage


def _round_up(x, m):
    return (x + m - 1) // m * m


def _pick_block_rows(M, block_m, *, min_split=256):
    """Row-tile size: large tiles for HBM-roofline efficiency, but guarantee >=2
    grid programs once M is big enough so the "parallel" axis can shard across
    both v7x TensorCores (no effect on single-TC v5e/v6e)."""
    if M <= min_split:
        return M                                          # single full block (always legal)
    return min(block_m, _round_up(pl.cdiv(M, 2), 16))     # 16 = bf16 sublane tile


def _pick_group(M, N):
    """Largest g in {4,2,1} with g*N <= 128 and g | M (lane-dense conv outputs)."""
    g = max(1, min(4, 128 // max(N, 1)))
    while g > 1 and M % g:
        g //= 2
    return g


# ----------------------------------------------------------------------------
# Pallas kernel: tiled  relu(x @ w + b)   (conv layers after im2col)
# ----------------------------------------------------------------------------
def _matmul_bias_kernel(x_ref, w_ref, b_ref, o_ref, *, apply_relu):
    y = jnp.dot(x_ref[...], w_ref[...], preferred_element_type=jnp.float32)
    y = y + b_ref[...]
    if apply_relu:
        y = jnp.maximum(y, 0.0)
    o_ref[...] = y.astype(o_ref.dtype)


def matmul_bias(x, w, b, *, apply_relu=True, out_dtype=jnp.bfloat16, block_m=1024):
    """relu(x @ w + b), tiled over rows of x with a parallel (pipelined) grid."""
    M, K = x.shape
    K2, N = w.shape
    assert K == K2
    bm = _pick_block_rows(M, block_m)
    grid_m = pl.cdiv(M, bm)
    kernel = functools.partial(_matmul_bias_kernel, apply_relu=apply_relu)
    cost = pl.CostEstimate(
        flops=2 * M * K * N,
        transcendentals=0,
        bytes_accessed=(x.dtype.itemsize * M * K + w.dtype.itemsize * K * N
                        + jnp.dtype(out_dtype).itemsize * M * N + 4 * N),
    )
    return pl.pallas_call(
        kernel,
        out_shape=jax.ShapeDtypeStruct((M, N), out_dtype),
        grid=(grid_m,),
        in_specs=[
            pl.BlockSpec((bm, K), lambda i: (i, 0)),   # x tile, pipelined over M
            pl.BlockSpec((K, N), lambda i: (0, 0)),    # weights resident
            pl.BlockSpec((1, N), lambda i: (0, 0)),    # bias resident
        ],
        out_specs=pl.BlockSpec((bm, N), lambda i: (i, 0)),
        compiler_params=pltpu.CompilerParams(
            dimension_semantics=("parallel",),
            vmem_limit_bytes=_VMEM_LIMIT,
        ),
        cost_estimate=cost,
    )(x, w, b.reshape(1, N))


# ----------------------------------------------------------------------------
# Pallas kernel: fused MLP head  relu(fc1) -> relu(fc2) -> q  (concat fused away)
# ----------------------------------------------------------------------------
def _mlp_head_kernel(feat_ref, act_ref, w1_ref, w1a_ref, b1_ref,
                     w2_ref, b2_ref, w3t_ref, b3_ref, o_ref, *, action_dims):
    # fc1: single K=2*1024 bf16 dot (the obs|goal concat is a zero-copy view) ...
    h = jnp.dot(feat_ref[...], w1_ref[...], preferred_element_type=jnp.float32)
    # ... plus the tiny action contribution as A unrolled VPU broadcast-mul adds
    # (keeps a K=A matmul off the MXU); kept in f32 (no bf16 VPU on v5e).
    act = act_ref[...]                     # (bm, A) f32
    w1a = w1a_ref[...]                     # (A, H) f32
    for a in range(action_dims):
        h = h + act[:, a:a + 1] * w1a[a:a + 1, :]
    h = jnp.maximum(h + b1_ref[...], 0.0)
    # fc2: bf16 MXU dot, f32 accumulate.
    h = jnp.dot(h.astype(jnp.bfloat16), w2_ref[...],
                preferred_element_type=jnp.float32) + b2_ref[...]
    h = jnp.maximum(h, 0.0)
    # q head: (H,1) projection as broadcast-mul + lane reduction (keeps an N=1
    # matmul off the MXU); bias is an SMEM scalar.
    q = jnp.sum(h * w3t_ref[...], axis=-1, keepdims=True) + b3_ref[0]
    o_ref[...] = q.astype(o_ref.dtype)


def mlp_head(feat2, action, p, *, block_m=512):
    # block_m capped at 512: obs|goal tile (bm,2048) bf16 double-buffered plus
    # resident w1/w2 stays far below v7x's 64 MiB VMEM.  If profiling ever shows
    # heavy spill traffic from the f32 fc1 accumulator, drop block_m to 128.
    B, F2 = feat2.shape
    A = action.shape[1]
    H = p["w2"].shape[0]
    bm = _pick_block_rows(B, block_m, min_split=64)
    grid_m = pl.cdiv(B, bm)
    kernel = functools.partial(_mlp_head_kernel, action_dims=A)
    cost = pl.CostEstimate(
        flops=2 * B * (F2 * H + A * H + H * H + H),
        transcendentals=0,
        bytes_accessed=(2 * B * F2 + 4 * B * A + 2 * F2 * H + 4 * A * H
                        + 2 * H * H + 12 * H + 4 * B + 4),
    )
    fixed = lambda i: (0, 0)
    tiled = lambda i: (i, 0)
    return pl.pallas_call(
        kernel,
        out_shape=jax.ShapeDtypeStruct((B, 1), jnp.float32),
        grid=(grid_m,),
        in_specs=[
            pl.BlockSpec((bm, F2), tiled),             # [obs_feat | goal_feat] bf16
            pl.BlockSpec((bm, A), tiled),              # action (f32, VPU path)
            pl.BlockSpec((F2, H), fixed),              # w1 obs|goal rows (bf16)
            pl.BlockSpec((A, H), fixed),               # w1 action rows (f32)
            pl.BlockSpec((1, H), fixed),               # b1
            pl.BlockSpec((H, H), fixed),               # w2 (bf16)
            pl.BlockSpec((1, H), fixed),               # b2
            pl.BlockSpec((1, H), fixed),               # w3 as a row (f32)
            pl.BlockSpec(memory_space=pltpu.MemorySpace.SMEM),   # b3 scalar
        ],
        out_specs=pl.BlockSpec((bm, 1), tiled),
        compiler_params=pltpu.CompilerParams(
            dimension_semantics=("parallel",),
            vmem_limit_bytes=_VMEM_LIMIT,
        ),
        cost_estimate=cost,
    )(feat2, action, p["w1_og"], p["w1_act"], p["b1"].reshape(1, H),
      p["w2"], p["b2"].reshape(1, H), p["w3t"], p["b3"])


# ----------------------------------------------------------------------------
# Conv trunk: NHWC im2col (XLA glue, bf16) + Pallas matmul
# ----------------------------------------------------------------------------
def im2col_nhwc(x, kh, kw, stride, out_dtype=jnp.bfloat16):
    # x: (B, H, W, C) -> patches (B*OH*OW, KH*KW*C); feature idx = (i*KW+j)*C + c.
    # Slicing + stack + bf16 cast fuse into one XLA gather emitting bf16 patches.
    B, H, W, C = x.shape
    oh = (H - kh) // stride + 1
    ow = (W - kw) // stride + 1
    cols = []
    for i in range(kh):
        for j in range(kw):
            cols.append(x[:, i:i + stride * oh:stride, j:j + stride * ow:stride, :])
    p = jnp.stack(cols, axis=3)                        # (B, OH, OW, KH*KW, C)
    return p.reshape(B * oh * ow, kh * kw * C).astype(out_dtype), oh, ow


def conv2d_relu_nhwc(x, wm, b, kh, kw, stride):
    # x: NHWC; wm: (KH*KW*Cin, Cout) bf16 pre-permuted to NHWC patch order.
    B = x.shape[0]
    K, N = wm.shape
    patches, oh, ow = im2col_nhwc(x, kh, kw, stride)
    M = patches.shape[0]
    g = _pick_group(M, N)
    if g > 1:
        # Lane-dense output: view g consecutive patch rows as one row (zero-copy,
        # row-major identical) and expand the weights block-diagonally so the MXU
        # writes full 128-lane rows (N: 32/64 -> 128) and K becomes a clean
        # multiple of 128 (192->768, 512->1024, 576->1152).
        wm_g = jnp.kron(jnp.eye(g, dtype=wm.dtype), wm)     # (g*K, g*N) block-diag
        b_g = jnp.tile(b, g)                                # (g*N,)
        y = matmul_bias(patches.reshape(M // g, g * K), wm_g, b_g)
        y = y.reshape(M, N)                                 # row-major identical
    else:
        y = matmul_bias(patches, wm, b)
    return y.reshape(B, oh, ow, N)                          # stays NHWC -> no transpose


def conv_net_forward(flat, p):
    # The torch reshape/view/permute chain == "interpret flat as HWC"; in NHWC
    # layout this is a pure reshape (no data movement).
    M = flat.shape[0]
    x = flat.reshape(M, 64, 64, 3)
    x = conv2d_relu_nhwc(x, p["c1w"], p["c1b"], 8, 8, 4)   # (M, 15, 15, 32)
    x = conv2d_relu_nhwc(x, p["c2w"], p["c2b"], 4, 4, 2)   # (M, 6, 6, 64)
    x = conv2d_relu_nhwc(x, p["c3w"], p["c3b"], 3, 3, 1)   # (M, 4, 4, 64)
    return x.reshape(M, -1)                                # (M, 1024), NHWC flatten


def flatten_mlp_img_forward(params, observation_goal, action):
    B, D = observation_goal.shape
    half = D // 2
    # obs + goal through the conv trunk in ONE pass.  The (2B, half) view is a
    # zero-copy reshape (rows obs0, goal0, obs1, goal1, ...) — no HBM concat.
    stacked = observation_goal.reshape(2 * B, half)
    feat = conv_net_forward(stacked, params)               # (2B, 1024) bf16
    # (B, 2048) view == [obs_feat_b | goal_feat_b] per row, again zero-copy.
    feat2 = feat.reshape(B, 2 * feat.shape[1])
    return mlp_head(feat2, action, params)


# ----------------------------------------------------------------------------
# Parameters: torch layout + one-time conversion to kernel layout
# ----------------------------------------------------------------------------
def init_torch_params(key, hidden_size, action_dims):
    """Parameters in PyTorch layout: conv OIHW, linear (out, in)."""
    ks = jax.random.split(key, 9)

    def conv_w(k, shape):  # torch Conv2d default (kaiming-uniform-like)
        fan_in = shape[1] * shape[2] * shape[3]
        bound = 1.0 / jnp.sqrt(fan_in)
        return jax.random.uniform(k, shape, jnp.float32, -bound, bound)

    def conv_b(k, cout, fan_in):
        bound = 1.0 / jnp.sqrt(fan_in)
        return jax.random.uniform(k, (cout,), jnp.float32, -bound, bound)

    def xavier(k, shape):  # weights_init_: xavier_uniform weights, zero bias
        bound = jnp.sqrt(6.0 / (shape[0] + shape[1]))
        return jax.random.uniform(k, shape, jnp.float32, -bound, bound)

    feat = 1024 * 2 + action_dims
    return dict(
        c1w=conv_w(ks[0], (32, 3, 8, 8)),   c1b=conv_b(ks[1], 32, 3 * 8 * 8),
        c2w=conv_w(ks[2], (64, 32, 4, 4)),  c2b=conv_b(ks[3], 64, 32 * 4 * 4),
        c3w=conv_w(ks[4], (64, 64, 3, 3)),  c3b=conv_b(ks[5], 64, 64 * 3 * 3),
        w1=xavier(ks[6], (hidden_size, feat)),        b1=jnp.zeros((hidden_size,), jnp.float32),
        w2=xavier(ks[7], (hidden_size, hidden_size)), b2=jnp.zeros((hidden_size,), jnp.float32),
        w3=xavier(ks[8], (1, hidden_size)),           b3=jnp.zeros((1,), jnp.float32),
    )


def prepare_params(tp):
    """One-time offline conversion of torch-layout params to kernel layout.

    * conv weights: OIHW -> (KH*KW*Cin, Cout) bf16, rows in NHWC im2col order.
    * fc1: transpose, permute the obs/goal weight rows from torch's NCHW flatten
      order to the NHWC flatten order of the NHWC trunk, and concatenate them so
      a single K=2048 dot matches the zero-copy (B, 2048) feature view; action
      rows stay separate (small f32 VPU path in the head).
    * MXU weights in bf16 (keep f32 accumulation); biases / VPU weights in f32.
    """
    def conv_wmat(wt):
        cout, cin, kh, kw = wt.shape
        return (jnp.transpose(wt, (2, 3, 1, 0))
                .reshape(kh * kw * cin, cout).astype(jnp.bfloat16))

    OH = OW = 4
    C = 64
    h = jnp.arange(OH)[:, None, None]
    w = jnp.arange(OW)[None, :, None]
    c = jnp.arange(C)[None, None, :]
    perm = (c * OH * OW + h * OW + w).reshape(-1)      # NHWC position -> NCHW index
    nf = OH * OW * C                                   # 1024

    w1t = tp["w1"].T                                   # (2*1024 + A, H), torch row order
    w1_og = jnp.concatenate([w1t[:nf][perm], w1t[nf:2 * nf][perm]], axis=0)
    return dict(
        c1w=conv_wmat(tp["c1w"]), c1b=tp["c1b"],
        c2w=conv_wmat(tp["c2w"]), c2b=tp["c2b"],
        c3w=conv_wmat(tp["c3w"]), c3b=tp["c3b"],
        w1_og=w1_og.astype(jnp.bfloat16),              # (2048, H) bf16
        w1_act=w1t[2 * nf:],                           # (A, H) f32 (VPU path)
        b1=tp["b1"],
        w2=tp["w2"].T.astype(jnp.bfloat16), b2=tp["b2"],
        w3t=tp["w3"],                                  # (1, H) f32 (VPU path)
        b3=tp["b3"],
    )


if __name__ == "__main__":
    B, hidden_size, action_dims = 2, 32, 4
    key = jax.random.PRNGKey(0)
    pkey, okey, akey = jax.random.split(key, 3)

    torch_params = init_torch_params(pkey, hidden_size, action_dims)
    params = prepare_params(torch_params)

    # observation_goal = [observation | goal], each half a flat 3*64*64 image
    observation_goal = jax.random.uniform(okey, (B, 2 * 3 * 64 * 64), jnp.float32)
    action = jax.random.uniform(akey, (B, action_dims), jnp.float32, -1.0, 1.0)

    fwd = jax.jit(flatten_mlp_img_forward)
    q_value = fwd(params, observation_goal, action)
    jax.block_until_ready(q_value)
    assert q_value.shape == (B, 1) and q_value.dtype == jnp.float32
    print("KERNEL_OK")
</pallas_src>

<mosaic_0001>
module attributes {stable_mosaic.version = 11 : i64} {
  func.func @_matmul_bias_kernel(%arg0: i32, %arg1: memref<225x768xbf16, #tpu.memory_space<vmem>>, %arg2: memref<768x128xbf16, #tpu.memory_space<vmem>>, %arg3: memref<1x128xf32, #tpu.memory_space<vmem>>, %arg4: memref<225x128xbf16, #tpu.memory_space<vmem>>) attributes {dimension_semantics = [#tpu.dimension_semantics<parallel>], iteration_bounds = array<i64: 1>, scalar_prefetch = 0 : i64, scratch_operands = 0 : i64, tpu.core_type = #tpu.core_type<tc>, window_params = [{transform_indices = @transform_0, window_bounds = array<i64: 225, 768>}, {pipeline_mode = #tpu.pipeline_mode<synchronous>, transform_indices = @transform_1, window_bounds = array<i64: 768, 128>}, {pipeline_mode = #tpu.pipeline_mode<synchronous>, transform_indices = @transform_2, window_bounds = array<i64: 1, 128>}, {transform_indices = @transform_3, window_bounds = array<i64: 225, 128>}]} {
    %c0 = arith.constant 0 : index
    %c0_0 = arith.constant 0 : index
    %0 = vector.load %arg1[%c0, %c0_0] : memref<225x768xbf16, #tpu.memory_space<vmem>>, vector<225x768xbf16>
    %c0_1 = arith.constant 0 : index
    %c0_2 = arith.constant 0 : index
    %1 = vector.load %arg2[%c0_1, %c0_2] : memref<768x128xbf16, #tpu.memory_space<vmem>>, vector<768x128xbf16>
    %cst = arith.constant dense<0.000000e+00> : vector<225x128xf32>
    %2 = tpu.matmul %0, %1, %cst {dimension_numbers = #tpu.dot_dimension_numbers<[1], [0], [0], [1], [0, 0, 1, 1], [], []>} : vector<225x768xbf16>, vector<768x128xbf16>, vector<225x128xf32> -> vector<225x128xf32>
    %c0_3 = arith.constant 0 : index
    %c0_4 = arith.constant 0 : index
    %3 = vector.load %arg3[%c0_3, %c0_4] : memref<1x128xf32, #tpu.memory_space<vmem>>, vector<1x128xf32>
    %4 = vector.broadcast %3 : vector<1x128xf32> to vector<225x128xf32>
    %5 = arith.addf %2, %4 : vector<225x128xf32>
    %cst_5 = arith.constant 0.000000e+00 : f32
    %6 = vector.broadcast %cst_5 : f32 to vector<225x128xf32>
    %7 = arith.maximumf %5, %6 : vector<225x128xf32>
    %8 = arith.truncf %7 : vector<225x128xf32> to vector<225x128xbf16>
    %c0_6 = arith.constant 0 : index
    %c0_7 = arith.constant 0 : index
    %9 = vector.load %arg4[%c0_6, %c0_7] : memref<225x128xbf16, #tpu.memory_space<vmem>>, vector<225x128xbf16>
    tpu.vector_store %arg4[%c0_6, %c0_7], %8 {strides = array<i32>} : memref<225x128xbf16, #tpu.memory_space<vmem>>, vector<225x128xbf16>,
    return
  }
  func.func @transform_0(%arg0: i32) -> (i32, i32) {
    %c0_i32 = arith.constant 0 : i32
    %c0_i32_0 = arith.constant 0 : i32
    return %arg0, %c0_i32 : i32, i32
  }
  func.func @transform_1(%arg0: i32) -> (i32, i32) {
    %c0_i32 = arith.constant 0 : i32
    %c0_i32_0 = arith.constant 0 : i32
    %c0_i32_1 = arith.constant 0 : i32
    return %c0_i32, %c0_i32_0 : i32, i32
  }
  func.func @transform_2(%arg0: i32) -> (i32, i32) {
    %c0_i32 = arith.constant 0 : i32
    %c0_i32_0 = arith.constant 0 : i32
    %c0_i32_1 = arith.constant 0 : i32
    return %c0_i32, %c0_i32_0 : i32, i32
  }
  func.func @transform_3(%arg0: i32) -> (i32, i32) {
    %c0_i32 = arith.constant 0 : i32
    %c0_i32_0 = arith.constant 0 : i32
    return %arg0, %c0_i32 : i32, i32
  }
}

module attributes {stable_mosaic.version = 11 : i64} {
  func.func @_matmul_bias_kernel(%arg0: i32, %arg1: memref<72x1024xbf16, #tpu.memory_space<vmem>>, %arg2: memref<1024x128xbf16, #tpu.memory_space<vmem>>, %arg3: memref<1x128xf32, #tpu.memory_space<vmem>>, %arg4: memref<72x128xbf16, #tpu.memory_space<vmem>>) attributes {dimension_semantics = [#tpu.dimension_semantics<parallel>], iteration_bounds = array<i64: 1>, scalar_prefetch = 0 : i64, scratch_operands = 0 : i64, tpu.core_type = #tpu.core_type<tc>, window_params = [{transform_indices = @transform_0, window_bounds = array<i64: 72, 1024>}, {pipeline_mode = #tpu.pipeline_mode<synchronous>, transform_indices = @transform_1, window_bounds = array<i64: 1024, 128>}, {pipeline_mode = #tpu.pipeline_mode<synchronous>, transform_indices = @transform_2, window_bounds = array<i64: 1, 128>}, {transform_indices = @transform_3, window_bounds = array<i64: 72, 128>}]} {
    %c0 = arith.constant 0 : index
    %c0_0 = arith.constant 0 : index
    %0 = vector.load %arg1[%c0, %c0_0] : memref<72x1024xbf16, #tpu.memory_space<vmem>>, vector<72x1024xbf16>
    %c0_1 = arith.constant 0 : index
    %c0_2 = arith.constant 0 : index
    %1 = vector.load %arg2[%c0_1, %c0_2] : memref<1024x128xbf16, #tpu.memory_space<vmem>>, vector<1024x128xbf16>
    %cst = arith.constant dense<0.000000e+00> : vector<72x128xf32>
    %2 = tpu.matmul %0, %1, %cst {dimension_numbers = #tpu.dot_dimension_numbers<[1], [0], [0], [1], [0, 0, 1, 1], [], []>} : vector<72x1024xbf16>, vector<1024x128xbf16>, vector<72x128xf32> -> vector<72x128xf32>
    %c0_3 = arith.constant 0 : index
    %c0_4 = arith.constant 0 : index
    %3 = vector.load %arg3[%c0_3, %c0_4] : memref<1x128xf32, #tpu.memory_space<vmem>>, vector<1x128xf32>
    %4 = vector.broadcast %3 : vector<1x128xf32> to vector<72x128xf32>
    %5 = arith.addf %2, %4 : vector<72x128xf32>
    %cst_5 = arith.constant 0.000000e+00 : f32
    %6 = vector.broadcast %cst_5 : f32 to vector<72x128xf32>
    %7 = arith.maximumf %5, %6 : vector<72x128xf32>
    %8 = arith.truncf %7 : vector<72x128xf32> to vector<72x128xbf16>
    %c0_6 = arith.constant 0 : index
    %c0_7 = arith.constant 0 : index
    %9 = vector.load %arg4[%c0_6, %c0_7] : memref<72x128xbf16, #tpu.memory_space<vmem>>, vector<72x128xbf16>
    tpu.vector_store %arg4[%c0_6, %c0_7], %8 {strides = array<i32>} : memref<72x128xbf16, #tpu.memory_space<vmem>>, vector<72x128xbf16>,
    return
  }
  func.func @transform_0(%arg0: i32) -> (i32, i32) {
    %c0_i32 = arith.constant 0 : i32
    %c0_i32_0 = arith.constant 0 : i32
    return %arg0, %c0_i32 : i32, i32
  }
  func.func @transform_1(%arg0: i32) -> (i32, i32) {
    %c0_i32 = arith.constant 0 : i32
    %c0_i32_0 = arith.constant 0 : i32
    %c0_i32_1 = arith.constant 0 : i32
    return %c0_i32, %c0_i32_0 : i32, i32
  }
  func.func @transform_2(%arg0: i32) -> (i32, i32) {
    %c0_i32 = arith.constant 0 : i32
    %c0_i32_0 = arith.constant 0 : i32
    %c0_i32_1 = arith.constant 0 : i32
    return %c0_i32, %c0_i32_0 : i32, i32
  }
  func.func @transform_3(%arg0: i32) -> (i32, i32) {
    %c0_i32 = arith.constant 0 : i32
    %c0_i32_0 = arith.constant 0 : i32
    return %arg0, %c0_i32 : i32, i32
  }
}

module attributes {stable_mosaic.version = 11 : i64} {
  func.func @_matmul_bias_kernel(%arg0: i32, %arg1: memref<32x1152xbf16, #tpu.memory_space<vmem>>, %arg2: memref<1152x128xbf16, #tpu.memory_space<vmem>>, %arg3: memref<1x128xf32, #tpu.memory_space<vmem>>, %arg4: memref<32x128xbf16, #tpu.memory_space<vmem>>) attributes {dimension_semantics = [#tpu.dimension_semantics<parallel>], iteration_bounds = array<i64: 1>, scalar_prefetch = 0 : i64, scratch_operands = 0 : i64, tpu.core_type = #tpu.core_type<tc>, window_params = [{transform_indices = @transform_0, window_bounds = array<i64: 32, 1152>}, {pipeline_mode = #tpu.pipeline_mode<synchronous>, transform_indices = @transform_1, window_bounds = array<i64: 1152, 128>}, {pipeline_mode = #tpu.pipeline_mode<synchronous>, transform_indices = @transform_2, window_bounds = array<i64: 1, 128>}, {transform_indices = @transform_3, window_bounds = array<i64: 32, 128>}]} {
    %c0 = arith.constant 0 : index
    %c0_0 = arith.constant 0 : index
    %0 = vector.load %arg1[%c0, %c0_0] : memref<32x1152xbf16, #tpu.memory_space<vmem>>, vector<32x1152xbf16>
    %c0_1 = arith.constant 0 : index
    %c0_2 = arith.constant 0 : index
    %1 = vector.load %arg2[%c0_1, %c0_2] : memref<1152x128xbf16, #tpu.memory_space<vmem>>, vector<1152x128xbf16>
    %cst = arith.constant dense<0.000000e+00> : vector<32x128xf32>
    %2 = tpu.matmul %0, %1, %cst {dimension_numbers = #tpu.dot_dimension_numbers<[1], [0], [0], [1], [0, 0, 1, 1], [], []>} : vector<32x1152xbf16>, vector<1152x128xbf16>, vector<32x128xf32> -> vector<32x128xf32>
    %c0_3 = arith.constant 0 : index
    %c0_4 = arith.constant 0 : index
    %3 = vector.load %arg3[%c0_3, %c0_4] : memref<1x128xf32, #tpu.memory_space<vmem>>, vector<1x128xf32>
    %4 = vector.broadcast %3 : vector<1x128xf32> to vector<32x128xf32>
    %5 = arith.addf %2, %4 : vector<32x128xf32>
    %cst_5 = arith.constant 0.000000e+00 : f32
    %6 = vector.broadcast %cst_5 : f32 to vector<32x128xf32>
    %7 = arith.maximumf %5, %6 : vector<32x128xf32>
    %8 = arith.truncf %7 : vector<32x128xf32> to vector<32x128xbf16>
    %c0_6 = arith.constant 0 : index
    %c0_7 = arith.constant 0 : index
    %9 = vector.load %arg4[%c0_6, %c0_7] : memref<32x128xbf16, #tpu.memory_space<vmem>>, vector<32x128xbf16>
    tpu.vector_store %arg4[%c0_6, %c0_7], %8 {strides = array<i32>} : memref<32x128xbf16, #tpu.memory_space<vmem>>, vector<32x128xbf16>,
    return
  }
  func.func @transform_0(%arg0: i32) -> (i32, i32) {
    %c0_i32 = arith.constant 0 : i32
    %c0_i32_0 = arith.constant 0 : i32
    return %arg0, %c0_i32 : i32, i32
  }
  func.func @transform_1(%arg0: i32) -> (i32, i32) {
    %c0_i32 = arith.constant 0 : i32
    %c0_i32_0 = arith.constant 0 : i32
    %c0_i32_1 = arith.constant 0 : i32
    return %c0_i32, %c0_i32_0 : i32, i32
  }
  func.func @transform_2(%arg0: i32) -> (i32, i32) {
    %c0_i32 = arith.constant 0 : i32
    %c0_i32_0 = arith.constant 0 : i32
    %c0_i32_1 = arith.constant 0 : i32
    return %c0_i32, %c0_i32_0 : i32, i32
  }
  func.func @transform_3(%arg0: i32) -> (i32, i32) {
    %c0_i32 = arith.constant 0 : i32
    %c0_i32_0 = arith.constant 0 : i32
    return %arg0, %c0_i32 : i32, i32
  }
}

module attributes {stable_mosaic.version = 11 : i64} {
  func.func @_mlp_head_kernel(%arg0: i32, %arg1: memref<2x2048xbf16, #tpu.memory_space<vmem>>, %arg2: memref<2x4xf32, #tpu.memory_space<vmem>>, %arg3: memref<2048x32xbf16, #tpu.memory_space<vmem>>, %arg4: memref<4x32xf32, #tpu.memory_space<vmem>>, %arg5: memref<1x32xf32, #tpu.memory_space<vmem>>, %arg6: memref<32x32xbf16, #tpu.memory_space<vmem>>, %arg7: memref<1x32xf32, #tpu.memory_space<vmem>>, %arg8: memref<1x32xf32, #tpu.memory_space<vmem>>, %arg9: memref<1xf32, #tpu.memory_space<smem>>, %arg10: memref<2x1xf32, #tpu.memory_space<vmem>>) attributes {dimension_semantics = [#tpu.dimension_semantics<parallel>], iteration_bounds = array<i64: 1>, scalar_prefetch = 0 : i64, scratch_operands = 0 : i64, tpu.core_type = #tpu.core_type<tc>, window_params = [{transform_indices = @transform_0, window_bounds = array<i64: 2, 2048>}, {transform_indices = @transform_1, window_bounds = array<i64: 2, 4>}, {pipeline_mode = #tpu.pipeline_mode<synchronous>, transform_indices = @transform_2, window_bounds = array<i64: 2048, 32>}, {pipeline_mode = #tpu.pipeline_mode<synchronous>, transform_indices = @transform_3, window_bounds = array<i64: 4, 32>}, {pipeline_mode = #tpu.pipeline_mode<synchronous>, transform_indices = @transform_4, window_bounds = array<i64: 1, 32>}, {pipeline_mode = #tpu.pipeline_mode<synchronous>, transform_indices = @transform_5, window_bounds = array<i64: 32, 32>}, {pipeline_mode = #tpu.pipeline_mode<synchronous>, transform_indices = @transform_6, window_bounds = array<i64: 1, 32>}, {pipeline_mode = #tpu.pipeline_mode<synchronous>, transform_indices = @transform_7, window_bounds = array<i64: 1, 32>}, {transform_indices = @transform_8, window_bounds = array<i64: 1>}, {transform_indices = @transform_9, window_bounds = array<i64: 2, 1>}]} {
    %c0 = arith.constant 0 : index
    %c0_0 = arith.constant 0 : index
    %0 = vector.load %arg1[%c0, %c0_0] : memref<2x2048xbf16, #tpu.memory_space<vmem>>, vector<2x2048xbf16>
    %c0_1 = arith.constant 0 : index
    %c0_2 = arith.constant 0 : index
    %1 = vector.load %arg3[%c0_1, %c0_2] : memref<2048x32xbf16, #tpu.memory_space<vmem>>, vector<2048x32xbf16>
    %cst = arith.constant dense<0.000000e+00> : vector<2x32xf32>
    %2 = tpu.matmul %0, %1, %cst {dimension_numbers = #tpu.dot_dimension_numbers<[1], [0], [0], [1], [0, 0, 1, 1], [], []>} : vector<2x2048xbf16>, vector<2048x32xbf16>, vector<2x32xf32> -> vector<2x32xf32>
    %c0_3 = arith.constant 0 : index
    %c0_4 = arith.constant 0 : index
    %3 = vector.load %arg2[%c0_3, %c0_4] : memref<2x4xf32, #tpu.memory_space<vmem>>, vector<2x4xf32>
    %c0_5 = arith.constant 0 : index
    %c0_6 = arith.constant 0 : index
    %4 = vector.load %arg4[%c0_5, %c0_6] : memref<4x32xf32, #tpu.memory_space<vmem>>, vector<4x32xf32>
    %5 = vector.extract_strided_slice %3 {offsets = [0, 0], sizes = [2, 1], strides = [1, 1]} : vector<2x4xf32> to vector<2x1xf32>
    %6 = vector.extract_strided_slice %4 {offsets = [0, 0], sizes = [1, 32], strides = [1, 1]} : vector<4x32xf32> to vector<1x32xf32>
    %7 = vector.broadcast %5 : vector<2x1xf32> to vector<2x32xf32>
    %8 = vector.broadcast %6 : vector<1x32xf32> to vector<2x32xf32>
    %9 = arith.mulf %7, %8 : vector<2x32xf32>
    %10 = arith.addf %2, %9 : vector<2x32xf32>
    %11 = vector.extract_strided_slice %3 {offsets = [0, 1], sizes = [2, 1], strides = [1, 1]} : vector<2x4xf32> to vector<2x1xf32>
    %12 = vector.extract_strided_slice %4 {offsets = [1, 0], sizes = [1, 32], strides = [1, 1]} : vector<4x32xf32> to vector<1x32xf32>
    %13 = vector.broadcast %11 : vector<2x1xf32> to vector<2x32xf32>
    %14 = vector.broadcast %12 : vector<1x32xf32> to vector<2x32xf32>
    %15 = arith.mulf %13, %14 : vector<2x32xf32>
    %16 = arith.addf %10, %15 : vector<2x32xf32>
    %17 = vector.extract_strided_slice %3 {offsets = [0, 2], sizes = [2, 1], strides = [1, 1]} : vector<2x4xf32> to vector<2x1xf32>
    %18 = vector.extract_strided_slice %4 {offsets = [2, 0], sizes = [1, 32], strides = [1, 1]} : vector<4x32xf32> to vector<1x32xf32>
    %19 = vector.broadcast %17 : vector<2x1xf32> to vector<2x32xf32>
    %20 = vector.broadcast %18 : vector<1x32xf32> to vector<2x32xf32>
    %21 = arith.mulf %19, %20 : vector<2x32xf32>
    %22 = arith.addf %16, %21 : vector<2x32xf32>
    %23 = vector.extract_strided_slice %3 {offsets = [0, 3], sizes = [2, 1], strides = [1, 1]} : vector<2x4xf32> to vector<2x1xf32>
    %24 = vector.extract_strided_slice %4 {offsets = [3, 0], sizes = [1, 32], strides = [1, 1]} : vector<4x32xf32> to vector<1x32xf32>
    %25 = vector.broadcast %23 : vector<2x1xf32> to vector<2x32xf32>
    %26 = vector.broadcast %24 : vector<1x32xf32> to vector<2x32xf32>
    %27 = arith.mulf %25, %26 : vector<2x32xf32>
    %28 = arith.addf %22, %27 : vector<2x32xf32>
    %c0_7 = arith.constant 0 : index
    %c0_8 = arith.constant 0 : index
    %29 = vector.load %arg5[%c0_7, %c0_8] : memref<1x32xf32, #tpu.memory_space<vmem>>, vector<1x32xf32>
    %30 = vector.broadcast %29 : vector<1x32xf32> to vector<2x32xf32>
    %31 = arith.addf %28, %30 : vector<2x32xf32>
    %cst_9 = arith.constant 0.000000e+00 : f32
    %32 = vector.broadcast %cst_9 : f32 to vector<2x32xf32>
    %33 = arith.maximumf %31, %32 : vector<2x32xf32>
    %34 = arith.truncf %33 : vector<2x32xf32> to vector<2x32xbf16>
    %c0_10 = arith.constant 0 : index
    %c0_11 = arith.constant 0 : index
    %35 = vector.load %arg6[%c0_10, %c0_11] : memref<32x32xbf16, #tpu.memory_space<vmem>>, vector<32x32xbf16>
    %cst_12 = arith.constant dense<0.000000e+00> : vector<2x32xf32>
    %36 = tpu.matmul %34, %35, %cst_12 {dimension_numbers = #tpu.dot_dimension_numbers<[1], [0], [0], [1], [0, 0, 1, 1], [], []>} : vector<2x32xbf16>, vector<32x32xbf16>, vector<2x32xf32> -> vector<2x32xf32>
    %c0_13 = arith.constant 0 : index
    %c0_14 = arith.constant 0 : index
    %37 = vector.load %arg7[%c0_13, %c0_14] : memref<1x32xf32, #tpu.memory_space<vmem>>, vector<1x32xf32>
    %38 = vector.broadcast %37 : vector<1x32xf32> to vector<2x32xf32>
    %39 = arith.addf %36, %38 : vector<2x32xf32>
    %cst_15 = arith.constant 0.000000e+00 : f32
    %40 = vector.broadcast %cst_15 : f32 to vector<2x32xf32>
    %41 = arith.maximumf %39, %40 : vector<2x32xf32>
    %c0_16 = arith.constant 0 : index
    %c0_17 = arith.constant 0 : index
    %42 = vector.load %arg8[%c0_16, %c0_17] : memref<1x32xf32, #tpu.memory_space<vmem>>, vector<1x32xf32>
    %43 = vector.broadcast %42 : vector<1x32xf32> to vector<2x32xf32>
    %44 = arith.mulf %41, %43 : vector<2x32xf32>
    %cst_18 = arith.constant dense<0.000000e+00> : vector<2xf32>
    %45 = vector.multi_reduction <add>, %44, %cst_18 [1] : vector<2x32xf32> to vector<2xf32>
    %46 = vector.shape_cast %45 : vector<2xf32> to vector<2x1xf32>
    %c0_19 = arith.constant 0 : index
    %47 = memref.load %arg9[%c0_19] : memref<1xf32, #tpu.memory_space<smem>>
    %48 = vector.broadcast %47 : f32 to vector<2x1xf32>
    %49 = arith.addf %46, %48 : vector<2x1xf32>
    %c0_20 = arith.constant 0 : index
    %c0_21 = arith.constant 0 : index
    %50 = vector.load %arg10[%c0_20, %c0_21] : memref<2x1xf32, #tpu.memory_space<vmem>>, vector<2x1xf32>
    tpu.vector_store %arg10[%c0_20, %c0_21], %49 {strides = array<i32>} : memref<2x1xf32, #tpu.memory_space<vmem>>, vector<2x1xf32>,
    return
  }
  func.func @transform_0(%arg0: i32) -> (i32, i32) {
    %c0_i32 = arith.constant 0 : i32
    %c0_i32_0 = arith.constant 0 : i32
    return %arg0, %c0_i32 : i32, i32
  }
  func.func @transform_1(%arg0: i32) -> (i32, i32) {
    %c0_i32 = arith.constant 0 : i32
    %c0_i32_0 = arith.constant 0 : i32
    return %arg0, %c0_i32 : i32, i32
  }
  func.func @transform_2(%arg0: i32) -> (i32, i32) {
    %c0_i32 = arith.constant 0 : i32
    %c0_i32_0 = arith.constant 0 : i32
    %c0_i32_1 = arith.constant 0 : i32
    return %c0_i32, %c0_i32_0 : i32, i32
  }
  func.func @transform_3(%arg0: i32) -> (i32, i32) {
    %c0_i32 = arith.constant 0 : i32
    %c0_i32_0 = arith.constant 0 : i32
    %c0_i32_1 = arith.constant 0 : i32
    return %c0_i32, %c0_i32_0 : i32, i32
  }
  func.func @transform_4(%arg0: i32) -> (i32, i32) {
    %c0_i32 = arith.constant 0 : i32
    %c0_i32_0 = arith.constant 0 : i32
    %c0_i32_1 = arith.constant 0 : i32
    return %c0_i32, %c0_i32_0 : i32, i32
  }
  func.func @transform_5(%arg0: i32) -> (i32, i32) {
    %c0_i32 = arith.constant 0 : i32
    %c0_i32_0 = arith.constant 0 : i32
    %c0_i32_1 = arith.constant 0 : i32
    return %c0_i32, %c0_i32_0 : i32, i32
  }
  func.func @transform_6(%arg0: i32) -> (i32, i32) {
    %c0_i32 = arith.constant 0 : i32
    %c0_i32_0 = arith.constant 0 : i32
    %c0_i32_1 = arith.constant 0 : i32
    return %c0_i32, %c0_i32_0 : i32, i32
  }
  func.func @transform_7(%arg0: i32) -> (i32, i32) {
    %c0_i32 = arith.constant 0 : i32
    %c0_i32_0 = arith.constant 0 : i32
    %c0_i32_1 = arith.constant 0 : i32
    return %c0_i32, %c0_i32_0 : i32, i32
  }
  func.func @transform_8(%arg0: i32) -> i32 {
    %c0_i32 = arith.constant 0 : i32
    %c0_i32_0 = arith.constant 0 : i32
    return %c0_i32 : i32
  }
  func.func @transform_9(%arg0: i32) -> (i32, i32) {
    %c0_i32 = arith.constant 0 : i32
    %c0_i32_0 = arith.constant 0 : i32
    return %arg0, %c0_i32 : i32, i32
  }
}

</mosaic_0001>

<llo_original>
// kernel: tile.18
$region0: #{tile.18}
  #allocation0 [shape = 's32[1]{0}', space=sflag, size = 0x4, scoped, tag = 'scoped memory for tile.18']
  %s0 = inlined_call_operand.vmem [shape: f32[32], index: 0, kind: input, shape index: {}]
  %s1 = inlined_call_operand.vmem [shape: f32[4,32], index: 1, kind: output, shape index: {}]
  // Predicated region
  $region2: #{tile.18} parent=0 // pred_check
    _
  $region3: #{tile.18} parent=0 // pred_check_branch
    %3 = sbr.rel (0) target = $region5
  $region4: #{tile.18} parent=0 // pred_region
    _
  $region5: #{tile.18} parent=0 // pred_fallthru
    _
  %v4 = vld [vmem:[%s0] ss:$0 sm:$0xff]
  %5 = vst [vmem:[%s1] sm:$0xf] %v4

// kernel: tile.19
$region0: #{tile.19}
  %s0 = inlined_call_operand.vmem [shape: f32[4,32], index: 0, kind: input, shape index: {}]
  %s1 = inlined_call_operand.vmem [shape: f32[1,128], index: 1, kind: output, shape index: {}]
  $region1: #{tile.19} parent=0
    #allocation0 [shape = 'u8[4096]{0}', space=vmem, size = 0x1000, scoped, tag = 'scoped mem for output reshape']
    #allocation1 [shape = 'u8[4096]{0}', space=vmem, size = 0x1000, scoped, tag = 'scoped mem for input reshape']
    %s3 = ssub.s32 16, 1
    %v4 = vld [vmem:[%s0] sm:%s3]
    %5 = vst [vmem:[#allocation1] sm:%s3] %v4
    %v6 = vld [vmem:[#allocation1] sm:$0x1]
    %vm7 = vcmask 261120
    %8 = vst.msk [vmem:[#allocation0] sm:$0x1] %vm7, %v6
    %s9 = scalar_lea.vmem [#allocation1], 3
    %v10 = vld [vmem:[%s9] sm:$0x1]
    %11 = vrot.lane.b32.xlu0 %v10, 96
    %v12 = vpop.permute.xlu0 %11
    %vm13 = vcmask 1048320
    %14 = vst.msk [vmem:[#allocation0] sm:$0x1] %vm13, %v12
    %s15 = scalar_lea.vmem [#allocation1], 2
    %v16 = vld [vmem:[%s15] sm:$0x1]
    %17 = vrot.lane.b32.xlu0 %v16, 64
    %v18 = vpop.permute.xlu0 %17
    %vm19 = vcmask 785920
    %20 = vst.msk [vmem:[#allocation0] sm:$0x1] %vm19, %v18
    %s21 = scalar_lea.vmem [#allocation1], 1
    %v22 = vld [vmem:[%s21] sm:$0x1]
    %23 = vrot.lane.b32.xlu0 %v22, 32
    %v24 = vpop.permute.xlu0 %23
    %vm25 = vcmask 523520
    %26 = vst.msk [vmem:[#allocation0] sm:$0x1] %vm25, %v24
    %s28 = ssub.s32 2, 1
    %v29 = vld [vmem:[#allocation0] sm:%s28]
    %s31 = ssub.s32 2, 1
    %32 = vst [vmem:[%s1] sm:%s31] %v29

// kernel: flatten_mlp_img_forward.4
$region0: #{flatten_mlp_img_forward.4}
  #allocation0 [shape = 'u32[]', space=smem, size = 0x4, offset = 0x4, fixed_abs, tag = 'smem constant byte address 0x4 - core index']
  #allocation1 [shape = 'u32[72,128]{1,0:T(1,128)}', space=vmem, size = 0x9000, scoped, tag = 'internal scratch']
  %s0 = inlined_call_operand.vmem [shape: bf16[225,768], index: 0, kind: input, shape index: {}]
  %s1 = inlined_call_operand.vmem [shape: bf16[768,128], index: 1, kind: input, shape index: {}]
  %s2 = inlined_call_operand.vmem [shape: f32[1,128], index: 2, kind: input, shape index: {}]
  %s3 = inlined_call_operand.vmem [shape: bf16[225,128], index: 3, kind: output, shape index: {}]
  %s4 = sld [smem:[#allocation0]]
  $region22: #{flatten_mlp_img_forward.4} parent=0
    _
  %s6 = ssub.s32 1, %s4
  %s7 = scalar_select 0, %s6, %s4
  // Predicated region
  $region2: #{flatten_mlp_img_forward.4} parent=0 // pred_check
    _
  $region3: #{flatten_mlp_img_forward.4} parent=0 // pred_check_branch
    %9 = sbr.rel (0) target = $region5
  $region4: #{flatten_mlp_img_forward.4} parent=0 // pred_region
    _
  $region5: #{flatten_mlp_img_forward.4} parent=0 // pred_fallthru
    _
  // Predicated region
  $region6: #{flatten_mlp_img_forward.4} parent=0 // pred_check
    _
  $region7: #{flatten_mlp_img_forward.4} parent=0 // pred_check_branch
    %11 = sbr.rel (0) target = $region9
  $region8: #{flatten_mlp_img_forward.4} parent=0 // pred_region
    _
  $region9: #{flatten_mlp_img_forward.4} parent=0 // pred_fallthru
    _
  // Predicated region
  $region10: #{flatten_mlp_img_forward.4} parent=0 // pred_check
    _
  $region11: #{flatten_mlp_img_forward.4} parent=0 // pred_check_branch
    %13 = sbr.rel (0) target = $region13
  $region12: #{flatten_mlp_img_forward.4} parent=0 // pred_region
    _
  $region13: #{flatten_mlp_img_forward.4} parent=0 // pred_fallthru
    _
  %v14 = vld [vmem:[%s0] sm:$0xff]
  %v15 = vld [vmem:[%s0 + $0x8] sm:$0xff]
  %v16 = vld [vmem:[%s0 + $0x10] sm:$0xff]
  %v17 = vld [vmem:[%s0 + $0x18] sm:$0xff]
  %v18 = vld [vmem:[%s0 + $0x20] sm:$0xff]
  %v19 = vld [vmem:[%s0 + $0x28] sm:$0xff]
  %v20 = vld [vmem:[%s0 + $0x30] sm:$0xff]
  %v21 = vld [vmem:[%s0 + $0x38] sm:$0xff]
  %v22 = vld [vmem:[%s0 + $0x40] sm:$0xff]
  %v23 = vld [vmem:[%s0 + $0x48] sm:$0xff]
  %v24 = vld [vmem:[%s0 + $0x50] sm:$0xff]
  %v25 = vld [vmem:[%s0 + $0x58] sm:$0xff]
  %v26 = vld [vmem:[%s0 + $0x60] sm:$0xff]
  %v27 = vld [vmem:[%s0 + $0x68] sm:$0xff]
  %v28 = vld [vmem:[%s0 + $0x70] sm:$0xff]
  %v29 = vld [vmem:[%s0 + $0x78] sm:$0xff]
  %v30 = vld [vmem:[%s0 + $0x80] sm:$0xff]
  %v31 = vld [vmem:[%s0 + $0x88] sm:$0xff]
  %v32 = vld [vmem:[%s0 + $0x90] sm:$0xff]
  %v33 = vld [vmem:[%s0 + $0x98] sm:$0xff]
  %v34 = vld [vmem:[%s0 + $0xa0] sm:$0xff]
  %v35 = vld [vmem:[%s0 + $0xa8] sm:$0xff]
  %v36 = vld [vmem:[%s0 + $0xb0] sm:$0xff]
  %v37 = vld [vmem:[%s0 + $0xb8] sm:$0xff]
  %v38 = vld [vmem:[%s0 + $0xc0] sm:$0xff]
  %v39 = vld [vmem:[%s0 + $0xc8] sm:$0xff]
  %v40 = vld [vmem:[%s0 + $0xd0] sm:$0xff]
  %v41 = vld [vmem:[%s0 + $0xd8] sm:$0xff]
  %v42 = vld [vmem:[%s0 + $0xe0] sm:$0xff]
  %v43 = vld [vmem:[%s0 + $0xe8] sm:$0xff]
  %v44 = vld [vmem:[%s0 + $0xf0] sm:$0xff]
  %v45 = vld [vmem:[%s0 + $0xf8] sm:$0xff]
  %v46 = vld [vmem:[%s0 + $0x100] sm:$0xff]
  %v47 = vld [vmem:[%s0 + $0x108] sm:$0xff]
  %v48 = vld [vmem:[%s0 + $0x110] sm:$0xff]
  %v49 = vld [vmem:[%s0 + $0x118] sm:$0xff]
  %v50 = vld [vmem:[%s0 + $0x120] sm:$0xff]
  %v51 = vld [vmem:[%s0 + $0x128] sm:$0xff]
  %v52 = vld [vmem:[%s0 + $0x130] sm:$0xff]
  %v53 = vld [vmem:[%s0 + $0x138] sm:$0xff]
  %v54 = vld [vmem:[%s0 + $0x140] sm:$0xff]
  %v55 = vld [vmem:[%s0 + $0x148] sm:$0xff]
  %v56 = vld [vmem:[%s0 + $0x150] sm:$0xff]
  %v57 = vld [vmem:[%s0 + $0x158] sm:$0xff]
  %v58 = vld [vmem:[%s0 + $0x160] sm:$0xff]
  %v59 = vld [vmem:[%s0 + $0x168] sm:$0xff]
  %v60 = vld [vmem:[%s0 + $0x170] sm:$0xff]
  %v61 = vld [vmem:[%s0 + $0x178] sm:$0xff]
  %v62 = vld [vmem:[%s0 + $0x180] sm:$0xff]
  %v63 = vld [vmem:[%s0 + $0x188] sm:$0xff]
  %v64 = vld [vmem:[%s0 + $0x190] sm:$0xff]
  %v65 = vld [vmem:[%s0 + $0x198] sm:$0xff]
  %v66 = vld [vmem:[%s0 + $0x1a0] sm:$0xff]
  %v67 = vld [vmem:[%s0 + $0x1a8] sm:$0xff]
  %v68 = vld [vmem:[%s0 + $0x1b0] sm:$0xff]
  %v69 = vld [vmem:[%s0 + $0x1b8] sm:$0xff]
  %v70 = vld [vmem:[%s0 + $0x1c0] sm:$0xff]
  %v71 = vld [vmem:[%s0 + $0x1c8] sm:$0xff]
  %v72 = vld [vmem:[%s0 + $0x1d0] sm:$0xff]
  %v73 = vld [vmem:[%s0 + $0x1d8] sm:$0xff]
  %v74 = vld [vmem:[%s0 + $0x1e0] sm:$0xff]
  %v75 = vld [vmem:[%s0 + $0x1e8] sm:$0xff]
  %v76 = vld [vmem:[%s0 + $0x1f0] sm:$0xff]
  %v77 = vld [vmem:[%s0 + $0x1f8] sm:$0xff]
  %v78 = vld [vmem:[%s0 + $0x200] sm:$0xff]
  %v79 = vld [vmem:[%s0 + $0x208] sm:$0xff]
  %v80 = vld [vmem:[%s0 + $0x210] sm:$0xff]
  %v81 = vld [vmem:[%s0 + $0x218] sm:$0xff]
  %v82 = vld [vmem:[%s0 + $0x220] sm:$0xff]
  %v83 = vld [vmem:[%s0 + $0x228] sm:$0xff]
  %v84 = vld [vmem:[%s0 + $0x230] sm:$0xff]
  %v85 = vld [vmem:[%s0 + $0x238] sm:$0xff]
  %v86 = vld [vmem:[%s0 + $0x240] sm:$0xff]
  %v87 = vld [vmem:[%s0 + $0x248] sm:$0xff]
  %v88 = vld [vmem:[%s0 + $0x250] sm:$0xff]
  %v89 = vld [vmem:[%s0 + $0x258] sm:$0xff]
  %v90 = vld [vmem:[%s0 + $0x260] sm:$0xff]
  %v91 = vld [vmem:[%s0 + $0x268] sm:$0xff]
  %v92 = vld [vmem:[%s0 + $0x270] sm:$0xff]
  %v93 = vld [vmem:[%s0 + $0x278] sm:$0xff]
  %v94 = vld [vmem:[%s0 + $0x280] sm:$0xff]
  %v95 = vld [vmem:[%s0 + $0x288] sm:$0xff]
  %v96 = vld [vmem:[%s0 + $0x290] sm:$0xff]
  %v97 = vld [vmem:[%s0 + $0x298] sm:$0xff]
  %v98 = vld [vmem:[%s0 + $0x2a0] sm:$0x11]
  %v99 = vld [vmem:[%s0 + $0x2a8] sm:$0x11]
  %v100 = vld [vmem:[%s0 + $0x2b0] sm:$0x11]
  %v101 = vld [vmem:[%s1] sm:$0xf]
  %v102 = vld [vmem:[%s1 + $0x4] sm:$0xf]
  %v103 = vld [vmem:[%s1 + $0x8] sm:$0xf]
  %v104 = vld [vmem:[%s1 + $0xc] sm:$0xf]
  %v105 = vld [vmem:[%s1 + $0x10] sm:$0xf]
  %v106 = vld [vmem:[%s1 + $0x14] sm:$0xf]
  %v107 = vld [vmem:[%s1 + $0x18] sm:$0xf]
  %v108 = vld [vmem:[%s1 + $0x1c] sm:$0xf]
  %v109 = vld [vmem:[%s1 + $0x20] sm:$0xf]
  %v110 = vld [vmem:[%s1 + $0x24] sm:$0xf]
  %v111 = vld [vmem:[%s1 + $0x28] sm:$0xf]
  %v112 = vld [vmem:[%s1 + $0x2c] sm:$0xf]
  %v113 = vld [vmem:[%s1 + $0x30] sm:$0xf]
  %v114 = vld [vmem:[%s1 + $0x34] sm:$0xf]
  %v115 = vld [vmem:[%s1 + $0x38] sm:$0xf]
  %v116 = vld [vmem:[%s1 + $0x3c] sm:$0xf]
  %v117 = vld [vmem:[%s1 + $0x40] sm:$0xf]
  %v118 = vld [vmem:[%s1 + $0x44] sm:$0xf]
  %v119 = vld [vmem:[%s1 + $0x48] sm:$0xf]
  %v120 = vld [vmem:[%s1 + $0x4c] sm:$0xf]
  %v121 = vld [vmem:[%s1 + $0x50] sm:$0xf]
  %v122 = vld [vmem:[%s1 + $0x54] sm:$0xf]
  %v123 = vld [vmem:[%s1 + $0x58] sm:$0xf]
  %v124 = vld [vmem:[%s1 + $0x5c] sm:$0xf]
  %v125 = vld [vmem:[%s1 + $0x60] sm:$0xf]
  %v126 = vld [vmem:[%s1 + $0x64] sm:$0xf]
  %v127 = vld [vmem:[%s1 + $0x68] sm:$0xf]
  %v128 = vld [vmem:[%s1 + $0x6c] sm:$0xf]
  %v129 = vld [vmem:[%s1 + $0x70] sm:$0xf]
  %v130 = vld [vmem:[%s1 + $0x74] sm:$0xf]
  %v131 = vld [vmem:[%s1 + $0x78] sm:$0xf]
  %v132 = vld [vmem:[%s1 + $0x7c] sm:$0xf]
  %v133 = vld [vmem:[%s1 + $0x80] sm:$0xf]
  %v134 = vld [vmem:[%s1 + $0x84] sm:$0xf]
  %v135 = vld [vmem:[%s1 + $0x88] sm:$0xf]
  %v136 = vld [vmem:[%s1 + $0x8c] sm:$0xf]
  %v137 = vld [vmem:[%s1 + $0x90] sm:$0xf]
  %v138 = vld [vmem:[%s1 + $0x94] sm:$0xf]
  %v139 = vld [vmem:[%s1 + $0x98] sm:$0xf]
  %v140 = vld [vmem:[%s1 + $0x9c] sm:$0xf]
  %v141 = vld [vmem:[%s1 + $0xa0] sm:$0xf]
  %v142 = vld [vmem:[%s1 + $0xa4] sm:$0xf]
  %v143 = vld [vmem:[%s1 + $0xa8] sm:$0xf]
  %v144 = vld [vmem:[%s1 + $0xac] sm:$0xf]
  %v145 = vld [vmem:[%s1 + $0xb0] sm:$0xf]
  %v146 = vld [vmem:[%s1 + $0xb4] sm:$0xf]
  %v147 = vld [vmem:[%s1 + $0xb8] sm:$0xf]
  %v148 = vld [vmem:[%s1 + $0xbc] sm:$0xf]
  %v149 = vld [vmem:[%s1 + $0xc0] sm:$0xf]
  %v150 = vld [vmem:[%s1 + $0xc4] sm:$0xf]
  %v151 = vld [vmem:[%s1 + $0xc8] sm:$0xf]
  %v152 = vld [vmem:[%s1 + $0xcc] sm:$0xf]
  %v153 = vld [vmem:[%s1 + $0xd0] sm:$0xf]
  %v154 = vld [vmem:[%s1 + $0xd4] sm:$0xf]
  %v155 = vld [vmem:[%s1 + $0xd8] sm:$0xf]
  %v156 = vld [vmem:[%s1 + $0xdc] sm:$0xf]
  %v157 = vld [vmem:[%s1 + $0xe0] sm:$0xf]
  %v158 = vld [vmem:[%s1 + $0xe4] sm:$0xf]
  %v159 = vld [vmem:[%s1 + $0xe8] sm:$0xf]
  %v160 = vld [vmem:[%s1 + $0xec] sm:$0xf]
  %v161 = vld [vmem:[%s1 + $0xf0] sm:$0xf]
  %v162 = vld [vmem:[%s1 + $0xf4] sm:$0xf]
  %v163 = vld [vmem:[%s1 + $0xf8] sm:$0xf]
  %v164 = vld [vmem:[%s1 + $0xfc] sm:$0xf]
  %v165 = vld [vmem:[%s1 + $0x100] sm:$0xf]
  %v166 = vld [vmem:[%s1 + $0x104] sm:$0xf]
  %v167 = vld [vmem:[%s1 + $0x108] sm:$0xf]
  %v168 = vld [vmem:[%s1 + $0x10c] sm:$0xf]
  %v169 = vld [vmem:[%s1 + $0x110] sm:$0xf]
  %v170 = vld [vmem:[%s1 + $0x114] sm:$0xf]
  %v171 = vld [vmem:[%s1 + $0x118] sm:$0xf]
  %v172 = vld [vmem:[%s1 + $0x11c] sm:$0xf]
  %v173 = vld [vmem:[%s1 + $0x120] sm:$0xf]
  %v174 = vld [vmem:[%s1 + $0x124] sm:$0xf]
  %v175 = vld [vmem:[%s1 + $0x128] sm:$0xf]
  %v176 = vld [vmem:[%s1 + $0x12c] sm:$0xf]
  %v177 = vld [vmem:[%s1 + $0x130] sm:$0xf]
  %v178 = vld [vmem:[%s1 + $0x134] sm:$0xf]
  %v179 = vld [vmem:[%s1 + $0x138] sm:$0xf]
  %v180 = vld [vmem:[%s1 + $0x13c] sm:$0xf]
  %v181 = vld [vmem:[%s1 + $0x140] sm:$0xf]
  %v182 = vld [vmem:[%s1 + $0x144] sm:$0xf]
  %v183 = vld [vmem:[%s1 + $0x148] sm:$0xf]
  %v184 = vld [vmem:[%s1 + $0x14c] sm:$0xf]
  %v185 = vld [vmem:[%s1 + $0x150] sm:$0xf]
  %v186 = vld [vmem:[%s1 + $0x154] sm:$0xf]
  %v187 = vld [vmem:[%s1 + $0x158] sm:$0xf]
  %v188 = vld [vmem:[%s1 + $0x15c] sm:$0xf]
  %v189 = vld [vmem:[%s1 + $0x160] sm:$0xf]
  %v190 = vld [vmem:[%s1 + $0x164] sm:$0xf]
  %v191 = vld [vmem:[%s1 + $0x168] sm:$0xf]
  %v192 = vld [vmem:[%s1 + $0x16c] sm:$0xf]
  %v193 = vld [vmem:[%s1 + $0x170] sm:$0xf]
  %v194 = vld [vmem:[%s1 + $0x174] sm:$0xf]
  %v195 = vld [vmem:[%s1 + $0x178] sm:$0xf]
  %v196 = vld [vmem:[%s1 + $0x17c] sm:$0xf]
  %v197 = vld [vmem:[%s2] sm:$0x1]
  %v199 = vperm.slane %v197, 0
  %v288 = vunpack.c.l.b16 %v14
  %v289 = vunpack.c.h.b16 %v14
  %v290 = vunpack.c.l.b16 %v15
  %v291 = vunpack.c.h.b16 %v15
  %v292 = vunpack.c.l.b16 %v16
  %v293 = vunpack.c.h.b16 %v16
  %v294 = vunpack.c.l.b16 %v17
  %v295 = vunpack.c.h.b16 %v17
  %v296 = vunpack.c.l.b16 %v18
  %v297 = vunpack.c.h.b16 %v18
  %v298 = vunpack.c.l.b16 %v19
  %v299 = vunpack.c.h.b16 %v19
  %v300 = vunpack.c.l.b16 %v20
  %v301 = vunpack.c.h.b16 %v20
  %v302 = vunpack.c.l.b16 %v21
  %v303 = vunpack.c.h.b16 %v21
  %v304 = vunpack.c.l.b16 %v22
  %v305 = vunpack.c.h.b16 %v22
  %v306 = vunpack.c.l.b16 %v23
  %v307 = vunpack.c.h.b16 %v23
  %v308 = vunpack.c.l.b16 %v24
  %v309 = vunpack.c.h.b16 %v24
  %v310 = vunpack.c.l.b16 %v25
  %v311 = vunpack.c.h.b16 %v25
  %v312 = vunpack.c.l.b16 %v26
  %v313 = vunpack.c.h.b16 %v26
  %v314 = vunpack.c.l.b16 %v27
  %v315 = vunpack.c.h.b16 %v27
  %v316 = vunpack.c.l.b16 %v28
  %v317 = vunpack.c.h.b16 %v28
  %v318 = vunpack.c.l.b16 %v29
  %v319 = vunpack.c.h.b16 %v29
  %v320 = vunpack.c.l.b16 %v30
  %v321 = vunpack.c.h.b16 %v30
  %v322 = vunpack.c.l.b16 %v31
  %v323 = vunpack.c.h.b16 %v31
  %v324 = vunpack.c.l.b16 %v32
  %v325 = vunpack.c.h.b16 %v32
  %v326 = vunpack.c.l.b16 %v33
  %v327 = vunpack.c.h.b16 %v33
  %v328 = vunpack.c.l.b16 %v34
  %v329 = vunpack.c.h.b16 %v34
  %v330 = vunpack.c.l.b16 %v35
  %v331 = vunpack.c.h.b16 %v35
  %v332 = vunpack.c.l.b16 %v36
  %v333 = vunpack.c.h.b16 %v36
  %v334 = vunpack.c.l.b16 %v37
  %v335 = vunpack.c.h.b16 %v37
  %v336 = vunpack.c.l.b16 %v38
  %v337 = vunpack.c.h.b16 %v38
  %v338 = vunpack.c.l.b16 %v39
  %v339 = vunpack.c.h.b16 %v39
  %v340 = vunpack.c.l.b16 %v40
  %v341 = vunpack.c.h.b16 %v40
  %v342 = vunpack.c.l.b16 %v41
  %v343 = vunpack.c.h.b16 %v41
  %v344 = vunpack.c.l.b16 %v42
  %v345 = vunpack.c.h.b16 %v42
  %v346 = vunpack.c.l.b16 %v43
  %v347 = vunpack.c.h.b16 %v43
  %v348 = vunpack.c.l.b16 %v44
  %v349 = vunpack.c.h.b16 %v44
  %v350 = vunpack.c.l.b16 %v45
  %v351 = vunpack.c.h.b16 %v45
  %v352 = vunpack.c.l.b16 %v46
  %v353 = vunpack.c.h.b16 %v46
  %v354 = vunpack.c.l.b16 %v47
  %v355 = vunpack.c.h.b16 %v47
  %v356 = vunpack.c.l.b16 %v48
  %v357 = vunpack.c.h.b16 %v48
  %v358 = vunpack.c.l.b16 %v49
  %v359 = vunpack.c.h.b16 %v49
  %v360 = vunpack.c.l.b16 %v50
  %v361 = vunpack.c.h.b16 %v50
  %v362 = vunpack.c.l.b16 %v51
  %v363 = vunpack.c.h.b16 %v51
  %v364 = vunpack.c.l.b16 %v52
  %v365 = vunpack.c.h.b16 %v52
  %v366 = vunpack.c.l.b16 %v53
  %v367 = vunpack.c.h.b16 %v53
  %v368 = vunpack.c.l.b16 %v54
  %v369 = vunpack.c.h.b16 %v54
  %v370 = vunpack.c.l.b16 %v55
  %v371 = vunpack.c.h.b16 %v55
  %v372 = vunpack.c.l.b16 %v56
  %v373 = vunpack.c.h.b16 %v56
  %v374 = vunpack.c.l.b16 %v57
  %v375 = vunpack.c.h.b16 %v57
  %v376 = vunpack.c.l.b16 %v58
  %v377 = vunpack.c.h.b16 %v58
  %v378 = vunpack.c.l.b16 %v59
  %v379 = vunpack.c.h.b16 %v59
  %v380 = vunpack.c.l.b16 %v60
  %v381 = vunpack.c.h.b16 %v60
  %v382 = vunpack.c.l.b16 %v61
  %v383 = vunpack.c.h.b16 %v61
  %v384 = vunpack.c.l.b16 %v62
  %v385 = vunpack.c.h.b16 %v62
  %v386 = vunpack.c.l.b16 %v63
  %v387 = vunpack.c.h.b16 %v63
  %v388 = vunpack.c.l.b16 %v64
  %v389 = vunpack.c.h.b16 %v64
  %v390 = vunpack.c.l.b16 %v65
  %v391 = vunpack.c.h.b16 %v65
  %v392 = vunpack.c.l.b16 %v66
  %v393 = vunpack.c.h.b16 %v66
  %v394 = vunpack.c.l.b16 %v67
  %v395 = vunpack.c.h.b16 %v67
  %v396 = vunpack.c.l.b16 %v68
  %v397 = vunpack.c.h.b16 %v68
  %v398 = vunpack.c.l.b16 %v69
  %v399 = vunpack.c.h.b16 %v69
  %v400 = vunpack.c.l.b16 %v70
  %v401 = vunpack.c.h.b16 %v70
  %v402 = vunpack.c.l.b16 %v71
  %v403 = vunpack.c.h.b16 %v71
  %v404 = vunpack.c.l.b16 %v72
  %v405 = vunpack.c.h.b16 %v72
  %v406 = vunpack.c.l.b16 %v73
  %v407 = vunpack.c.h.b16 %v73
  %v408 = vunpack.c.l.b16 %v74
  %v409 = vunpack.c.h.b16 %v74
  %v410 = vunpack.c.l.b16 %v75
  %v411 = vunpack.c.h.b16 %v75
  %v412 = vunpack.c.l.b16 %v76
  %v413 = vunpack.c.h.b16 %v76
  %v414 = vunpack.c.l.b16 %v77
  %v415 = vunpack.c.h.b16 %v77
  %v416 = vunpack.c.l.b16 %v78
  %v417 = vunpack.c.h.b16 %v78
  %v418 = vunpack.c.l.b16 %v79
  %v419 = vunpack.c.h.b16 %v79
  %v420 = vunpack.c.l.b16 %v80
  %v421 = vunpack.c.h.b16 %v80
  %v422 = vunpack.c.l.b16 %v81
  %v423 = vunpack.c.h.b16 %v81
  %v424 = vunpack.c.l.b16 %v82
  %v425 = vunpack.c.h.b16 %v82
  %v426 = vunpack.c.l.b16 %v83
  %v427 = vunpack.c.h.b16 %v83
  %v428 = vunpack.c.l.b16 %v84
  %v429 = vunpack.c.h.b16 %v84
  %v430 = vunpack.c.l.b16 %v85
  %v431 = vunpack.c.h.b16 %v85
  %v432 = vunpack.c.l.b16 %v86
  %v433 = vunpack.c.h.b16 %v86
  %v434 = vunpack.c.l.b16 %v87
  %v435 = vunpack.c.h.b16 %v87
  %v436 = vunpack.c.l.b16 %v88
  %v437 = vunpack.c.h.b16 %v88
  %v438 = vunpack.c.l.b16 %v89
  %v439 = vunpack.c.h.b16 %v89
  %v440 = vunpack.c.l.b16 %v90
  %v441 = vunpack.c.h.b16 %v90
  %v442 = vunpack.c.l.b16 %v91
  %v443 = vunpack.c.h.b16 %v91
  %v444 = vunpack.c.l.b16 %v92
  %v445 = vunpack.c.h.b16 %v92
  %v446 = vunpack.c.l.b16 %v93
  %v447 = vunpack.c.h.b16 %v93
  %v448 = vunpack.c.l.b16 %v94
  %v449 = vunpack.c.h.b16 %v94
  %v450 = vunpack.c.l.b16 %v95
  %v451 = vunpack.c.h.b16 %v95
  %v452 = vunpack.c.l.b16 %v96
  %v453 = vunpack.c.h.b16 %v96
  %v454 = vunpack.c.l.b16 %v97
  %v455 = vunpack.c.h.b16 %v97
  %v456 = vunpack.c.l.b16 %v98
  %v457 = vunpack.c.h.b16 %v98
  %v458 = vunpack.c.l.b16 %v99
  %v459 = vunpack.c.h.b16 %v99
  %v460 = vunpack.c.l.b16 %v100
  %v461 = vunpack.c.h.b16 %v100
  %v462 = vpack.c.b16 %v294, %v288
  %v463 = vpack.c.b16 %v295, %v289
  %v464 = vpack.c.b16 %v296, %v290
  %v465 = vpack.c.b16 %v297, %v291
  %v466 = vpack.c.b16 %v298, %v292
  %v467 = vpack.c.b16 %v299, %v293
  %v468 = vpack.c.b16 %v306, %v300
  %v469 = vpack.c.b16 %v307, %v301
  %v470 = vpack.c.b16 %v308, %v302
  %v471 = vpack.c.b16 %v309, %v303
  %v472 = vpack.c.b16 %v310, %v304
  %v473 = vpack.c.b16 %v311, %v305
  %v474 = vpack.c.b16 %v318, %v312
  %v475 = vpack.c.b16 %v319, %v313
  %v476 = vpack.c.b16 %v320, %v314
  %v477 = vpack.c.b16 %v321, %v315
  %v478 = vpack.c.b16 %v322, %v316
  %v479 = vpack.c.b16 %v323, %v317
  %v480 = vpack.c.b16 %v330, %v324
  %v481 = vpack.c.b16 %v331, %v325
  %v482 = vpack.c.b16 %v332, %v326
  %v483 = vpack.c.b16 %v333, %v327
  %v484 = vpack.c.b16 %v334, %v328
  %v485 = vpack.c.b16 %v335, %v329
  %v486 = vpack.c.b16 %v342, %v336
  %v487 = vpack.c.b16 %v343, %v337
  %v488 = vpack.c.b16 %v344, %v338
  %v489 = vpack.c.b16 %v345, %v339
  %v490 = vpack.c.b16 %v346, %v340
  %v491 = vpack.c.b16 %v347, %v341
  %v492 = vpack.c.b16 %v354, %v348
  %v493 = vpack.c.b16 %v355, %v349
  %v494 = vpack.c.b16 %v356, %v350
  %v495 = vpack.c.b16 %v357, %v351
  %v496 = vpack.c.b16 %v358, %v352
  %v497 = vpack.c.b16 %v359, %v353
  %v498 = vpack.c.b16 %v366, %v360
  %v499 = vpack.c.b16 %v367, %v361
  %v500 = vpack.c.b16 %v368, %v362
  %v501 = vpack.c.b16 %v369, %v363
  %v502 = vpack.c.b16 %v370, %v364
  %v503 = vpack.c.b16 %v371, %v365
  %v504 = vpack.c.b16 %v378, %v372
  %v505 = vpack.c.b16 %v379, %v373
  %v506 = vpack.c.b16 %v380, %v374
  %v507 = vpack.c.b16 %v381, %v375
  %v508 = vpack.c.b16 %v382, %v376
  %v509 = vpack.c.b16 %v383, %v377
  %v510 = vpack.c.b16 %v390, %v384
  %v511 = vpack.c.b16 %v391, %v385
  %v512 = vpack.c.b16 %v392, %v386
  %v513 = vpack.c.b16 %v393, %v387
  %v514 = vpack.c.b16 %v394, %v388
  %v515 = vpack.c.b16 %v395, %v389
  %v516 = vpack.c.b16 %v402, %v396
  %v517 = vpack.c.b16 %v403, %v397
  %v518 = vpack.c.b16 %v404, %v398
  %v519 = vpack.c.b16 %v405, %v399
  %v520 = vpack.c.b16 %v406, %v400
  %v521 = vpack.c.b16 %v407, %v401
  %v522 = vpack.c.b16 %v414, %v408
  %v523 = vpack.c.b16 %v415, %v409
  %v524 = vpack.c.b16 %v416, %v410
  %v525 = vpack.c.b16 %v417, %v411
  %v526 = vpack.c.b16 %v418, %v412
  %v527 = vpack.c.b16 %v419, %v413
  %v528 = vpack.c.b16 %v426, %v420
  %v529 = vpack.c.b16 %v427, %v421
  %v530 = vpack.c.b16 %v428, %v422
  %v531 = vpack.c.b16 %v429, %v423
  %v532 = vpack.c.b16 %v430, %v424
  %v533 = vpack.c.b16 %v431, %v425
  %v534 = vpack.c.b16 %v438, %v432
  %v535 = vpack.c.b16 %v439, %v433
  %v536 = vpack.c.b16 %v440, %v434
  %v537 = vpack.c.b16 %v441, %v435
  %v538 = vpack.c.b16 %v442, %v436
  %v539 = vpack.c.b16 %v443, %v437
  %v540 = vpack.c.b16 %v450, %v444
  %v541 = vpack.c.b16 %v451, %v445
  %v542 = vpack.c.b16 %v452, %v446
  %v543 = vpack.c.b16 %v453, %v447
  %v544 = vpack.c.b16 %v454, %v448
  %v545 = vpack.c.b16 %v455, %v449
  %v546 = vpack.c.b16 %v456, %v456
  %v547 = vpack.c.b16 %v457, %v457
  %v548 = vpack.c.b16 %v458, %v458
  %v549 = vpack.c.b16 %v459, %v459
  %v550 = vpack.c.b16 %v460, %v460
  %v551 = vpack.c.b16 %v461, %v461
  %v738 = vunpack.c.l.b16 %v101
  %v739 = vunpack.c.l.b16 %v102
  %v740 = vunpack.c.l.b16 %v103
  %v741 = vunpack.c.l.b16 %v104
  %v742 = vunpack.c.l.b16 %v105
  %v743 = vunpack.c.l.b16 %v106
  %v744 = vunpack.c.l.b16 %v107
  %v745 = vunpack.c.l.b16 %v108
  %v746 = vunpack.c.l.b16 %v109
  %v747 = vunpack.c.l.b16 %v110
  %v748 = vunpack.c.l.b16 %v111
  %v749 = vunpack.c.l.b16 %v112
  %v750 = vunpack.c.l.b16 %v113
  %v751 = vunpack.c.l.b16 %v114
  %v752 = vunpack.c.l.b16 %v115
  %v753 = vunpack.c.l.b16 %v116
  %v754 = vunpack.c.l.b16 %v117
  %v755 = vunpack.c.l.b16 %v118
  %v756 = vunpack.c.l.b16 %v119
  %v757 = vunpack.c.l.b16 %v120
  %v758 = vunpack.c.l.b16 %v121
  %v759 = vunpack.c.l.b16 %v122
  %v760 = vunpack.c.l.b16 %v123
  %v761 = vunpack.c.l.b16 %v124
  %v762 = vunpack.c.l.b16 %v125
  %v763 = vunpack.c.l.b16 %v126
  %v764 = vunpack.c.l.b16 %v127
  %v765 = vunpack.c.l.b16 %v128
  %v766 = vunpack.c.l.b16 %v129
  %v767 = vunpack.c.l.b16 %v130
  %v768 = vunpack.c.l.b16 %v131
  %v769 = vunpack.c.l.b16 %v132
  %v770 = vunpack.c.l.b16 %v133
  %v771 = vunpack.c.l.b16 %v134
  %v772 = vunpack.c.l.b16 %v135
  %v773 = vunpack.c.l.b16 %v136
  %v774 = vunpack.c.l.b16 %v137
  %v775 = vunpack.c.l.b16 %v138
  %v776 = vunpack.c.l.b16 %v139
  %v777 = vunpack.c.l.b16 %v140
  %v778 = vunpack.c.l.b16 %v141
  %v779 = vunpack.c.l.b16 %v142
  %v780 = vunpack.c.l.b16 %v143
  %v781 = vunpack.c.l.b16 %v144
  %v782 = vunpack.c.l.b16 %v145
  %v783 = vunpack.c.l.b16 %v146
  %v784 = vunpack.c.l.b16 %v147
  %v785 = vunpack.c.l.b16 %v148
  %v786 = vunpack.c.l.b16 %v149
  %v787 = vunpack.c.l.b16 %v150
  %v788 = vunpack.c.l.b16 %v151
  %v789 = vunpack.c.l.b16 %v152
  %v790 = vunpack.c.l.b16 %v153
  %v791 = vunpack.c.l.b16 %v154
  %v792 = vunpack.c.l.b16 %v155
  %v793 = vunpack.c.l.b16 %v156
  %v794 = vunpack.c.l.b16 %v157
  %v795 = vunpack.c.l.b16 %v158
  %v796 = vunpack.c.l.b16 %v159
  %v797 = vunpack.c.l.b16 %v160
  %v798 = vunpack.c.l.b16 %v161
  %v799 = vunpack.c.l.b16 %v162
  %v800 = vunpack.c.l.b16 %v163
  %v801 = vunpack.c.l.b16 %v164
  %v802 = vunpack.c.l.b16 %v165
  %v803 = vunpack.c.l.b16 %v166
  %v804 = vunpack.c.l.b16 %v167
  %v805 = vunpack.c.l.b16 %v168
  %v806 = vunpack.c.l.b16 %v169
  %v807 = vunpack.c.l.b16 %v170
  %v808 = vunpack.c.l.b16 %v171
  %v809 = vunpack.c.l.b16 %v172
  %v810 = vunpack.c.l.b16 %v173
  %v811 = vunpack.c.l.b16 %v174
  %v812 = vunpack.c.l.b16 %v175
  %v813 = vunpack.c.l.b16 %v176
  %v814 = vunpack.c.l.b16 %v177
  %v815 = vunpack.c.l.b16 %v178
  %v816 = vunpack.c.l.b16 %v179
  %v817 = vunpack.c.l.b16 %v180
  %v818 = vunpack.c.l.b16 %v181
  %v819 = vunpack.c.l.b16 %v182
  %v820 = vunpack.c.l.b16 %v183
  %v821 = vunpack.c.l.b16 %v184
  %v822 = vunpack.c.l.b16 %v185
  %v823 = vunpack.c.l.b16 %v186
  %v824 = vunpack.c.l.b16 %v187
  %v825 = vunpack.c.l.b16 %v188
  %v826 = vunpack.c.l.b16 %v189
  %v827 = vunpack.c.l.b16 %v190
  %v828 = vunpack.c.l.b16 %v191
  %v829 = vunpack.c.l.b16 %v192
  %v830 = vunpack.c.l.b16 %v193
  %v831 = vunpack.c.l.b16 %v194
  %v832 = vunpack.c.l.b16 %v195
  %v833 = vunpack.c.l.b16 %v196
  %v834 = vpack.c.b16 %v739, %v738
  %v835 = vpack.c.b16 %v741, %v740
  %v836 = vpack.c.b16 %v743, %v742
  %v837 = vpack.c.b16 %v745, %v744
  %v838 = vpack.c.b16 %v747, %v746
  %v839 = vpack.c.b16 %v749, %v748
  %v840 = vpack.c.b16 %v751, %v750
  %v841 = vpack.c.b16 %v753, %v752
  %v842 = vpack.c.b16 %v755, %v754
  %v843 = vpack.c.b16 %v757, %v756
  %v844 = vpack.c.b16 %v759, %v758
  %v845 = vpack.c.b16 %v761, %v760
  %v846 = vpack.c.b16 %v763, %v762
  %v847 = vpack.c.b16 %v765, %v764
  %v848 = vpack.c.b16 %v767, %v766
  %v849 = vpack.c.b16 %v769, %v768
  %v850 = vpack.c.b16 %v771, %v770
  %v851 = vpack.c.b16 %v773, %v772
  %v852 = vpack.c.b16 %v775, %v774
  %v853 = vpack.c.b16 %v777, %v776
  %v854 = vpack.c.b16 %v779, %v778
  %v855 = vpack.c.b16 %v781, %v780
  %v856 = vpack.c.b16 %v783, %v782
  %v857 = vpack.c.b16 %v785, %v784
  %v858 = vpack.c.b16 %v787, %v786
  %v859 = vpack.c.b16 %v789, %v788
  %v860 = vpack.c.b16 %v791, %v790
  %v861 = vpack.c.b16 %v793, %v792
  %v862 = vpack.c.b16 %v795, %v794
  %v863 = vpack.c.b16 %v797, %v796
  %v864 = vpack.c.b16 %v799, %v798
  %v865 = vpack.c.b16 %v801, %v800
  %v866 = vpack.c.b16 %v803, %v802
  %v867 = vpack.c.b16 %v805, %v804
  %v868 = vpack.c.b16 %v807, %v806
  %v869 = vpack.c.b16 %v809, %v808
  %v870 = vpack.c.b16 %v811, %v810
  %v871 = vpack.c.b16 %v813, %v812
  %v872 = vpack.c.b16 %v815, %v814
  %v873 = vpack.c.b16 %v817, %v816
  %v874 = vpack.c.b16 %v819, %v818
  %v875 = vpack.c.b16 %v821, %v820
  %v876 = vpack.c.b16 %v823, %v822
  %v877 = vpack.c.b16 %v825, %v824
  %v878 = vpack.c.b16 %v827, %v826
  %v879 = vpack.c.b16 %v829, %v828
  %v880 = vpack.c.b16 %v831, %v830
  %v881 = vpack.c.b16 %v833, %v832
  %930 = vmatpush.bf16.msra.mxu0 %v841
  %931 = vmatpush.bf16.msra.mxu0 %v840
  %932 = vmatpush.bf16.msra.mxu0 %v839
  %933 = vmatpush.bf16.msra.mxu0 %v838
  %934 = vmatpush.bf16.msra.mxu0 %v837
  %935 = vmatpush.bf16.msra.mxu0 %v836
  %936 = vmatpush.bf16.msra.mxu0 %v835
  %937 = vmatpush.bf16.msra.mxu0 %v834
  %938 = vmatmul.bf16.gmra.mxu0 %v462
  %v939 = vpop.f32.mrf.mxu0
  %v940 = vadd.f32 %v199, %v939
  %v941 = vpop.f32.mrf.mxu0
  %v942 = vadd.f32 %v199, %v941
  %943 = vmatmul.bf16.gmra.mxu0 %v468
  %v944 = vpop.f32.mrf.mxu0
  %v945 = vadd.f32 %v199, %v944
  %v946 = vpop.f32.mrf.mxu0
  %v947 = vadd.f32 %v199, %v946
  %948 = vmatmul.bf16.gmra.mxu0 %v474
  %v949 = vpop.f32.mrf.mxu0
  %v950 = vadd.f32 %v199, %v949
  %v951 = vpop.f32.mrf.mxu0
  %v952 = vadd.f32 %v199, %v951
  %953 = vmatmul.bf16.gmra.mxu0 %v480
  %v954 = vpop.f32.mrf.mxu0
  %v955 = vadd.f32 %v199, %v954
  %v956 = vpop.f32.mrf.mxu0
  %v957 = vadd.f32 %v199, %v956
  %958 = vmatmul.bf16.gmra.mxu0 %v486
  %v959 = vpop.f32.mrf.mxu0
  %v960 = vadd.f32 %v199, %v959
  %v961 = vpop.f32.mrf.mxu0
  %v962 = vadd.f32 %v199, %v961
  %963 = vmatmul.bf16.gmra.mxu0 %v492
  %v964 = vpop.f32.mrf.mxu0
  %v965 = vadd.f32 %v199, %v964
  %v966 = vpop.f32.mrf.mxu0
  %v967 = vadd.f32 %v199, %v966
  %968 = vmatmul.bf16.gmra.mxu0 %v498
  %v969 = vpop.f32.mrf.mxu0
  %v970 = vadd.f32 %v199, %v969
  %v971 = vpop.f32.mrf.mxu0
  %v972 = vadd.f32 %v199, %v971
  %973 = vmatmul.bf16.gmra.mxu0 %v504
  %v974 = vpop.f32.mrf.mxu0
  %v975 = vadd.f32 %v199, %v974
  %v976 = vpop.f32.mrf.mxu0
  %v977 = vadd.f32 %v199, %v976
  %978 = vmatmul.bf16.gmra.mxu0 %v510
  %v979 = vpop.f32.mrf.mxu0
  %v980 = vadd.f32 %v199, %v979
  %v981 = vpop.f32.mrf.mxu0
  %v982 = vadd.f32 %v199, %v981
  %983 = vmatmul.bf16.gmra.mxu0 %v516
  %v984 = vpop.f32.mrf.mxu0
  %v985 = vadd.f32 %v199, %v984
  %v986 = vpop.f32.mrf.mxu0
  %v987 = vadd.f32 %v199, %v986
  %988 = vmatmul.bf16.gmra.mxu0 %v522
  %v989 = vpop.f32.mrf.mxu0
  %v990 = vadd.f32 %v199, %v989
  %v991 = vpop.f32.mrf.mxu0
  %v992 = vadd.f32 %v199, %v991
  %993 = vmatmul.bf16.gmra.mxu0 %v528
  %v994 = vpop.f32.mrf.mxu0
  %v995 = vadd.f32 %v199, %v994
  %v996 = vpop.f32.mrf.mxu0
  %v997 = vadd.f32 %v199, %v996
  %998 = vmatmul.bf16.gmra.mxu0 %v534
  %v999 = vpop.f32.mrf.mxu0
  %v1000 = vadd.f32 %v199, %v999
  %v1001 = vpop.f32.mrf.mxu0
  %v1002 = vadd.f32 %v199, %v1001
  %1003 = vmatmul.bf16.gmra.mxu0 %v540
  %v1004 = vpop.f32.mrf.mxu0
  %v1005 = vadd.f32 %v199, %v1004
  %v1006 = vpop.f32.mrf.mxu0
  %v1007 = vadd.f32 %v199, %v1006
  %1008 = vmatmul.bf16.gmra.mxu0 %v546
  %v1009 = vpop.f32.mrf.mxu0
  %v1010 = vadd.f32 %v199, %v1009
  %v1011 = vpop.f32.mrf.mxu0
  %1012 = vdwg.mxu0
  %1013 = vmatpush.bf16.msra.mxu0 %v849
  %1014 = vmatpush.bf16.msra.mxu0 %v848
  %1015 = vmatpush.bf16.msra.mxu0 %v847
  %1016 = vmatpush.bf16.msra.mxu0 %v846
  %1017 = vmatpush.bf16.msra.mxu0 %v845
  %1018 = vmatpush.bf16.msra.mxu0 %v844
  %1019 = vmatpush.bf16.msra.mxu0 %v843
  %1020 = vmatpush.bf16.msra.mxu0 %v842
  %1021 = vmatmul.bf16.gmra.mxu0 %v463
  %v1022 = vpop.f32.mrf.mxu0
  %v1023 = vadd.f32 %v940, %v1022
  %v1024 = vpop.f32.mrf.mxu0
  %v1025 = vadd.f32 %v942, %v1024
  %1026 = vmatmul.bf16.gmra.mxu0 %v469
  %v1027 = vpop.f32.mrf.mxu0
  %v1028 = vadd.f32 %v945, %v1027
  %v1029 = vpop.f32.mrf.mxu0
  %v1030 = vadd.f32 %v947, %v1029
  %1031 = vmatmul.bf16.gmra.mxu0 %v475
  %v1032 = vpop.f32.mrf.mxu0
  %v1033 = vadd.f32 %v950, %v1032
  %v1034 = vpop.f32.mrf.mxu0
  %v1035 = vadd.f32 %v952, %v1034
  %1036 = vmatmul.bf16.gmra.mxu0 %v481
  %v1037 = vpop.f32.mrf.mxu0
  %v1038 = vadd.f32 %v955, %v1037
  %v1039 = vpop.f32.mrf.mxu0
  %v1040 = vadd.f32 %v957, %v1039
  %1041 = vmatmul.bf16.gmra.mxu0 %v487
  %v1042 = vpop.f32.mrf.mxu0
  %v1043 = vadd.f32 %v960, %v1042
  %v1044 = vpop.f32.mrf.mxu0
  %v1045 = vadd.f32 %v962, %v1044
  %1046 = vmatmul.bf16.gmra.mxu0 %v493
  %v1047 = vpop.f32.mrf.mxu0
  %v1048 = vadd.f32 %v965, %v1047
  %v1049 = vpop.f32.mrf.mxu0
  %v1050 = vadd.f32 %v967, %v1049
  %1051 = vmatmul.bf16.gmra.mxu0 %v499
  %v1052 = vpop.f32.mrf.mxu0
  %v1053 = vadd.f32 %v970, %v1052
  %v1054 = vpop.f32.mrf.mxu0
  %v1055 = vadd.f32 %v972, %v1054
  %1056 = vmatmul.bf16.gmra.mxu0 %v505
  %v1057 = vpop.f32.mrf.mxu0
  %v1058 = vadd.f32 %v975, %v1057
  %v1059 = vpop.f32.mrf.mxu0
  %v1060 = vadd.f32 %v977, %v1059
  %1061 = vmatmul.bf16.gmra.mxu0 %v511
  %v1062 = vpop.f32.mrf.mxu0
  %v1063 = vadd.f32 %v980, %v1062
  %v1064 = vpop.f32.mrf.mxu0
  %v1065 = vadd.f32 %v982, %v1064
  %1066 = vmatmul.bf16.gmra.mxu0 %v517
  %v1067 = vpop.f32.mrf.mxu0
  %v1068 = vadd.f32 %v985, %v1067
  %v1069 = vpop.f32.mrf.mxu0
  %v1070 = vadd.f32 %v987, %v1069
  %1071 = vmatmul.bf16.gmra.mxu0 %v523
  %v1072 = vpop.f32.mrf.mxu0
  %v1073 = vadd.f32 %v990, %v1072
  %v1074 = vpop.f32.mrf.mxu0
  %v1075 = vadd.f32 %v992, %v1074
  %1076 = vmatmul.bf16.gmra.mxu0 %v529
  %v1077 = vpop.f32.mrf.mxu0
  %v1078 = vadd.f32 %v995, %v1077
  %v1079 = vpop.f32.mrf.mxu0
  %v1080 = vadd.f32 %v997, %v1079
  %1081 = vmatmul.bf16.gmra.mxu0 %v535
  %v1082 = vpop.f32.mrf.mxu0
  %v1083 = vadd.f32 %v1000, %v1082
  %v1084 = vpop.f32.mrf.mxu0
  %v1085 = vadd.f32 %v1002, %v1084
  %1086 = vmatmul.bf16.gmra.mxu0 %v541
  %v1087 = vpop.f32.mrf.mxu0
  %v1088 = vadd.f32 %v1005, %v1087
  %v1089 = vpop.f32.mrf.mxu0
  %v1090 = vadd.f32 %v1007, %v1089
  %1091 = vmatmul.bf16.gmra.mxu0 %v547
  %v1092 = vpop.f32.mrf.mxu0
  %v1093 = vadd.f32 %v1010, %v1092
  %v1094 = vpop.f32.mrf.mxu0
  %1095 = vdwg.mxu0
  %1096 = vmatpush.bf16.msra.mxu0 %v857
  %1097 = vmatpush.bf16.msra.mxu0 %v856
  %1098 = vmatpush.bf16.msra.mxu0 %v855
  %1099 = vmatpush.bf16.msra.mxu0 %v854
  %1100 = vmatpush.bf16.msra.mxu0 %v853
  %1101 = vmatpush.bf16.msra.mxu0 %v852
  %1102 = vmatpush.bf16.msra.mxu0 %v851
  %1103 = vmatpush.bf16.msra.mxu0 %v850
  %1104 = vmatmul.bf16.gmra.mxu0 %v464
  %v1105 = vpop.f32.mrf.mxu0
  %v1106 = vadd.f32 %v1023, %v1105
  %v1107 = vpop.f32.mrf.mxu0
  %v1108 = vadd.f32 %v1025, %v1107
  %1109 = vmatmul.bf16.gmra.mxu0 %v470
  %v1110 = vpop.f32.mrf.mxu0
  %v1111 = vadd.f32 %v1028, %v1110
  %v1112 = vpop.f32.mrf.mxu0
  %v1113 = vadd.f32 %v1030, %v1112
  %1114 = vmatmul.bf16.gmra.mxu0 %v476
  %v1115 = vpop.f32.mrf.mxu0
  %v1116 = vadd.f32 %v1033, %v1115
  %v1117 = vpop.f32.mrf.mxu0
  %v1118 = vadd.f32 %v1035, %v1117
  %1119 = vmatmul.bf16.gmra.mxu0 %v482
  %v1120 = vpop.f32.mrf.mxu0
  %v1121 = vadd.f32 %v1038, %v1120
  %v1122 = vpop.f32.mrf.mxu0
  %v1123 = vadd.f32 %v1040, %v1122
  %1124 = vmatmul.bf16.gmra.mxu0 %v488
  %v1125 = vpop.f32.mrf.mxu0
  %v1126 = vadd.f32 %v1043, %v1125
  %v1127 = vpop.f32.mrf.mxu0
  %v1128 = vadd.f32 %v1045, %v1127
  %1129 = vmatmul.bf16.gmra.mxu0 %v494
  %v1130 = vpop.f32.mrf.mxu0
  %v1131 = vadd.f32 %v1048, %v1130
  %v1132 = vpop.f32.mrf.mxu0
  %v1133 = vadd.f32 %v1050, %v1132
  %1134 = vmatmul.bf16.gmra.mxu0 %v500
  %v1135 = vpop.f32.mrf.mxu0
  %v1136 = vadd.f32 %v1053, %v1135
  %v1137 = vpop.f32.mrf.mxu0
  %v1138 = vadd.f32 %v1055, %v1137
  %1139 = vmatmul.bf16.gmra.mxu0 %v506
  %v1140 = vpop.f32.mrf.mxu0
  %v1141 = vadd.f32 %v1058, %v1140
  %v1142 = vpop.f32.mrf.mxu0
  %v1143 = vadd.f32 %v1060, %v1142
  %1144 = vmatmul.bf16.gmra.mxu0 %v512
  %v1145 = vpop.f32.mrf.mxu0
  %v1146 = vadd.f32 %v1063, %v1145
  %v1147 = vpop.f32.mrf.mxu0
  %v1148 = vadd.f32 %v1065, %v1147
  %1149 = vmatmul.bf16.gmra.mxu0 %v518
  %v1150 = vpop.f32.mrf.mxu0
  %v1151 = vadd.f32 %v1068, %v1150
  %v1152 = vpop.f32.mrf.mxu0
  %v1153 = vadd.f32 %v1070, %v1152
  %1154 = vmatmul.bf16.gmra.mxu0 %v524
  %v1155 = vpop.f32.mrf.mxu0
  %v1156 = vadd.f32 %v1073, %v1155
  %v1157 = vpop.f32.mrf.mxu0
  %v1158 = vadd.f32 %v1075, %v1157
  %1159 = vmatmul.bf16.gmra.mxu0 %v530
  %v1160 = vpop.f32.mrf.mxu0
  %v1161 = vadd.f32 %v1078, %v1160
  %v1162 = vpop.f32.mrf.mxu0
  %v1163 = vadd.f32 %v1080, %v1162
  %1164 = vmatmul.bf16.gmra.mxu0 %v536
  %v1165 = vpop.f32.mrf.mxu0
  %v1166 = vadd.f32 %v1083, %v1165
  %v1167 = vpop.f32.mrf.mxu0
  %v1168 = vadd.f32 %v1085, %v1167
  %1169 = vmatmul.bf16.gmra.mxu0 %v542
  %v1170 = vpop.f32.mrf.mxu0
  %v1171 = vadd.f32 %v1088, %v1170
  %v1172 = vpop.f32.mrf.mxu0
  %v1173 = vadd.f32 %v1090, %v1172
  %1174 = vmatmul.bf16.gmra.mxu0 %v548
  %v1175 = vpop.f32.mrf.mxu0
  %v1176 = vadd.f32 %v1093, %v1175
  %v1177 = vpop.f32.mrf.mxu0
  %1178 = vdwg.mxu0
  %1179 = vmatpush.bf16.msra.mxu0 %v865
  %1180 = vmatpush.bf16.msra.mxu0 %v864
  %1181 = vmatpush.bf16.msra.mxu0 %v863
  %1182 = vmatpush.bf16.msra.mxu0 %v862
  %1183 = vmatpush.bf16.msra.mxu0 %v861
  %1184 = vmatpush.bf16.msra.mxu0 %v860
  %1185 = vmatpush.bf16.msra.mxu0 %v859
  %1186 = vmatpush.bf16.msra.mxu0 %v858
  %1187 = vmatmul.bf16.gmra.mxu0 %v465
  %v1188 = vpop.f32.mrf.mxu0
  %v1189 = vadd.f32 %v1106, %v1188
  %v1190 = vpop.f32.mrf.mxu0
  %v1191 = vadd.f32 %v1108, %v1190
  %1192 = vmatmul.bf16.gmra.mxu0 %v471
  %v1193 = vpop.f32.mrf.mxu0
  %v1194 = vadd.f32 %v1111, %v1193
  %v1195 = vpop.f32.mrf.mxu0
  %v1196 = vadd.f32 %v1113, %v1195
  %1197 = vmatmul.bf16.gmra.mxu0 %v477
  %v1198 = vpop.f32.mrf.mxu0
  %v1199 = vadd.f32 %v1116, %v1198
  %v1200 = vpop.f32.mrf.mxu0
  %v1201 = vadd.f32 %v1118, %v1200
  %1202 = vmatmul.bf16.gmra.mxu0 %v483
  %v1203 = vpop.f32.mrf.mxu0
  %v1204 = vadd.f32 %v1121, %v1203
  %v1205 = vpop.f32.mrf.mxu0
  %v1206 = vadd.f32 %v1123, %v1205
  %1207 = vmatmul.bf16.gmra.mxu0 %v489
  %v1208 = vpop.f32.mrf.mxu0
  %v1209 = vadd.f32 %v1126, %v1208
  %v1210 = vpop.f32.mrf.mxu0
  %v1211 = vadd.f32 %v1128, %v1210
  %1212 = vmatmul.bf16.gmra.mxu0 %v495
  %v1213 = vpop.f32.mrf.mxu0
  %v1214 = vadd.f32 %v1131, %v1213
  %v1215 = vpop.f32.mrf.mxu0
  %v1216 = vadd.f32 %v1133, %v1215
  %1217 = vmatmul.bf16.gmra.mxu0 %v501
  %v1218 = vpop.f32.mrf.mxu0
  %v1219 = vadd.f32 %v1136, %v1218
  %v1220 = vpop.f32.mrf.mxu0
  %v1221 = vadd.f32 %v1138, %v1220
  %1222 = vmatmul.bf16.gmra.mxu0 %v507
  %v1223 = vpop.f32.mrf.mxu0
  %v1224 = vadd.f32 %v1141, %v1223
  %v1225 = vpop.f32.mrf.mxu0
  %v1226 = vadd.f32 %v1143, %v1225
  %1227 = vmatmul.bf16.gmra.mxu0 %v513
  %v1228 = vpop.f32.mrf.mxu0
  %v1229 = vadd.f32 %v1146, %v1228
  %v1230 = vpop.f32.mrf.mxu0
  %v1231 = vadd.f32 %v1148, %v1230
  %1232 = vmatmul.bf16.gmra.mxu0 %v519
  %v1233 = vpop.f32.mrf.mxu0
  %v1234 = vadd.f32 %v1151, %v1233
  %v1235 = vpop.f32.mrf.mxu0
  %v1236 = vadd.f32 %v1153, %v1235
  %1237 = vmatmul.bf16.gmra.mxu0 %v525
  %v1238 = vpop.f32.mrf.mxu0
  %v1239 = vadd.f32 %v1156, %v1238
  %v1240 = vpop.f32.mrf.mxu0
  %v1241 = vadd.f32 %v1158, %v1240
  %1242 = vmatmul.bf16.gmra.mxu0 %v531
  %v1243 = vpop.f32.mrf.mxu0
  %v1244 = vadd.f32 %v1161, %v1243
  %v1245 = vpop.f32.mrf.mxu0
  %v1246 = vadd.f32 %v1163, %v1245
  %1247 = vmatmul.bf16.gmra.mxu0 %v537
  %v1248 = vpop.f32.mrf.mxu0
  %v1249 = vadd.f32 %v1166, %v1248
  %v1250 = vpop.f32.mrf.mxu0
  %v1251 = vadd.f32 %v1168, %v1250
  %1252 = vmatmul.bf16.gmra.mxu0 %v543
  %v1253 = vpop.f32.mrf.mxu0
  %v1254 = vadd.f32 %v1171, %v1253
  %v1255 = vpop.f32.mrf.mxu0
  %v1256 = vadd.f32 %v1173, %v1255
  %1257 = vmatmul.bf16.gmra.mxu0 %v549
  %v1258 = vpop.f32.mrf.mxu0
  %v1259 = vadd.f32 %v1176, %v1258
  %v1260 = vpop.f32.mrf.mxu0
  %1261 = vdwg.mxu0
  %1262 = vmatpush.bf16.msra.mxu0 %v873
  %1263 = vmatpush.bf16.msra.mxu0 %v872
  %1264 = vmatpush.bf16.msra.mxu0 %v871
  %1265 = vmatpush.bf16.msra.mxu0 %v870
  %1266 = vmatpush.bf16.msra.mxu0 %v869
  %1267 = vmatpush.bf16.msra.mxu0 %v868
  %1268 = vmatpush.bf16.msra.mxu0 %v867
  %1269 = vmatpush.bf16.msra.mxu0 %v866
  %1270 = vmatmul.bf16.gmra.mxu0 %v466
  %v1271 = vpop.f32.mrf.mxu0
  %v1272 = vadd.f32 %v1189, %v1271
  %v1273 = vpop.f32.mrf.mxu0
  %v1274 = vadd.f32 %v1191, %v1273
  %1275 = vmatmul.bf16.gmra.mxu0 %v472
  %v1276 = vpop.f32.mrf.mxu0
  %v1277 = vadd.f32 %v1194, %v1276
  %v1278 = vpop.f32.mrf.mxu0
  %v1279 = vadd.f32 %v1196, %v1278
  %1280 = vmatmul.bf16.gmra.mxu0 %v478
  %v1281 = vpop.f32.mrf.mxu0
  %v1282 = vadd.f32 %v1199, %v1281
  %v1283 = vpop.f32.mrf.mxu0
  %v1284 = vadd.f32 %v1201, %v1283
  %1285 = vmatmul.bf16.gmra.mxu0 %v484
  %v1286 = vpop.f32.mrf.mxu0
  %v1287 = vadd.f32 %v1204, %v1286
  %v1288 = vpop.f32.mrf.mxu0
  %v1289 = vadd.f32 %v1206, %v1288
  %1290 = vmatmul.bf16.gmra.mxu0 %v490
  %v1291 = vpop.f32.mrf.mxu0
  %v1292 = vadd.f32 %v1209, %v1291
  %v1293 = vpop.f32.mrf.mxu0
  %v1294 = vadd.f32 %v1211, %v1293
  %1295 = vmatmul.bf16.gmra.mxu0 %v496
  %v1296 = vpop.f32.mrf.mxu0
  %v1297 = vadd.f32 %v1214, %v1296
  %v1298 = vpop.f32.mrf.mxu0
  %v1299 = vadd.f32 %v1216, %v1298
  %1300 = vmatmul.bf16.gmra.mxu0 %v502
  %v1301 = vpop.f32.mrf.mxu0
  %v1302 = vadd.f32 %v1219, %v1301
  %v1303 = vpop.f32.mrf.mxu0
  %v1304 = vadd.f32 %v1221, %v1303
  %1305 = vmatmul.bf16.gmra.mxu0 %v508
  %v1306 = vpop.f32.mrf.mxu0
  %v1307 = vadd.f32 %v1224, %v1306
  %v1308 = vpop.f32.mrf.mxu0
  %v1309 = vadd.f32 %v1226, %v1308
  %1310 = vmatmul.bf16.gmra.mxu0 %v514
  %v1311 = vpop.f32.mrf.mxu0
  %v1312 = vadd.f32 %v1229, %v1311
  %v1313 = vpop.f32.mrf.mxu0
  %v1314 = vadd.f32 %v1231, %v1313
  %1315 = vmatmul.bf16.gmra.mxu0 %v520
  %v1316 = vpop.f32.mrf.mxu0
  %v1317 = vadd.f32 %v1234, %v1316
  %v1318 = vpop.f32.mrf.mxu0
  %v1319 = vadd.f32 %v1236, %v1318
  %1320 = vmatmul.bf16.gmra.mxu0 %v526
  %v1321 = vpop.f32.mrf.mxu0
  %v1322 = vadd.f32 %v1239, %v1321
  %v1323 = vpop.f32.mrf.mxu0
  %v1324 = vadd.f32 %v1241, %v1323
  %1325 = vmatmul.bf16.gmra.mxu0 %v532
  %v1326 = vpop.f32.mrf.mxu0
  %v1327 = vadd.f32 %v1244, %v1326
  %v1328 = vpop.f32.mrf.mxu0
  %v1329 = vadd.f32 %v1246, %v1328
  %1330 = vmatmul.bf16.gmra.mxu0 %v538
  %v1331 = vpop.f32.mrf.mxu0
  %v1332 = vadd.f32 %v1249, %v1331
  %v1333 = vpop.f32.mrf.mxu0
  %v1334 = vadd.f32 %v1251, %v1333
  %1335 = vmatmul.bf16.gmra.mxu0 %v544
  %v1336 = vpop.f32.mrf.mxu0
  %v1337 = vadd.f32 %v1254, %v1336
  %v1338 = vpop.f32.mrf.mxu0
  %v1339 = vadd.f32 %v1256, %v1338
  %1340 = vmatmul.bf16.gmra.mxu0 %v550
  %v1341 = vpop.f32.mrf.mxu0
  %v1342 = vadd.f32 %v1259, %v1341
  %v1343 = vpop.f32.mrf.mxu0
  %1344 = vdwg.mxu0
  %1345 = vmatpush.bf16.msra.mxu0 %v881
  %1346 = vmatpush.bf16.msra.mxu0 %v880
  %1347 = vmatpush.bf16.msra.mxu0 %v879
  %1348 = vmatpush.bf16.msra.mxu0 %v878
  %1349 = vmatpush.bf16.msra.mxu0 %v877
  %1350 = vmatpush.bf16.msra.mxu0 %v876
  %1351 = vmatpush.bf16.msra.mxu0 %v875
  %1352 = vmatpush.bf16.msra.mxu0 %v874
  %1353 = vmatmul.bf16.gmra.mxu0 %v467
  %v1354 = vpop.f32.mrf.mxu0
  %v1355 = vadd.f32 %v1272, %v1354
  %v1356 = vpop.f32.mrf.mxu0
  %v1357 = vadd.f32 %v1274, %v1356
  %1358 = vmatmul.bf16.gmra.mxu0 %v473
  %v1359 = vpop.f32.mrf.mxu0
  %v1360 = vadd.f32 %v1277, %v1359
  %v1361 = vpop.f32.mrf.mxu0
  %v1362 = vadd.f32 %v1279, %v1361
  %1363 = vmatmul.bf16.gmra.mxu0 %v479
  %v1364 = vpop.f32.mrf.mxu0
  %v1365 = vadd.f32 %v1282, %v1364
  %v1366 = vpop.f32.mrf.mxu0
  %v1367 = vadd.f32 %v1284, %v1366
  %1368 = vmatmul.bf16.gmra.mxu0 %v485
  %v1369 = vpop.f32.mrf.mxu0
  %v1370 = vadd.f32 %v1287, %v1369
  %v1371 = vpop.f32.mrf.mxu0
  %v1372 = vadd.f32 %v1289, %v1371
  %1373 = vmatmul.bf16.gmra.mxu0 %v491
  %v1374 = vpop.f32.mrf.mxu0
  %v1375 = vadd.f32 %v1292, %v1374
  %v1376 = vpop.f32.mrf.mxu0
  %v1377 = vadd.f32 %v1294, %v1376
  %1378 = vmatmul.bf16.gmra.mxu0 %v497
  %v1379 = vpop.f32.mrf.mxu0
  %v1380 = vadd.f32 %v1297, %v1379
  %v1381 = vpop.f32.mrf.mxu0
  %v1382 = vadd.f32 %v1299, %v1381
  %1383 = vmatmul.bf16.gmra.mxu0 %v503
  %v1384 = vpop.f32.mrf.mxu0
  %v1385 = vadd.f32 %v1302, %v1384
  %v1386 = vpop.f32.mrf.mxu0
  %v1387 = vadd.f32 %v1304, %v1386
  %1388 = vmatmul.bf16.gmra.mxu0 %v509
  %v1389 = vpop.f32.mrf.mxu0
  %v1390 = vadd.f32 %v1307, %v1389
  %v1391 = vpop.f32.mrf.mxu0
  %v1392 = vadd.f32 %v1309, %v1391
  %1393 = vmatmul.bf16.gmra.mxu0 %v515
  %v1394 = vpop.f32.mrf.mxu0
  %v1395 = vadd.f32 %v1312, %v1394
  %v1396 = vpop.f32.mrf.mxu0
  %v1397 = vadd.f32 %v1314, %v1396
  %1398 = vmatmul.bf16.gmra.mxu0 %v521
  %v1399 = vpop.f32.mrf.mxu0
  %v1400 = vadd.f32 %v1317, %v1399
  %v1401 = vpop.f32.mrf.mxu0
  %v1402 = vadd.f32 %v1319, %v1401
  %1403 = vmatmul.bf16.gmra.mxu0 %v527
  %v1404 = vpop.f32.mrf.mxu0
  %v1405 = vadd.f32 %v1322, %v1404
  %v1406 = vpop.f32.mrf.mxu0
  %v1407 = vadd.f32 %v1324, %v1406
  %1408 = vmatmul.bf16.gmra.mxu0 %v533
  %v1409 = vpop.f32.mrf.mxu0
  %v1410 = vadd.f32 %v1327, %v1409
  %v1411 = vpop.f32.mrf.mxu0
  %v1412 = vadd.f32 %v1329, %v1411
  %1413 = vmatmul.bf16.gmra.mxu0 %v539
  %v1414 = vpop.f32.mrf.mxu0
  %v1415 = vadd.f32 %v1332, %v1414
  %v1416 = vpop.f32.mrf.mxu0
  %v1417 = vadd.f32 %v1334, %v1416
  %1418 = vmatmul.bf16.gmra.mxu0 %v545
  %v1419 = vpop.f32.mrf.mxu0
  %v1420 = vadd.f32 %v1337, %v1419
  %v1421 = vpop.f32.mrf.mxu0
  %v1422 = vadd.f32 %v1339, %v1421
  %1423 = vmatmul.bf16.gmra.mxu0 %v551
  %v1424 = vpop.f32.mrf.mxu0
  %v1425 = vadd.f32 %v1342, %v1424
  %v1426 = vpop.f32.mrf.mxu0
  %1427 = vdwg.mxu0
  %v1428 = vmax.f32 %v1355, 0.0
  %v1429 = vmax.f32 %v1357, 0.0
  %v1430 = vmax.f32 %v1360, 0.0
  %v1431 = vmax.f32 %v1362, 0.0
  %v1432 = vmax.f32 %v1365, 0.0
  %v1433 = vmax.f32 %v1367, 0.0
  %v1434 = vmax.f32 %v1370, 0.0
  %v1435 = vmax.f32 %v1372, 0.0
  %v1436 = vmax.f32 %v1375, 0.0
  %v1437 = vmax.f32 %v1377, 0.0
  %v1438 = vmax.f32 %v1380, 0.0
  %v1439 = vmax.f32 %v1382, 0.0
  %v1440 = vmax.f32 %v1385, 0.0
  %v1441 = vmax.f32 %v1387, 0.0
  %v1442 = vmax.f32 %v1390, 0.0
  %v1443 = vmax.f32 %v1392, 0.0
  %v1444 = vmax.f32 %v1395, 0.0
  %v1445 = vmax.f32 %v1397, 0.0
  %v1446 = vmax.f32 %v1400, 0.0
  %v1447 = vmax.f32 %v1402, 0.0
  %v1448 = vmax.f32 %v1405, 0.0
  %v1449 = vmax.f32 %v1407, 0.0
  %v1450 = vmax.f32 %v1410, 0.0
  %v1451 = vmax.f32 %v1412, 0.0
  %v1452 = vmax.f32 %v1415, 0.0
  %v1453 = vmax.f32 %v1417, 0.0
  %v1454 = vmax.f32 %v1420, 0.0
  %v1455 = vmax.f32 %v1422, 0.0
  %v1456 = vmax.f32 %v1425, 0.0
  %v1457 = vpack.c.bf16 %v1428, %v1428
  %v1458 = vpack.c.bf16 %v1429, %v1429
  %v1459 = vpack.c.bf16 %v1430, %v1430
  %v1460 = vpack.c.bf16 %v1431, %v1431
  %v1461 = vpack.c.bf16 %v1432, %v1432
  %v1462 = vpack.c.bf16 %v1433, %v1433
  %v1463 = vpack.c.bf16 %v1434, %v1434
  %v1464 = vpack.c.bf16 %v1435, %v1435
  %v1465 = vpack.c.bf16 %v1436, %v1436
  %v1466 = vpack.c.bf16 %v1437, %v1437
  %v1467 = vpack.c.bf16 %v1438, %v1438
  %v1468 = vpack.c.bf16 %v1439, %v1439
  %v1469 = vpack.c.bf16 %v1440, %v1440
  %v1470 = vpack.c.bf16 %v1441, %v1441
  %v1471 = vpack.c.bf16 %v1442, %v1442
  %v1472 = vpack.c.bf16 %v1443, %v1443
  %v1473 = vpack.c.bf16 %v1444, %v1444
  %v1474 = vpack.c.bf16 %v1445, %v1445
  %v1475 = vpack.c.bf16 %v1446, %v1446
  %v1476 = vpack.c.bf16 %v1447, %v1447
  %v1477 = vpack.c.bf16 %v1448, %v1448
  %v1478 = vpack.c.bf16 %v1449, %v1449
  %v1479 = vpack.c.bf16 %v1450, %v1450
  %v1480 = vpack.c.bf16 %v1451, %v1451
  %v1481 = vpack.c.bf16 %v1452, %v1452
  %v1482 = vpack.c.bf16 %v1453, %v1453
  %v1483 = vpack.c.bf16 %v1454, %v1454
  %v1484 = vpack.c.bf16 %v1455, %v1455
  %v1485 = vpack.c.bf16 %v1456, %v1456
  %1486 = vst [vmem:[%s3] sm:$0xf] %v1457
  %1487 = vst [vmem:[%s3 + $0x4] sm:$0xf] %v1458
  %1488 = vst [vmem:[%s3 + $0x8] sm:$0xf] %v1459
  %1489 = vst [vmem:[%s3 + $0xc] sm:$0xf] %v1460
  %1490 = vst [vmem:[%s3 + $0x10] sm:$0xf] %v1461
  %1491 = vst [vmem:[%s3 + $0x14] sm:$0xf] %v1462
  %1492 = vst [vmem:[%s3 + $0x18] sm:$0xf] %v1463
  %1493 = vst [vmem:[%s3 + $0x1c] sm:$0xf] %v1464
  %1494 = vst [vmem:[%s3 + $0x20] sm:$0xf] %v1465
  %1495 = vst [vmem:[%s3 + $0x24] sm:$0xf] %v1466
  %1496 = vst [vmem:[%s3 + $0x28] sm:$0xf] %v1467
  %1497 = vst [vmem:[%s3 + $0x2c] sm:$0xf] %v1468
  %1498 = vst [vmem:[%s3 + $0x30] sm:$0xf] %v1469
  %1499 = vst [vmem:[%s3 + $0x34] sm:$0xf] %v1470
  %1500 = vst [vmem:[%s3 + $0x38] sm:$0xf] %v1471
  %1501 = vst [vmem:[%s3 + $0x3c] sm:$0xf] %v1472
  %1502 = vst [vmem:[%s3 + $0x40] sm:$0xf] %v1473
  %1503 = vst [vmem:[%s3 + $0x44] sm:$0xf] %v1474
  %1504 = vst [vmem:[%s3 + $0x48] sm:$0xf] %v1475
  %1505 = vst [vmem:[%s3 + $0x4c] sm:$0xf] %v1476
  %1506 = vst [vmem:[%s3 + $0x50] sm:$0xf] %v1477
  %1507 = vst [vmem:[%s3 + $0x54] sm:$0xf] %v1478
  %1508 = vst [vmem:[%s3 + $0x58] sm:$0xf] %v1479
  %1509 = vst [vmem:[%s3 + $0x5c] sm:$0xf] %v1480
  %1510 = vst [vmem:[%s3 + $0x60] sm:$0xf] %v1481
  %1511 = vst [vmem:[%s3 + $0x64] sm:$0xf] %v1482
  %1512 = vst [vmem:[%s3 + $0x68] sm:$0xf] %v1483
  %1513 = vst [vmem:[%s3 + $0x6c] sm:$0xf] %v1484
  %vm1514 = vcmask 1040384
  %vm1515 = vsmask.f32 256
  %vm1516 = vmand %vm1514, %vm1515
  %v1517 = vld [vmem:[%s3 + $0x70] sm:$0x1]
  %v1518 = vsel %vm1516, %v1485, %v1517
  %1519 = vst [vmem:[%s3 + $0x70] sm:$0x1] %v1518
  // Predicated region
  $region14: #{flatten_mlp_img_forward.4} parent=0 // pred_check
    _
  $region15: #{flatten_mlp_img_forward.4} parent=0 // pred_check_branch
    %1521 = sbr.rel (0) target = $region17
  $region16: #{flatten_mlp_img_forward.4} parent=0 // pred_region
    _
  $region17: #{flatten_mlp_img_forward.4} parent=0 // pred_fallthru
    _
  // Predicated region
  $region18: #{flatten_mlp_img_forward.4} parent=0 // pred_check
    _
  $region19: #{flatten_mlp_img_forward.4} parent=0 // pred_check_branch
    %1523 = sbr.rel (0) target = $region21
  $region20: #{flatten_mlp_img_forward.4} parent=0 // pred_region
    _
  $region21: #{flatten_mlp_img_forward.4} parent=0 // pred_fallthru
    _

// kernel: tile.23
$region0: #{tile.23}
  #allocation0 [shape = 's32[1]{0}', space=sflag, size = 0x4, scoped, tag = 'scoped memory for tile.23']
  %s0 = inlined_call_operand.vmem [shape: f32[64], index: 0, kind: input, shape index: {}]
  %s1 = inlined_call_operand.vmem [shape: f32[2,64], index: 1, kind: output, shape index: {}]
  // Predicated region
  $region2: #{tile.23} parent=0 // pred_check
    _
  $region3: #{tile.23} parent=0 // pred_check_branch
    %3 = sbr.rel (0) target = $region5
  $region4: #{tile.23} parent=0 // pred_region
    _
  $region5: #{tile.23} parent=0 // pred_fallthru
    _
  %v4 = vld [vmem:[%s0] ss:$0 sm:$0xff]
  %5 = vst [vmem:[%s1] sm:$0x3] %v4

// kernel: tile.24
$region0: #{tile.24}
  %s0 = inlined_call_operand.vmem [shape: f32[2,64], index: 0, kind: input, shape index: {}]
  %s1 = inlined_call_operand.vmem [shape: f32[1,128], index: 1, kind: output, shape index: {}]
  $region1: #{tile.24} parent=0
    #allocation0 [shape = 'u8[4096]{0}', space=vmem, size = 0x1000, scoped, tag = 'scoped mem for output reshape']
    #allocation1 [shape = 'u8[4096]{0}', space=vmem, size = 0x1000, scoped, tag = 'scoped mem for input reshape']
    %s3 = ssub.s32 4, 1
    %v4 = vld [vmem:[%s0] sm:%s3]
    %5 = vst [vmem:[#allocation1] sm:%s3] %v4
    %v6 = vld [vmem:[#allocation1] sm:$0x1]
    %vm7 = vcmask 523264
    %8 = vst.msk [vmem:[#allocation0] sm:$0x1] %vm7, %v6
    %s9 = scalar_lea.vmem [#allocation1], 1
    %v10 = vld [vmem:[%s9] sm:$0x1]
    %11 = vrot.lane.b32.xlu0 %v10, 64
    %v12 = vpop.permute.xlu0 %11
    %vm13 = vcmask 1048064
    %14 = vst.msk [vmem:[#allocation0] sm:$0x1] %vm13, %v12
    %s16 = ssub.s32 2, 1
    %v17 = vld [vmem:[#allocation0] sm:%s16]
    %s19 = ssub.s32 2, 1
    %20 = vst [vmem:[%s1] sm:%s19] %v17

// kernel: flatten_mlp_img_forward.5
$region0: #{flatten_mlp_img_forward.5}
  #allocation0 [shape = 'u32[]', space=smem, size = 0x4, offset = 0x4, fixed_abs, tag = 'smem constant byte address 0x4 - core index']
  #allocation1 [shape = 'u32[72,128]{1,0:T(1,128)}', space=vmem, size = 0x9000, scoped, tag = 'internal scratch']
  %s0 = inlined_call_operand.vmem [shape: bf16[72,1024], index: 0, kind: input, shape index: {}]
  %s1 = inlined_call_operand.vmem [shape: bf16[1024,128], index: 1, kind: input, shape index: {}]
  %s2 = inlined_call_operand.vmem [shape: f32[1,128], index: 2, kind: input, shape index: {}]
  %s3 = inlined_call_operand.vmem [shape: bf16[72,128], index: 3, kind: output, shape index: {}]
  %s4 = sld [smem:[#allocation0]]
  $region22: #{flatten_mlp_img_forward.5} parent=0
    _
  %s6 = ssub.s32 1, %s4
  %s7 = scalar_select 0, %s6, %s4
  // Predicated region
  $region2: #{flatten_mlp_img_forward.5} parent=0 // pred_check
    _
  $region3: #{flatten_mlp_img_forward.5} parent=0 // pred_check_branch
    %9 = sbr.rel (0) target = $region5
  $region4: #{flatten_mlp_img_forward.5} parent=0 // pred_region
    _
  $region5: #{flatten_mlp_img_forward.5} parent=0 // pred_fallthru
    _
  // Predicated region
  $region6: #{flatten_mlp_img_forward.5} parent=0 // pred_check
    _
  $region7: #{flatten_mlp_img_forward.5} parent=0 // pred_check_branch
    %11 = sbr.rel (0) target = $region9
  $region8: #{flatten_mlp_img_forward.5} parent=0 // pred_region
    _
  $region9: #{flatten_mlp_img_forward.5} parent=0 // pred_fallthru
    _
  // Predicated region
  $region10: #{flatten_mlp_img_forward.5} parent=0 // pred_check
    _
  $region11: #{flatten_mlp_img_forward.5} parent=0 // pred_check_branch
    %13 = sbr.rel (0) target = $region13
  $region12: #{flatten_mlp_img_forward.5} parent=0 // pred_region
    _
  $region13: #{flatten_mlp_img_forward.5} parent=0 // pred_fallthru
    _
  %v14 = vld [vmem:[%s0] sm:$0xff]
  %v15 = vld [vmem:[%s0 + $0x8] sm:$0xff]
  %v16 = vld [vmem:[%s0 + $0x10] sm:$0xff]
  %v17 = vld [vmem:[%s0 + $0x18] sm:$0xff]
  %v18 = vld [vmem:[%s0 + $0x20] sm:$0xff]
  %v19 = vld [vmem:[%s0 + $0x28] sm:$0xff]
  %v20 = vld [vmem:[%s0 + $0x30] sm:$0xff]
  %v21 = vld [vmem:[%s0 + $0x38] sm:$0xff]
  %v22 = vld [vmem:[%s0 + $0x40] sm:$0xff]
  %v23 = vld [vmem:[%s0 + $0x48] sm:$0xff]
  %v24 = vld [vmem:[%s0 + $0x50] sm:$0xff]
  %v25 = vld [vmem:[%s0 + $0x58] sm:$0xff]
  %v26 = vld [vmem:[%s0 + $0x60] sm:$0xff]
  %v27 = vld [vmem:[%s0 + $0x68] sm:$0xff]
  %v28 = vld [vmem:[%s0 + $0x70] sm:$0xff]
  %v29 = vld [vmem:[%s0 + $0x78] sm:$0xff]
  %v30 = vld [vmem:[%s0 + $0x80] sm:$0xff]
  %v31 = vld [vmem:[%s0 + $0x88] sm:$0xff]
  %v32 = vld [vmem:[%s0 + $0x90] sm:$0xff]
  %v33 = vld [vmem:[%s0 + $0x98] sm:$0xff]
  %v34 = vld [vmem:[%s0 + $0xa0] sm:$0xff]
  %v35 = vld [vmem:[%s0 + $0xa8] sm:$0xff]
  %v36 = vld [vmem:[%s0 + $0xb0] sm:$0xff]
  %v37 = vld [vmem:[%s0 + $0xb8] sm:$0xff]
  %v38 = vld [vmem:[%s0 + $0xc0] sm:$0xff]
  %v39 = vld [vmem:[%s0 + $0xc8] sm:$0xff]
  %v40 = vld [vmem:[%s0 + $0xd0] sm:$0xff]
  %v41 = vld [vmem:[%s0 + $0xd8] sm:$0xff]
  %v42 = vld [vmem:[%s0 + $0xe0] sm:$0xff]
  %v43 = vld [vmem:[%s0 + $0xe8] sm:$0xff]
  %v44 = vld [vmem:[%s0 + $0xf0] sm:$0xff]
  %v45 = vld [vmem:[%s0 + $0xf8] sm:$0xff]
  %v46 = vld [vmem:[%s0 + $0x100] sm:$0xff]
  %v47 = vld [vmem:[%s0 + $0x108] sm:$0xff]
  %v48 = vld [vmem:[%s0 + $0x110] sm:$0xff]
  %v49 = vld [vmem:[%s0 + $0x118] sm:$0xff]
  %v50 = vld [vmem:[%s1] sm:$0xf]
  %v51 = vld [vmem:[%s1 + $0x4] sm:$0xf]
  %v52 = vld [vmem:[%s1 + $0x8] sm:$0xf]
  %v53 = vld [vmem:[%s1 + $0xc] sm:$0xf]
  %v54 = vld [vmem:[%s1 + $0x10] sm:$0xf]
  %v55 = vld [vmem:[%s1 + $0x14] sm:$0xf]
  %v56 = vld [vmem:[%s1 + $0x18] sm:$0xf]
  %v57 = vld [vmem:[%s1 + $0x1c] sm:$0xf]
  %v58 = vld [vmem:[%s1 + $0x20] sm:$0xf]
  %v59 = vld [vmem:[%s1 + $0x24] sm:$0xf]
  %v60 = vld [vmem:[%s1 + $0x28] sm:$0xf]
  %v61 = vld [vmem:[%s1 + $0x2c] sm:$0xf]
  %v62 = vld [vmem:[%s1 + $0x30] sm:$0xf]
  %v63 = vld [vmem:[%s1 + $0x34] sm:$0xf]
  %v64 = vld [vmem:[%s1 + $0x38] sm:$0xf]
  %v65 = vld [vmem:[%s1 + $0x3c] sm:$0xf]
  %v66 = vld [vmem:[%s1 + $0x40] sm:$0xf]
  %v67 = vld [vmem:[%s1 + $0x44] sm:$0xf]
  %v68 = vld [vmem:[%s1 + $0x48] sm:$0xf]
  %v69 = vld [vmem:[%s1 + $0x4c] sm:$0xf]
  %v70 = vld [vmem:[%s1 + $0x50] sm:$0xf]
  %v71 = vld [vmem:[%s1 + $0x54] sm:$0xf]
  %v72 = vld [vmem:[%s1 + $0x58] sm:$0xf]
  %v73 = vld [vmem:[%s1 + $0x5c] sm:$0xf]
  %v74 = vld [vmem:[%s1 + $0x60] sm:$0xf]
  %v75 = vld [vmem:[%s1 + $0x64] sm:$0xf]
  %v76 = vld [vmem:[%s1 + $0x68] sm:$0xf]
  %v77 = vld [vmem:[%s1 + $0x6c] sm:$0xf]
  %v78 = vld [vmem:[%s1 + $0x70] sm:$0xf]
  %v79 = vld [vmem:[%s1 + $0x74] sm:$0xf]
  %v80 = vld [vmem:[%s1 + $0x78] sm:$0xf]
  %v81 = vld [vmem:[%s1 + $0x7c] sm:$0xf]
  %v82 = vld [vmem:[%s1 + $0x80] sm:$0xf]
  %v83 = vld [vmem:[%s1 + $0x84] sm:$0xf]
  %v84 = vld [vmem:[%s1 + $0x88] sm:$0xf]
  %v85 = vld [vmem:[%s1 + $0x8c] sm:$0xf]
  %v86 = vld [vmem:[%s1 + $0x90] sm:$0xf]
  %v87 = vld [vmem:[%s1 + $0x94] sm:$0xf]
  %v88 = vld [vmem:[%s1 + $0x98] sm:$0xf]
  %v89 = vld [vmem:[%s1 + $0x9c] sm:$0xf]
  %v90 = vld [vmem:[%s1 + $0xa0] sm:$0xf]
  %v91 = vld [vmem:[%s1 + $0xa4] sm:$0xf]
  %v92 = vld [vmem:[%s1 + $0xa8] sm:$0xf]
  %v93 = vld [vmem:[%s1 + $0xac] sm:$0xf]
  %v94 = vld [vmem:[%s1 + $0xb0] sm:$0xf]
  %v95 = vld [vmem:[%s1 + $0xb4] sm:$0xf]
  %v96 = vld [vmem:[%s1 + $0xb8] sm:$0xf]
  %v97 = vld [vmem:[%s1 + $0xbc] sm:$0xf]
  %v98 = vld [vmem:[%s1 + $0xc0] sm:$0xf]
  %v99 = vld [vmem:[%s1 + $0xc4] sm:$0xf]
  %v100 = vld [vmem:[%s1 + $0xc8] sm:$0xf]
  %v101 = vld [vmem:[%s1 + $0xcc] sm:$0xf]
  %v102 = vld [vmem:[%s1 + $0xd0] sm:$0xf]
  %v103 = vld [vmem:[%s1 + $0xd4] sm:$0xf]
  %v104 = vld [vmem:[%s1 + $0xd8] sm:$0xf]
  %v105 = vld [vmem:[%s1 + $0xdc] sm:$0xf]
  %v106 = vld [vmem:[%s1 + $0xe0] sm:$0xf]
  %v107 = vld [vmem:[%s1 + $0xe4] sm:$0xf]
  %v108 = vld [vmem:[%s1 + $0xe8] sm:$0xf]
  %v109 = vld [vmem:[%s1 + $0xec] sm:$0xf]
  %v110 = vld [vmem:[%s1 + $0xf0] sm:$0xf]
  %v111 = vld [vmem:[%s1 + $0xf4] sm:$0xf]
  %v112 = vld [vmem:[%s1 + $0xf8] sm:$0xf]
  %v113 = vld [vmem:[%s1 + $0xfc] sm:$0xf]
  %v114 = vld [vmem:[%s1 + $0x100] sm:$0xf]
  %v115 = vld [vmem:[%s1 + $0x104] sm:$0xf]
  %v116 = vld [vmem:[%s1 + $0x108] sm:$0xf]
  %v117 = vld [vmem:[%s1 + $0x10c] sm:$0xf]
  %v118 = vld [vmem:[%s1 + $0x110] sm:$0xf]
  %v119 = vld [vmem:[%s1 + $0x114] sm:$0xf]
  %v120 = vld [vmem:[%s1 + $0x118] sm:$0xf]
  %v121 = vld [vmem:[%s1 + $0x11c] sm:$0xf]
  %v122 = vld [vmem:[%s1 + $0x120] sm:$0xf]
  %v123 = vld [vmem:[%s1 + $0x124] sm:$0xf]
  %v124 = vld [vmem:[%s1 + $0x128] sm:$0xf]
  %v125 = vld [vmem:[%s1 + $0x12c] sm:$0xf]
  %v126 = vld [vmem:[%s1 + $0x130] sm:$0xf]
  %v127 = vld [vmem:[%s1 + $0x134] sm:$0xf]
  %v128 = vld [vmem:[%s1 + $0x138] sm:$0xf]
  %v129 = vld [vmem:[%s1 + $0x13c] sm:$0xf]
  %v130 = vld [vmem:[%s1 + $0x140] sm:$0xf]
  %v131 = vld [vmem:[%s1 + $0x144] sm:$0xf]
  %v132 = vld [vmem:[%s1 + $0x148] sm:$0xf]
  %v133 = vld [vmem:[%s1 + $0x14c] sm:$0xf]
  %v134 = vld [vmem:[%s1 + $0x150] sm:$0xf]
  %v135 = vld [vmem:[%s1 + $0x154] sm:$0xf]
  %v136 = vld [vmem:[%s1 + $0x158] sm:$0xf]
  %v137 = vld [vmem:[%s1 + $0x15c] sm:$0xf]
  %v138 = vld [vmem:[%s1 + $0x160] sm:$0xf]
  %v139 = vld [vmem:[%s1 + $0x164] sm:$0xf]
  %v140 = vld [vmem:[%s1 + $0x168] sm:$0xf]
  %v141 = vld [vmem:[%s1 + $0x16c] sm:$0xf]
  %v142 = vld [vmem:[%s1 + $0x170] sm:$0xf]
  %v143 = vld [vmem:[%s1 + $0x174] sm:$0xf]
  %v144 = vld [vmem:[%s1 + $0x178] sm:$0xf]
  %v145 = vld [vmem:[%s1 + $0x17c] sm:$0xf]
  %v146 = vld [vmem:[%s1 + $0x180] sm:$0xf]
  %v147 = vld [vmem:[%s1 + $0x184] sm:$0xf]
  %v148 = vld [vmem:[%s1 + $0x188] sm:$0xf]
  %v149 = vld [vmem:[%s1 + $0x18c] sm:$0xf]
  %v150 = vld [vmem:[%s1 + $0x190] sm:$0xf]
  %v151 = vld [vmem:[%s1 + $0x194] sm:$0xf]
  %v152 = vld [vmem:[%s1 + $0x198] sm:$0xf]
  %v153 = vld [vmem:[%s1 + $0x19c] sm:$0xf]
  %v154 = vld [vmem:[%s1 + $0x1a0] sm:$0xf]
  %v155 = vld [vmem:[%s1 + $0x1a4] sm:$0xf]
  %v156 = vld [vmem:[%s1 + $0x1a8] sm:$0xf]
  %v157 = vld [vmem:[%s1 + $0x1ac] sm:$0xf]
  %v158 = vld [vmem:[%s1 + $0x1b0] sm:$0xf]
  %v159 = vld [vmem:[%s1 + $0x1b4] sm:$0xf]
  %v160 = vld [vmem:[%s1 + $0x1b8] sm:$0xf]
  %v161 = vld [vmem:[%s1 + $0x1bc] sm:$0xf]
  %v162 = vld [vmem:[%s1 + $0x1c0] sm:$0xf]
  %v163 = vld [vmem:[%s1 + $0x1c4] sm:$0xf]
  %v164 = vld [vmem:[%s1 + $0x1c8] sm:$0xf]
  %v165 = vld [vmem:[%s1 + $0x1cc] sm:$0xf]
  %v166 = vld [vmem:[%s1 + $0x1d0] sm:$0xf]
  %v167 = vld [vmem:[%s1 + $0x1d4] sm:$0xf]
  %v168 = vld [vmem:[%s1 + $0x1d8] sm:$0xf]
  %v169 = vld [vmem:[%s1 + $0x1dc] sm:$0xf]
  %v170 = vld [vmem:[%s1 + $0x1e0] sm:$0xf]
  %v171 = vld [vmem:[%s1 + $0x1e4] sm:$0xf]
  %v172 = vld [vmem:[%s1 + $0x1e8] sm:$0xf]
  %v173 = vld [vmem:[%s1 + $0x1ec] sm:$0xf]
  %v174 = vld [vmem:[%s1 + $0x1f0] sm:$0xf]
  %v175 = vld [vmem:[%s1 + $0x1f4] sm:$0xf]
  %v176 = vld [vmem:[%s1 + $0x1f8] sm:$0xf]
  %v177 = vld [vmem:[%s1 + $0x1fc] sm:$0xf]
  %v178 = vld [vmem:[%s2] sm:$0x1]
  %v180 = vperm.slane %v178, 0
  %v218 = vunpack.c.l.b16 %v14
  %v219 = vunpack.c.h.b16 %v14
  %v220 = vunpack.c.l.b16 %v15
  %v221 = vunpack.c.h.b16 %v15
  %v222 = vunpack.c.l.b16 %v16
  %v223 = vunpack.c.h.b16 %v16
  %v224 = vunpack.c.l.b16 %v17
  %v225 = vunpack.c.h.b16 %v17
  %v226 = vunpack.c.l.b16 %v18
  %v227 = vunpack.c.h.b16 %v18
  %v228 = vunpack.c.l.b16 %v19
  %v229 = vunpack.c.h.b16 %v19
  %v230 = vunpack.c.l.b16 %v20
  %v231 = vunpack.c.h.b16 %v20
  %v232 = vunpack.c.l.b16 %v21
  %v233 = vunpack.c.h.b16 %v21
  %v234 = vunpack.c.l.b16 %v22
  %v235 = vunpack.c.h.b16 %v22
  %v236 = vunpack.c.l.b16 %v23
  %v237 = vunpack.c.h.b16 %v23
  %v238 = vunpack.c.l.b16 %v24
  %v239 = vunpack.c.h.b16 %v24
  %v240 = vunpack.c.l.b16 %v25
  %v241 = vunpack.c.h.b16 %v25
  %v242 = vunpack.c.l.b16 %v26
  %v243 = vunpack.c.h.b16 %v26
  %v244 = vunpack.c.l.b16 %v27
  %v245 = vunpack.c.h.b16 %v27
  %v246 = vunpack.c.l.b16 %v28
  %v247 = vunpack.c.h.b16 %v28
  %v248 = vunpack.c.l.b16 %v29
  %v249 = vunpack.c.h.b16 %v29
  %v250 = vunpack.c.l.b16 %v30
  %v251 = vunpack.c.h.b16 %v30
  %v252 = vunpack.c.l.b16 %v31
  %v253 = vunpack.c.h.b16 %v31
  %v254 = vunpack.c.l.b16 %v32
  %v255 = vunpack.c.h.b16 %v32
  %v256 = vunpack.c.l.b16 %v33
  %v257 = vunpack.c.h.b16 %v33
  %v258 = vunpack.c.l.b16 %v34
  %v259 = vunpack.c.h.b16 %v34
  %v260 = vunpack.c.l.b16 %v35
  %v261 = vunpack.c.h.b16 %v35
  %v262 = vunpack.c.l.b16 %v36
  %v263 = vunpack.c.h.b16 %v36
  %v264 = vunpack.c.l.b16 %v37
  %v265 = vunpack.c.h.b16 %v37
  %v266 = vunpack.c.l.b16 %v38
  %v267 = vunpack.c.h.b16 %v38
  %v268 = vunpack.c.l.b16 %v39
  %v269 = vunpack.c.h.b16 %v39
  %v270 = vunpack.c.l.b16 %v40
  %v271 = vunpack.c.h.b16 %v40
  %v272 = vunpack.c.l.b16 %v41
  %v273 = vunpack.c.h.b16 %v41
  %v274 = vunpack.c.l.b16 %v42
  %v275 = vunpack.c.h.b16 %v42
  %v276 = vunpack.c.l.b16 %v43
  %v277 = vunpack.c.h.b16 %v43
  %v278 = vunpack.c.l.b16 %v44
  %v279 = vunpack.c.h.b16 %v44
  %v280 = vunpack.c.l.b16 %v45
  %v281 = vunpack.c.h.b16 %v45
  %v282 = vunpack.c.l.b16 %v46
  %v283 = vunpack.c.h.b16 %v46
  %v284 = vunpack.c.l.b16 %v47
  %v285 = vunpack.c.h.b16 %v47
  %v286 = vunpack.c.l.b16 %v48
  %v287 = vunpack.c.h.b16 %v48
  %v288 = vunpack.c.l.b16 %v49
  %v289 = vunpack.c.h.b16 %v49
  %v290 = vpack.c.b16 %v226, %v218
  %v291 = vpack.c.b16 %v227, %v219
  %v292 = vpack.c.b16 %v228, %v220
  %v293 = vpack.c.b16 %v229, %v221
  %v294 = vpack.c.b16 %v230, %v222
  %v295 = vpack.c.b16 %v231, %v223
  %v296 = vpack.c.b16 %v232, %v224
  %v297 = vpack.c.b16 %v233, %v225
  %v298 = vpack.c.b16 %v242, %v234
  %v299 = vpack.c.b16 %v243, %v235
  %v300 = vpack.c.b16 %v244, %v236
  %v301 = vpack.c.b16 %v245, %v237
  %v302 = vpack.c.b16 %v246, %v238
  %v303 = vpack.c.b16 %v247, %v239
  %v304 = vpack.c.b16 %v248, %v240
  %v305 = vpack.c.b16 %v249, %v241
  %v306 = vpack.c.b16 %v258, %v250
  %v307 = vpack.c.b16 %v259, %v251
  %v308 = vpack.c.b16 %v260, %v252
  %v309 = vpack.c.b16 %v261, %v253
  %v310 = vpack.c.b16 %v262, %v254
  %v311 = vpack.c.b16 %v263, %v255
  %v312 = vpack.c.b16 %v264, %v256
  %v313 = vpack.c.b16 %v265, %v257
  %v314 = vpack.c.b16 %v274, %v266
  %v315 = vpack.c.b16 %v275, %v267
  %v316 = vpack.c.b16 %v276, %v268
  %v317 = vpack.c.b16 %v277, %v269
  %v318 = vpack.c.b16 %v278, %v270
  %v319 = vpack.c.b16 %v279, %v271
  %v320 = vpack.c.b16 %v280, %v272
  %v321 = vpack.c.b16 %v281, %v273
  %v322 = vpack.c.b16 %v282, %v282
  %v323 = vpack.c.b16 %v283, %v283
  %v324 = vpack.c.b16 %v284, %v284
  %v325 = vpack.c.b16 %v285, %v285
  %v326 = vpack.c.b16 %v286, %v286
  %v327 = vpack.c.b16 %v287, %v287
  %v328 = vpack.c.b16 %v288, %v288
  %v329 = vpack.c.b16 %v289, %v289
  %v498 = vunpack.c.l.b16 %v50
  %v499 = vunpack.c.l.b16 %v51
  %v500 = vunpack.c.l.b16 %v52
  %v501 = vunpack.c.l.b16 %v53
  %v502 = vunpack.c.l.b16 %v54
  %v503 = vunpack.c.l.b16 %v55
  %v504 = vunpack.c.l.b16 %v56
  %v505 = vunpack.c.l.b16 %v57
  %v506 = vunpack.c.l.b16 %v58
  %v507 = vunpack.c.l.b16 %v59
  %v508 = vunpack.c.l.b16 %v60
  %v509 = vunpack.c.l.b16 %v61
  %v510 = vunpack.c.l.b16 %v62
  %v511 = vunpack.c.l.b16 %v63
  %v512 = vunpack.c.l.b16 %v64
  %v513 = vunpack.c.l.b16 %v65
  %v514 = vunpack.c.l.b16 %v66
  %v515 = vunpack.c.l.b16 %v67
  %v516 = vunpack.c.l.b16 %v68
  %v517 = vunpack.c.l.b16 %v69
  %v518 = vunpack.c.l.b16 %v70
  %v519 = vunpack.c.l.b16 %v71
  %v520 = vunpack.c.l.b16 %v72
  %v521 = vunpack.c.l.b16 %v73
  %v522 = vunpack.c.l.b16 %v74
  %v523 = vunpack.c.l.b16 %v75
  %v524 = vunpack.c.l.b16 %v76
  %v525 = vunpack.c.l.b16 %v77
  %v526 = vunpack.c.l.b16 %v78
  %v527 = vunpack.c.l.b16 %v79
  %v528 = vunpack.c.l.b16 %v80
  %v529 = vunpack.c.l.b16 %v81
  %v530 = vunpack.c.l.b16 %v82
  %v531 = vunpack.c.l.b16 %v83
  %v532 = vunpack.c.l.b16 %v84
  %v533 = vunpack.c.l.b16 %v85
  %v534 = vunpack.c.l.b16 %v86
  %v535 = vunpack.c.l.b16 %v87
  %v536 = vunpack.c.l.b16 %v88
  %v537 = vunpack.c.l.b16 %v89
  %v538 = vunpack.c.l.b16 %v90
  %v539 = vunpack.c.l.b16 %v91
  %v540 = vunpack.c.l.b16 %v92
  %v541 = vunpack.c.l.b16 %v93
  %v542 = vunpack.c.l.b16 %v94
  %v543 = vunpack.c.l.b16 %v95
  %v544 = vunpack.c.l.b16 %v96
  %v545 = vunpack.c.l.b16 %v97
  %v546 = vunpack.c.l.b16 %v98
  %v547 = vunpack.c.l.b16 %v99
  %v548 = vunpack.c.l.b16 %v100
  %v549 = vunpack.c.l.b16 %v101
  %v550 = vunpack.c.l.b16 %v102
  %v551 = vunpack.c.l.b16 %v103
  %v552 = vunpack.c.l.b16 %v104
  %v553 = vunpack.c.l.b16 %v105
  %v554 = vunpack.c.l.b16 %v106
  %v555 = vunpack.c.l.b16 %v107
  %v556 = vunpack.c.l.b16 %v108
  %v557 = vunpack.c.l.b16 %v109
  %v558 = vunpack.c.l.b16 %v110
  %v559 = vunpack.c.l.b16 %v111
  %v560 = vunpack.c.l.b16 %v112
  %v561 = vunpack.c.l.b16 %v113
  %v562 = vunpack.c.l.b16 %v114
  %v563 = vunpack.c.l.b16 %v115
  %v564 = vunpack.c.l.b16 %v116
  %v565 = vunpack.c.l.b16 %v117
  %v566 = vunpack.c.l.b16 %v118
  %v567 = vunpack.c.l.b16 %v119
  %v568 = vunpack.c.l.b16 %v120
  %v569 = vunpack.c.l.b16 %v121
  %v570 = vunpack.c.l.b16 %v122
  %v571 = vunpack.c.l.b16 %v123
  %v572 = vunpack.c.l.b16 %v124
  %v573 = vunpack.c.l.b16 %v125
  %v574 = vunpack.c.l.b16 %v126
  %v575 = vunpack.c.l.b16 %v127
  %v576 = vunpack.c.l.b16 %v128
  %v577 = vunpack.c.l.b16 %v129
  %v578 = vunpack.c.l.b16 %v130
  %v579 = vunpack.c.l.b16 %v131
  %v580 = vunpack.c.l.b16 %v132
  %v581 = vunpack.c.l.b16 %v133
  %v582 = vunpack.c.l.b16 %v134
  %v583 = vunpack.c.l.b16 %v135
  %v584 = vunpack.c.l.b16 %v136
  %v585 = vunpack.c.l.b16 %v137
  %v586 = vunpack.c.l.b16 %v138
  %v587 = vunpack.c.l.b16 %v139
  %v588 = vunpack.c.l.b16 %v140
  %v589 = vunpack.c.l.b16 %v141
  %v590 = vunpack.c.l.b16 %v142
  %v591 = vunpack.c.l.b16 %v143
  %v592 = vunpack.c.l.b16 %v144
  %v593 = vunpack.c.l.b16 %v145
  %v594 = vunpack.c.l.b16 %v146
  %v595 = vunpack.c.l.b16 %v147
  %v596 = vunpack.c.l.b16 %v148
  %v597 = vunpack.c.l.b16 %v149
  %v598 = vunpack.c.l.b16 %v150
  %v599 = vunpack.c.l.b16 %v151
  %v600 = vunpack.c.l.b16 %v152
  %v601 = vunpack.c.l.b16 %v153
  %v602 = vunpack.c.l.b16 %v154
  %v603 = vunpack.c.l.b16 %v155
  %v604 = vunpack.c.l.b16 %v156
  %v605 = vunpack.c.l.b16 %v157
  %v606 = vunpack.c.l.b16 %v158
  %v607 = vunpack.c.l.b16 %v159
  %v608 = vunpack.c.l.b16 %v160
  %v609 = vunpack.c.l.b16 %v161
  %v610 = vunpack.c.l.b16 %v162
  %v611 = vunpack.c.l.b16 %v163
  %v612 = vunpack.c.l.b16 %v164
  %v613 = vunpack.c.l.b16 %v165
  %v614 = vunpack.c.l.b16 %v166
  %v615 = vunpack.c.l.b16 %v167
  %v616 = vunpack.c.l.b16 %v168
  %v617 = vunpack.c.l.b16 %v169
  %v618 = vunpack.c.l.b16 %v170
  %v619 = vunpack.c.l.b16 %v171
  %v620 = vunpack.c.l.b16 %v172
  %v621 = vunpack.c.l.b16 %v173
  %v622 = vunpack.c.l.b16 %v174
  %v623 = vunpack.c.l.b16 %v175
  %v624 = vunpack.c.l.b16 %v176
  %v625 = vunpack.c.l.b16 %v177
  %v626 = vpack.c.b16 %v499, %v498
  %v627 = vpack.c.b16 %v501, %v500
  %v628 = vpack.c.b16 %v503, %v502
  %v629 = vpack.c.b16 %v505, %v504
  %v630 = vpack.c.b16 %v507, %v506
  %v631 = vpack.c.b16 %v509, %v508
  %v632 = vpack.c.b16 %v511, %v510
  %v633 = vpack.c.b16 %v513, %v512
  %v634 = vpack.c.b16 %v515, %v514
  %v635 = vpack.c.b16 %v517, %v516
  %v636 = vpack.c.b16 %v519, %v518
  %v637 = vpack.c.b16 %v521, %v520
  %v638 = vpack.c.b16 %v523, %v522
  %v639 = vpack.c.b16 %v525, %v524
  %v640 = vpack.c.b16 %v527, %v526
  %v641 = vpack.c.b16 %v529, %v528
  %v642 = vpack.c.b16 %v531, %v530
  %v643 = vpack.c.b16 %v533, %v532
  %v644 = vpack.c.b16 %v535, %v534
  %v645 = vpack.c.b16 %v537, %v536
  %v646 = vpack.c.b16 %v539, %v538
  %v647 = vpack.c.b16 %v541, %v540
  %v648 = vpack.c.b16 %v543, %v542
  %v649 = vpack.c.b16 %v545, %v544
  %v650 = vpack.c.b16 %v547, %v546
  %v651 = vpack.c.b16 %v549, %v548
  %v652 = vpack.c.b16 %v551, %v550
  %v653 = vpack.c.b16 %v553, %v552
  %v654 = vpack.c.b16 %v555, %v554
  %v655 = vpack.c.b16 %v557, %v556
  %v656 = vpack.c.b16 %v559, %v558
  %v657 = vpack.c.b16 %v561, %v560
  %v658 = vpack.c.b16 %v563, %v562
  %v659 = vpack.c.b16 %v565, %v564
  %v660 = vpack.c.b16 %v567, %v566
  %v661 = vpack.c.b16 %v569, %v568
  %v662 = vpack.c.b16 %v571, %v570
  %v663 = vpack.c.b16 %v573, %v572
  %v664 = vpack.c.b16 %v575, %v574
  %v665 = vpack.c.b16 %v577, %v576
  %v666 = vpack.c.b16 %v579, %v578
  %v667 = vpack.c.b16 %v581, %v580
  %v668 = vpack.c.b16 %v583, %v582
  %v669 = vpack.c.b16 %v585, %v584
  %v670 = vpack.c.b16 %v587, %v586
  %v671 = vpack.c.b16 %v589, %v588
  %v672 = vpack.c.b16 %v591, %v590
  %v673 = vpack.c.b16 %v593, %v592
  %v674 = vpack.c.b16 %v595, %v594
  %v675 = vpack.c.b16 %v597, %v596
  %v676 = vpack.c.b16 %v599, %v598
  %v677 = vpack.c.b16 %v601, %v600
  %v678 = vpack.c.b16 %v603, %v602
  %v679 = vpack.c.b16 %v605, %v604
  %v680 = vpack.c.b16 %v607, %v606
  %v681 = vpack.c.b16 %v609, %v608
  %v682 = vpack.c.b16 %v611, %v610
  %v683 = vpack.c.b16 %v613, %v612
  %v684 = vpack.c.b16 %v615, %v614
  %v685 = vpack.c.b16 %v617, %v616
  %v686 = vpack.c.b16 %v619, %v618
  %v687 = vpack.c.b16 %v621, %v620
  %v688 = vpack.c.b16 %v623, %v622
  %v689 = vpack.c.b16 %v625, %v624
  %754 = vmatpush.bf16.msra.mxu0 %v633
  %755 = vmatpush.bf16.msra.mxu0 %v632
  %756 = vmatpush.bf16.msra.mxu0 %v631
  %757 = vmatpush.bf16.msra.mxu0 %v630
  %758 = vmatpush.bf16.msra.mxu0 %v629
  %759 = vmatpush.bf16.msra.mxu0 %v628
  %760 = vmatpush.bf16.msra.mxu0 %v627
  %761 = vmatpush.bf16.msra.mxu0 %v626
  %762 = vmatmul.bf16.gmra.mxu0 %v290
  %v763 = vpop.f32.mrf.mxu0
  %v764 = vadd.f32 %v180, %v763
  %v765 = vpop.f32.mrf.mxu0
  %v766 = vadd.f32 %v180, %v765
  %767 = vmatmul.bf16.gmra.mxu0 %v298
  %v768 = vpop.f32.mrf.mxu0
  %v769 = vadd.f32 %v180, %v768
  %v770 = vpop.f32.mrf.mxu0
  %v771 = vadd.f32 %v180, %v770
  %772 = vmatmul.bf16.gmra.mxu0 %v306
  %v773 = vpop.f32.mrf.mxu0
  %v774 = vadd.f32 %v180, %v773
  %v775 = vpop.f32.mrf.mxu0
  %v776 = vadd.f32 %v180, %v775
  %777 = vmatmul.bf16.gmra.mxu0 %v314
  %v778 = vpop.f32.mrf.mxu0
  %v779 = vadd.f32 %v180, %v778
  %v780 = vpop.f32.mrf.mxu0
  %v781 = vadd.f32 %v180, %v780
  %782 = vmatmul.bf16.gmra.mxu0 %v322
  %v783 = vpop.f32.mrf.mxu0
  %v784 = vadd.f32 %v180, %v783
  %v785 = vpop.f32.mrf.mxu0
  %786 = vdwg.mxu0
  %787 = vmatpush.bf16.msra.mxu0 %v641
  %788 = vmatpush.bf16.msra.mxu0 %v640
  %789 = vmatpush.bf16.msra.mxu0 %v639
  %790 = vmatpush.bf16.msra.mxu0 %v638
  %791 = vmatpush.bf16.msra.mxu0 %v637
  %792 = vmatpush.bf16.msra.mxu0 %v636
  %793 = vmatpush.bf16.msra.mxu0 %v635
  %794 = vmatpush.bf16.msra.mxu0 %v634
  %795 = vmatmul.bf16.gmra.mxu0 %v291
  %v796 = vpop.f32.mrf.mxu0
  %v797 = vadd.f32 %v764, %v796
  %v798 = vpop.f32.mrf.mxu0
  %v799 = vadd.f32 %v766, %v798
  %800 = vmatmul.bf16.gmra.mxu0 %v299
  %v801 = vpop.f32.mrf.mxu0
  %v802 = vadd.f32 %v769, %v801
  %v803 = vpop.f32.mrf.mxu0
  %v804 = vadd.f32 %v771, %v803
  %805 = vmatmul.bf16.gmra.mxu0 %v307
  %v806 = vpop.f32.mrf.mxu0
  %v807 = vadd.f32 %v774, %v806
  %v808 = vpop.f32.mrf.mxu0
  %v809 = vadd.f32 %v776, %v808
  %810 = vmatmul.bf16.gmra.mxu0 %v315
  %v811 = vpop.f32.mrf.mxu0
  %v812 = vadd.f32 %v779, %v811
  %v813 = vpop.f32.mrf.mxu0
  %v814 = vadd.f32 %v781, %v813
  %815 = vmatmul.bf16.gmra.mxu0 %v323
  %v816 = vpop.f32.mrf.mxu0
  %v817 = vadd.f32 %v784, %v816
  %v818 = vpop.f32.mrf.mxu0
  %819 = vdwg.mxu0
  %820 = vmatpush.bf16.msra.mxu0 %v649
  %821 = vmatpush.bf16.msra.mxu0 %v648
  %822 = vmatpush.bf16.msra.mxu0 %v647
  %823 = vmatpush.bf16.msra.mxu0 %v646
  %824 = vmatpush.bf16.msra.mxu0 %v645
  %825 = vmatpush.bf16.msra.mxu0 %v644
  %826 = vmatpush.bf16.msra.mxu0 %v643
  %827 = vmatpush.bf16.msra.mxu0 %v642
  %828 = vmatmul.bf16.gmra.mxu0 %v292
  %v829 = vpop.f32.mrf.mxu0
  %v830 = vadd.f32 %v797, %v829
  %v831 = vpop.f32.mrf.mxu0
  %v832 = vadd.f32 %v799, %v831
  %833 = vmatmul.bf16.gmra.mxu0 %v300
  %v834 = vpop.f32.mrf.mxu0
  %v835 = vadd.f32 %v802, %v834
  %v836 = vpop.f32.mrf.mxu0
  %v837 = vadd.f32 %v804, %v836
  %838 = vmatmul.bf16.gmra.mxu0 %v308
  %v839 = vpop.f32.mrf.mxu0
  %v840 = vadd.f32 %v807, %v839
  %v841 = vpop.f32.mrf.mxu0
  %v842 = vadd.f32 %v809, %v841
  %843 = vmatmul.bf16.gmra.mxu0 %v316
  %v844 = vpop.f32.mrf.mxu0
  %v845 = vadd.f32 %v812, %v844
  %v846 = vpop.f32.mrf.mxu0
  %v847 = vadd.f32 %v814, %v846
  %848 = vmatmul.bf16.gmra.mxu0 %v324
  %v849 = vpop.f32.mrf.mxu0
  %v850 = vadd.f32 %v817, %v849
  %v851 = vpop.f32.mrf.mxu0
  %852 = vdwg.mxu0
  %853 = vmatpush.bf16.msra.mxu0 %v657
  %854 = vmatpush.bf16.msra.mxu0 %v656
  %855 = vmatpush.bf16.msra.mxu0 %v655
  %856 = vmatpush.bf16.msra.mxu0 %v654
  %857 = vmatpush.bf16.msra.mxu0 %v653
  %858 = vmatpush.bf16.msra.mxu0 %v652
  %859 = vmatpush.bf16.msra.mxu0 %v651
  %860 = vmatpush.bf16.msra.mxu0 %v650
  %861 = vmatmul.bf16.gmra.mxu0 %v293
  %v862 = vpop.f32.mrf.mxu0
  %v863 = vadd.f32 %v830, %v862
  %v864 = vpop.f32.mrf.mxu0
  %v865 = vadd.f32 %v832, %v864
  %866 = vmatmul.bf16.gmra.mxu0 %v301
  %v867 = vpop.f32.mrf.mxu0
  %v868 = vadd.f32 %v835, %v867
  %v869 = vpop.f32.mrf.mxu0
  %v870 = vadd.f32 %v837, %v869
  %871 = vmatmul.bf16.gmra.mxu0 %v309
  %v872 = vpop.f32.mrf.mxu0
  %v873 = vadd.f32 %v840, %v872
  %v874 = vpop.f32.mrf.mxu0
  %v875 = vadd.f32 %v842, %v874
  %876 = vmatmul.bf16.gmra.mxu0 %v317
  %v877 = vpop.f32.mrf.mxu0
  %v878 = vadd.f32 %v845, %v877
  %v879 = vpop.f32.mrf.mxu0
  %v880 = vadd.f32 %v847, %v879
  %881 = vmatmul.bf16.gmra.mxu0 %v325
  %v882 = vpop.f32.mrf.mxu0
  %v883 = vadd.f32 %v850, %v882
  %v884 = vpop.f32.mrf.mxu0
  %885 = vdwg.mxu0
  %886 = vmatpush.bf16.msra.mxu0 %v665
  %887 = vmatpush.bf16.msra.mxu0 %v664
  %888 = vmatpush.bf16.msra.mxu0 %v663
  %889 = vmatpush.bf16.msra.mxu0 %v662
  %890 = vmatpush.bf16.msra.mxu0 %v661
  %891 = vmatpush.bf16.msra.mxu0 %v660
  %892 = vmatpush.bf16.msra.mxu0 %v659
  %893 = vmatpush.bf16.msra.mxu0 %v658
  %894 = vmatmul.bf16.gmra.mxu0 %v294
  %v895 = vpop.f32.mrf.mxu0
  %v896 = vadd.f32 %v863, %v895
  %v897 = vpop.f32.mrf.mxu0
  %v898 = vadd.f32 %v865, %v897
  %899 = vmatmul.bf16.gmra.mxu0 %v302
  %v900 = vpop.f32.mrf.mxu0
  %v901 = vadd.f32 %v868, %v900
  %v902 = vpop.f32.mrf.mxu0
  %v903 = vadd.f32 %v870, %v902
  %904 = vmatmul.bf16.gmra.mxu0 %v310
  %v905 = vpop.f32.mrf.mxu0
  %v906 = vadd.f32 %v873, %v905
  %v907 = vpop.f32.mrf.mxu0
  %v908 = vadd.f32 %v875, %v907
  %909 = vmatmul.bf16.gmra.mxu0 %v318
  %v910 = vpop.f32.mrf.mxu0
  %v911 = vadd.f32 %v878, %v910
  %v912 = vpop.f32.mrf.mxu0
  %v913 = vadd.f32 %v880, %v912
  %914 = vmatmul.bf16.gmra.mxu0 %v326
  %v915 = vpop.f32.mrf.mxu0
  %v916 = vadd.f32 %v883, %v915
  %v917 = vpop.f32.mrf.mxu0
  %918 = vdwg.mxu0
  %919 = vmatpush.bf16.msra.mxu0 %v673
  %920 = vmatpush.bf16.msra.mxu0 %v672
  %921 = vmatpush.bf16.msra.mxu0 %v671
  %922 = vmatpush.bf16.msra.mxu0 %v670
  %923 = vmatpush.bf16.msra.mxu0 %v669
  %924 = vmatpush.bf16.msra.mxu0 %v668
  %925 = vmatpush.bf16.msra.mxu0 %v667
  %926 = vmatpush.bf16.msra.mxu0 %v666
  %927 = vmatmul.bf16.gmra.mxu0 %v295
  %v928 = vpop.f32.mrf.mxu0
  %v929 = vadd.f32 %v896, %v928
  %v930 = vpop.f32.mrf.mxu0
  %v931 = vadd.f32 %v898, %v930
  %932 = vmatmul.bf16.gmra.mxu0 %v303
  %v933 = vpop.f32.mrf.mxu0
  %v934 = vadd.f32 %v901, %v933
  %v935 = vpop.f32.mrf.mxu0
  %v936 = vadd.f32 %v903, %v935
  %937 = vmatmul.bf16.gmra.mxu0 %v311
  %v938 = vpop.f32.mrf.mxu0
  %v939 = vadd.f32 %v906, %v938
  %v940 = vpop.f32.mrf.mxu0
  %v941 = vadd.f32 %v908, %v940
  %942 = vmatmul.bf16.gmra.mxu0 %v319
  %v943 = vpop.f32.mrf.mxu0
  %v944 = vadd.f32 %v911, %v943
  %v945 = vpop.f32.mrf.mxu0
  %v946 = vadd.f32 %v913, %v945
  %947 = vmatmul.bf16.gmra.mxu0 %v327
  %v948 = vpop.f32.mrf.mxu0
  %v949 = vadd.f32 %v916, %v948
  %v950 = vpop.f32.mrf.mxu0
  %951 = vdwg.mxu0
  %952 = vmatpush.bf16.msra.mxu0 %v681
  %953 = vmatpush.bf16.msra.mxu0 %v680
  %954 = vmatpush.bf16.msra.mxu0 %v679
  %955 = vmatpush.bf16.msra.mxu0 %v678
  %956 = vmatpush.bf16.msra.mxu0 %v677
  %957 = vmatpush.bf16.msra.mxu0 %v676
  %958 = vmatpush.bf16.msra.mxu0 %v675
  %959 = vmatpush.bf16.msra.mxu0 %v674
  %960 = vmatmul.bf16.gmra.mxu0 %v296
  %v961 = vpop.f32.mrf.mxu0
  %v962 = vadd.f32 %v929, %v961
  %v963 = vpop.f32.mrf.mxu0
  %v964 = vadd.f32 %v931, %v963
  %965 = vmatmul.bf16.gmra.mxu0 %v304
  %v966 = vpop.f32.mrf.mxu0
  %v967 = vadd.f32 %v934, %v966
  %v968 = vpop.f32.mrf.mxu0
  %v969 = vadd.f32 %v936, %v968
  %970 = vmatmul.bf16.gmra.mxu0 %v312
  %v971 = vpop.f32.mrf.mxu0
  %v972 = vadd.f32 %v939, %v971
  %v973 = vpop.f32.mrf.mxu0
  %v974 = vadd.f32 %v941, %v973
  %975 = vmatmul.bf16.gmra.mxu0 %v320
  %v976 = vpop.f32.mrf.mxu0
  %v977 = vadd.f32 %v944, %v976
  %v978 = vpop.f32.mrf.mxu0
  %v979 = vadd.f32 %v946, %v978
  %980 = vmatmul.bf16.gmra.mxu0 %v328
  %v981 = vpop.f32.mrf.mxu0
  %v982 = vadd.f32 %v949, %v981
  %v983 = vpop.f32.mrf.mxu0
  %984 = vdwg.mxu0
  %985 = vmatpush.bf16.msra.mxu0 %v689
  %986 = vmatpush.bf16.msra.mxu0 %v688
  %987 = vmatpush.bf16.msra.mxu0 %v687
  %988 = vmatpush.bf16.msra.mxu0 %v686
  %989 = vmatpush.bf16.msra.mxu0 %v685
  %990 = vmatpush.bf16.msra.mxu0 %v684
  %991 = vmatpush.bf16.msra.mxu0 %v683
  %992 = vmatpush.bf16.msra.mxu0 %v682
  %993 = vmatmul.bf16.gmra.mxu0 %v297
  %v994 = vpop.f32.mrf.mxu0
  %v995 = vadd.f32 %v962, %v994
  %v996 = vpop.f32.mrf.mxu0
  %v997 = vadd.f32 %v964, %v996
  %998 = vmatmul.bf16.gmra.mxu0 %v305
  %v999 = vpop.f32.mrf.mxu0
  %v1000 = vadd.f32 %v967, %v999
  %v1001 = vpop.f32.mrf.mxu0
  %v1002 = vadd.f32 %v969, %v1001
  %1003 = vmatmul.bf16.gmra.mxu0 %v313
  %v1004 = vpop.f32.mrf.mxu0
  %v1005 = vadd.f32 %v972, %v1004
  %v1006 = vpop.f32.mrf.mxu0
  %v1007 = vadd.f32 %v974, %v1006
  %1008 = vmatmul.bf16.gmra.mxu0 %v321
  %v1009 = vpop.f32.mrf.mxu0
  %v1010 = vadd.f32 %v977, %v1009
  %v1011 = vpop.f32.mrf.mxu0
  %v1012 = vadd.f32 %v979, %v1011
  %1013 = vmatmul.bf16.gmra.mxu0 %v329
  %v1014 = vpop.f32.mrf.mxu0
  %v1015 = vadd.f32 %v982, %v1014
  %v1016 = vpop.f32.mrf.mxu0
  %1017 = vdwg.mxu0
  %v1018 = vmax.f32 %v995, 0.0
  %v1019 = vmax.f32 %v997, 0.0
  %v1020 = vmax.f32 %v1000, 0.0
  %v1021 = vmax.f32 %v1002, 0.0
  %v1022 = vmax.f32 %v1005, 0.0
  %v1023 = vmax.f32 %v1007, 0.0
  %v1024 = vmax.f32 %v1010, 0.0
  %v1025 = vmax.f32 %v1012, 0.0
  %v1026 = vmax.f32 %v1015, 0.0
  %v1027 = vpack.c.bf16 %v1018, %v1018
  %v1028 = vpack.c.bf16 %v1019, %v1019
  %v1029 = vpack.c.bf16 %v1020, %v1020
  %v1030 = vpack.c.bf16 %v1021, %v1021
  %v1031 = vpack.c.bf16 %v1022, %v1022
  %v1032 = vpack.c.bf16 %v1023, %v1023
  %v1033 = vpack.c.bf16 %v1024, %v1024
  %v1034 = vpack.c.bf16 %v1025, %v1025
  %v1035 = vpack.c.bf16 %v1026, %v1026
  %1036 = vst [vmem:[%s3] sm:$0xf] %v1027
  %1037 = vst [vmem:[%s3 + $0x4] sm:$0xf] %v1028
  %1038 = vst [vmem:[%s3 + $0x8] sm:$0xf] %v1029
  %1039 = vst [vmem:[%s3 + $0xc] sm:$0xf] %v1030
  %1040 = vst [vmem:[%s3 + $0x10] sm:$0xf] %v1031
  %1041 = vst [vmem:[%s3 + $0x14] sm:$0xf] %v1032
  %1042 = vst [vmem:[%s3 + $0x18] sm:$0xf] %v1033
  %1043 = vst [vmem:[%s3 + $0x1c] sm:$0xf] %v1034
  %1044 = vst [vmem:[%s3 + $0x20] sm:$0xf] %v1035
  // Predicated region
  $region14: #{flatten_mlp_img_forward.5} parent=0 // pred_check
    _
  $region15: #{flatten_mlp_img_forward.5} parent=0 // pred_check_branch
    %1046 = sbr.rel (0) target = $region17
  $region16: #{flatten_mlp_img_forward.5} parent=0 // pred_region
    _
  $region17: #{flatten_mlp_img_forward.5} parent=0 // pred_fallthru
    _
  // Predicated region
  $region18: #{flatten_mlp_img_forward.5} parent=0 // pred_check
    _
  $region19: #{flatten_mlp_img_forward.5} parent=0 // pred_check_branch
    %1048 = sbr.rel (0) target = $region21
  $region20: #{flatten_mlp_img_forward.5} parent=0 // pred_region
    _
  $region21: #{flatten_mlp_img_forward.5} parent=0 // pred_fallthru
    _

// kernel: flatten_mlp_img_forward.6
$region0: #{flatten_mlp_img_forward.6}
  #allocation0 [shape = 'u32[]', space=smem, size = 0x4, offset = 0x4, fixed_abs, tag = 'smem constant byte address 0x4 - core index']
  #allocation1 [shape = 'u32[72,128]{1,0:T(1,128)}', space=vmem, size = 0x9000, scoped, tag = 'internal scratch']
  %s0 = inlined_call_operand.vmem [shape: bf16[32,1152], index: 0, kind: input, shape index: {}]
  %s1 = inlined_call_operand.vmem [shape: bf16[1152,128], index: 1, kind: input, shape index: {}]
  %s2 = inlined_call_operand.vmem [shape: f32[1,128], index: 2, kind: input, shape index: {}]
  %s3 = inlined_call_operand.vmem [shape: bf16[32,128], index: 3, kind: output, shape index: {}]
  %s4 = sld [smem:[#allocation0]]
  $region22: #{flatten_mlp_img_forward.6} parent=0
    _
  %s6 = ssub.s32 1, %s4
  %s7 = scalar_select 0, %s6, %s4
  // Predicated region
  $region2: #{flatten_mlp_img_forward.6} parent=0 // pred_check
    _
  $region3: #{flatten_mlp_img_forward.6} parent=0 // pred_check_branch
    %9 = sbr.rel (0) target = $region5
  $region4: #{flatten_mlp_img_forward.6} parent=0 // pred_region
    _
  $region5: #{flatten_mlp_img_forward.6} parent=0 // pred_fallthru
    _
  // Predicated region
  $region6: #{flatten_mlp_img_forward.6} parent=0 // pred_check
    _
  $region7: #{flatten_mlp_img_forward.6} parent=0 // pred_check_branch
    %11 = sbr.rel (0) target = $region9
  $region8: #{flatten_mlp_img_forward.6} parent=0 // pred_region
    _
  $region9: #{flatten_mlp_img_forward.6} parent=0 // pred_fallthru
    _
  // Predicated region
  $region10: #{flatten_mlp_img_forward.6} parent=0 // pred_check
    _
  $region11: #{flatten_mlp_img_forward.6} parent=0 // pred_check_branch
    %13 = sbr.rel (0) target = $region13
  $region12: #{flatten_mlp_img_forward.6} parent=0 // pred_region
    _
  $region13: #{flatten_mlp_img_forward.6} parent=0 // pred_fallthru
    _
  %v14 = vld [vmem:[%s0] sm:$0xff]
  %v15 = vld [vmem:[%s0 + $0x8] sm:$0xff]
  %v16 = vld [vmem:[%s0 + $0x10] sm:$0xff]
  %v17 = vld [vmem:[%s0 + $0x18] sm:$0xff]
  %v18 = vld [vmem:[%s0 + $0x20] sm:$0xf]
  %v19 = vld [vmem:[%s0 + $0x24] sm:$0xff]
  %v20 = vld [vmem:[%s0 + $0x2c] sm:$0xff]
  %v21 = vld [vmem:[%s0 + $0x34] sm:$0xff]
  %v22 = vld [vmem:[%s0 + $0x3c] sm:$0xff]
  %v23 = vld [vmem:[%s0 + $0x44] sm:$0xf]
  %v24 = vld [vmem:[%s0 + $0x48] sm:$0xff]
  %v25 = vld [vmem:[%s0 + $0x50] sm:$0xff]
  %v26 = vld [vmem:[%s0 + $0x58] sm:$0xff]
  %v27 = vld [vmem:[%s0 + $0x60] sm:$0xff]
  %v28 = vld [vmem:[%s0 + $0x68] sm:$0xf]
  %v29 = vld [vmem:[%s0 + $0x6c] sm:$0xff]
  %v30 = vld [vmem:[%s0 + $0x74] sm:$0xff]
  %v31 = vld [vmem:[%s0 + $0x7c] sm:$0xff]
  %v32 = vld [vmem:[%s0 + $0x84] sm:$0xff]
  %v33 = vld [vmem:[%s0 + $0x8c] sm:$0xf]
  %v34 = vld [vmem:[%s1] sm:$0xf]
  %v35 = vld [vmem:[%s1 + $0x4] sm:$0xf]
  %v36 = vld [vmem:[%s1 + $0x8] sm:$0xf]
  %v37 = vld [vmem:[%s1 + $0xc] sm:$0xf]
  %v38 = vld [vmem:[%s1 + $0x10] sm:$0xf]
  %v39 = vld [vmem:[%s1 + $0x14] sm:$0xf]
  %v40 = vld [vmem:[%s1 + $0x18] sm:$0xf]
  %v41 = vld [vmem:[%s1 + $0x1c] sm:$0xf]
  %v42 = vld [vmem:[%s1 + $0x20] sm:$0xf]
  %v43 = vld [vmem:[%s1 + $0x24] sm:$0xf]
  %v44 = vld [vmem:[%s1 + $0x28] sm:$0xf]
  %v45 = vld [vmem:[%s1 + $0x2c] sm:$0xf]
  %v46 = vld [vmem:[%s1 + $0x30] sm:$0xf]
  %v47 = vld [vmem:[%s1 + $0x34] sm:$0xf]
  %v48 = vld [vmem:[%s1 + $0x38] sm:$0xf]
  %v49 = vld [vmem:[%s1 + $0x3c] sm:$0xf]
  %v50 = vld [vmem:[%s1 + $0x40] sm:$0xf]
  %v51 = vld [vmem:[%s1 + $0x44] sm:$0xf]
  %v52 = vld [vmem:[%s1 + $0x48] sm:$0xf]
  %v53 = vld [vmem:[%s1 + $0x4c] sm:$0xf]
  %v54 = vld [vmem:[%s1 + $0x50] sm:$0xf]
  %v55 = vld [vmem:[%s1 + $0x54] sm:$0xf]
  %v56 = vld [vmem:[%s1 + $0x58] sm:$0xf]
  %v57 = vld [vmem:[%s1 + $0x5c] sm:$0xf]
  %v58 = vld [vmem:[%s1 + $0x60] sm:$0xf]
  %v59 = vld [vmem:[%s1 + $0x64] sm:$0xf]
  %v60 = vld [vmem:[%s1 + $0x68] sm:$0xf]
  %v61 = vld [vmem:[%s1 + $0x6c] sm:$0xf]
  %v62 = vld [vmem:[%s1 + $0x70] sm:$0xf]
  %v63 = vld [vmem:[%s1 + $0x74] sm:$0xf]
  %v64 = vld [vmem:[%s1 + $0x78] sm:$0xf]
  %v65 = vld [vmem:[%s1 + $0x7c] sm:$0xf]
  %v66 = vld [vmem:[%s1 + $0x80] sm:$0xf]
  %v67 = vld [vmem:[%s1 + $0x84] sm:$0xf]
  %v68 = vld [vmem:[%s1 + $0x88] sm:$0xf]
  %v69 = vld [vmem:[%s1 + $0x8c] sm:$0xf]
  %v70 = vld [vmem:[%s1 + $0x90] sm:$0xf]
  %v71 = vld [vmem:[%s1 + $0x94] sm:$0xf]
  %v72 = vld [vmem:[%s1 + $0x98] sm:$0xf]
  %v73 = vld [vmem:[%s1 + $0x9c] sm:$0xf]
  %v74 = vld [vmem:[%s1 + $0xa0] sm:$0xf]
  %v75 = vld [vmem:[%s1 + $0xa4] sm:$0xf]
  %v76 = vld [vmem:[%s1 + $0xa8] sm:$0xf]
  %v77 = vld [vmem:[%s1 + $0xac] sm:$0xf]
  %v78 = vld [vmem:[%s1 + $0xb0] sm:$0xf]
  %v79 = vld [vmem:[%s1 + $0xb4] sm:$0xf]
  %v80 = vld [vmem:[%s1 + $0xb8] sm:$0xf]
  %v81 = vld [vmem:[%s1 + $0xbc] sm:$0xf]
  %v82 = vld [vmem:[%s1 + $0xc0] sm:$0xf]
  %v83 = vld [vmem:[%s1 + $0xc4] sm:$0xf]
  %v84 = vld [vmem:[%s1 + $0xc8] sm:$0xf]
  %v85 = vld [vmem:[%s1 + $0xcc] sm:$0xf]
  %v86 = vld [vmem:[%s1 + $0xd0] sm:$0xf]
  %v87 = vld [vmem:[%s1 + $0xd4] sm:$0xf]
  %v88 = vld [vmem:[%s1 + $0xd8] sm:$0xf]
  %v89 = vld [vmem:[%s1 + $0xdc] sm:$0xf]
  %v90 = vld [vmem:[%s1 + $0xe0] sm:$0xf]
  %v91 = vld [vmem:[%s1 + $0xe4] sm:$0xf]
  %v92 = vld [vmem:[%s1 + $0xe8] sm:$0xf]
  %v93 = vld [vmem:[%s1 + $0xec] sm:$0xf]
  %v94 = vld [vmem:[%s1 + $0xf0] sm:$0xf]
  %v95 = vld [vmem:[%s1 + $0xf4] sm:$0xf]
  %v96 = vld [vmem:[%s1 + $0xf8] sm:$0xf]
  %v97 = vld [vmem:[%s1 + $0xfc] sm:$0xf]
  %v98 = vld [vmem:[%s1 + $0x100] sm:$0xf]
  %v99 = vld [vmem:[%s1 + $0x104] sm:$0xf]
  %v100 = vld [vmem:[%s1 + $0x108] sm:$0xf]
  %v101 = vld [vmem:[%s1 + $0x10c] sm:$0xf]
  %v102 = vld [vmem:[%s1 + $0x110] sm:$0xf]
  %v103 = vld [vmem:[%s1 + $0x114] sm:$0xf]
  %v104 = vld [vmem:[%s1 + $0x118] sm:$0xf]
  %v105 = vld [vmem:[%s1 + $0x11c] sm:$0xf]
  %v106 = vld [vmem:[%s1 + $0x120] sm:$0xf]
  %v107 = vld [vmem:[%s1 + $0x124] sm:$0xf]
  %v108 = vld [vmem:[%s1 + $0x128] sm:$0xf]
  %v109 = vld [vmem:[%s1 + $0x12c] sm:$0xf]
  %v110 = vld [vmem:[%s1 + $0x130] sm:$0xf]
  %v111 = vld [vmem:[%s1 + $0x134] sm:$0xf]
  %v112 = vld [vmem:[%s1 + $0x138] sm:$0xf]
  %v113 = vld [vmem:[%s1 + $0x13c] sm:$0xf]
  %v114 = vld [vmem:[%s1 + $0x140] sm:$0xf]
  %v115 = vld [vmem:[%s1 + $0x144] sm:$0xf]
  %v116 = vld [vmem:[%s1 + $0x148] sm:$0xf]
  %v117 = vld [vmem:[%s1 + $0x14c] sm:$0xf]
  %v118 = vld [vmem:[%s1 + $0x150] sm:$0xf]
  %v119 = vld [vmem:[%s1 + $0x154] sm:$0xf]
  %v120 = vld [vmem:[%s1 + $0x158] sm:$0xf]
  %v121 = vld [vmem:[%s1 + $0x15c] sm:$0xf]
  %v122 = vld [vmem:[%s1 + $0x160] sm:$0xf]
  %v123 = vld [vmem:[%s1 + $0x164] sm:$0xf]
  %v124 = vld [vmem:[%s1 + $0x168] sm:$0xf]
  %v125 = vld [vmem:[%s1 + $0x16c] sm:$0xf]
  %v126 = vld [vmem:[%s1 + $0x170] sm:$0xf]
  %v127 = vld [vmem:[%s1 + $0x174] sm:$0xf]
  %v128 = vld [vmem:[%s1 + $0x178] sm:$0xf]
  %v129 = vld [vmem:[%s1 + $0x17c] sm:$0xf]
  %v130 = vld [vmem:[%s1 + $0x180] sm:$0xf]
  %v131 = vld [vmem:[%s1 + $0x184] sm:$0xf]
  %v132 = vld [vmem:[%s1 + $0x188] sm:$0xf]
  %v133 = vld [vmem:[%s1 + $0x18c] sm:$0xf]
  %v134 = vld [vmem:[%s1 + $0x190] sm:$0xf]
  %v135 = vld [vmem:[%s1 + $0x194] sm:$0xf]
  %v136 = vld [vmem:[%s1 + $0x198] sm:$0xf]
  %v137 = vld [vmem:[%s1 + $0x19c] sm:$0xf]
  %v138 = vld [vmem:[%s1 + $0x1a0] sm:$0xf]
  %v139 = vld [vmem:[%s1 + $0x1a4] sm:$0xf]
  %v140 = vld [vmem:[%s1 + $0x1a8] sm:$0xf]
  %v141 = vld [vmem:[%s1 + $0x1ac] sm:$0xf]
  %v142 = vld [vmem:[%s1 + $0x1b0] sm:$0xf]
  %v143 = vld [vmem:[%s1 + $0x1b4] sm:$0xf]
  %v144 = vld [vmem:[%s1 + $0x1b8] sm:$0xf]
  %v145 = vld [vmem:[%s1 + $0x1bc] sm:$0xf]
  %v146 = vld [vmem:[%s1 + $0x1c0] sm:$0xf]
  %v147 = vld [vmem:[%s1 + $0x1c4] sm:$0xf]
  %v148 = vld [vmem:[%s1 + $0x1c8] sm:$0xf]
  %v149 = vld [vmem:[%s1 + $0x1cc] sm:$0xf]
  %v150 = vld [vmem:[%s1 + $0x1d0] sm:$0xf]
  %v151 = vld [vmem:[%s1 + $0x1d4] sm:$0xf]
  %v152 = vld [vmem:[%s1 + $0x1d8] sm:$0xf]
  %v153 = vld [vmem:[%s1 + $0x1dc] sm:$0xf]
  %v154 = vld [vmem:[%s1 + $0x1e0] sm:$0xf]
  %v155 = vld [vmem:[%s1 + $0x1e4] sm:$0xf]
  %v156 = vld [vmem:[%s1 + $0x1e8] sm:$0xf]
  %v157 = vld [vmem:[%s1 + $0x1ec] sm:$0xf]
  %v158 = vld [vmem:[%s1 + $0x1f0] sm:$0xf]
  %v159 = vld [vmem:[%s1 + $0x1f4] sm:$0xf]
  %v160 = vld [vmem:[%s1 + $0x1f8] sm:$0xf]
  %v161 = vld [vmem:[%s1 + $0x1fc] sm:$0xf]
  %v162 = vld [vmem:[%s1 + $0x200] sm:$0xf]
  %v163 = vld [vmem:[%s1 + $0x204] sm:$0xf]
  %v164 = vld [vmem:[%s1 + $0x208] sm:$0xf]
  %v165 = vld [vmem:[%s1 + $0x20c] sm:$0xf]
  %v166 = vld [vmem:[%s1 + $0x210] sm:$0xf]
  %v167 = vld [vmem:[%s1 + $0x214] sm:$0xf]
  %v168 = vld [vmem:[%s1 + $0x218] sm:$0xf]
  %v169 = vld [vmem:[%s1 + $0x21c] sm:$0xf]
  %v170 = vld [vmem:[%s1 + $0x220] sm:$0xf]
  %v171 = vld [vmem:[%s1 + $0x224] sm:$0xf]
  %v172 = vld [vmem:[%s1 + $0x228] sm:$0xf]
  %v173 = vld [vmem:[%s1 + $0x22c] sm:$0xf]
  %v174 = vld [vmem:[%s1 + $0x230] sm:$0xf]
  %v175 = vld [vmem:[%s1 + $0x234] sm:$0xf]
  %v176 = vld [vmem:[%s1 + $0x238] sm:$0xf]
  %v177 = vld [vmem:[%s1 + $0x23c] sm:$0xf]
  %v178 = vld [vmem:[%s2] sm:$0x1]
  %v180 = vperm.slane %v178, 0
  %v202 = vunpack.c.l.b16 %v14
  %v203 = vunpack.c.h.b16 %v14
  %v204 = vunpack.c.l.b16 %v15
  %v205 = vunpack.c.h.b16 %v15
  %v206 = vunpack.c.l.b16 %v16
  %v207 = vunpack.c.h.b16 %v16
  %v208 = vunpack.c.l.b16 %v17
  %v209 = vunpack.c.h.b16 %v17
  %v210 = vunpack.c.l.b16 %v18
  %v211 = vunpack.c.l.b16 %v19
  %v212 = vunpack.c.h.b16 %v19
  %v213 = vunpack.c.l.b16 %v20
  %v214 = vunpack.c.h.b16 %v20
  %v215 = vunpack.c.l.b16 %v21
  %v216 = vunpack.c.h.b16 %v21
  %v217 = vunpack.c.l.b16 %v22
  %v218 = vunpack.c.h.b16 %v22
  %v219 = vunpack.c.l.b16 %v23
  %v220 = vunpack.c.l.b16 %v24
  %v221 = vunpack.c.h.b16 %v24
  %v222 = vunpack.c.l.b16 %v25
  %v223 = vunpack.c.h.b16 %v25
  %v224 = vunpack.c.l.b16 %v26
  %v225 = vunpack.c.h.b16 %v26
  %v226 = vunpack.c.l.b16 %v27
  %v227 = vunpack.c.h.b16 %v27
  %v228 = vunpack.c.l.b16 %v28
  %v229 = vunpack.c.l.b16 %v29
  %v230 = vunpack.c.h.b16 %v29
  %v231 = vunpack.c.l.b16 %v30
  %v232 = vunpack.c.h.b16 %v30
  %v233 = vunpack.c.l.b16 %v31
  %v234 = vunpack.c.h.b16 %v31
  %v235 = vunpack.c.l.b16 %v32
  %v236 = vunpack.c.h.b16 %v32
  %v237 = vunpack.c.l.b16 %v33
  %v238 = vpack.c.b16 %v211, %v202
  %v239 = vpack.c.b16 %v212, %v203
  %v240 = vpack.c.b16 %v213, %v204
  %v241 = vpack.c.b16 %v214, %v205
  %v242 = vpack.c.b16 %v215, %v206
  %v243 = vpack.c.b16 %v216, %v207
  %v244 = vpack.c.b16 %v217, %v208
  %v245 = vpack.c.b16 %v218, %v209
  %v246 = vpack.c.b16 %v219, %v210
  %v247 = vpack.c.b16 %v229, %v220
  %v248 = vpack.c.b16 %v230, %v221
  %v249 = vpack.c.b16 %v231, %v222
  %v250 = vpack.c.b16 %v232, %v223
  %v251 = vpack.c.b16 %v233, %v224
  %v252 = vpack.c.b16 %v234, %v225
  %v253 = vpack.c.b16 %v235, %v226
  %v254 = vpack.c.b16 %v236, %v227
  %v255 = vpack.c.b16 %v237, %v228
  %v418 = vunpack.c.l.b16 %v34
  %v419 = vunpack.c.l.b16 %v35
  %v420 = vunpack.c.l.b16 %v36
  %v421 = vunpack.c.l.b16 %v37
  %v422 = vunpack.c.l.b16 %v38
  %v423 = vunpack.c.l.b16 %v39
  %v424 = vunpack.c.l.b16 %v40
  %v425 = vunpack.c.l.b16 %v41
  %v426 = vunpack.c.l.b16 %v42
  %v427 = vunpack.c.l.b16 %v43
  %v428 = vunpack.c.l.b16 %v44
  %v429 = vunpack.c.l.b16 %v45
  %v430 = vunpack.c.l.b16 %v46
  %v431 = vunpack.c.l.b16 %v47
  %v432 = vunpack.c.l.b16 %v48
  %v433 = vunpack.c.l.b16 %v49
  %v434 = vunpack.c.l.b16 %v50
  %v435 = vunpack.c.l.b16 %v51
  %v436 = vunpack.c.l.b16 %v52
  %v437 = vunpack.c.l.b16 %v53
  %v438 = vunpack.c.l.b16 %v54
  %v439 = vunpack.c.l.b16 %v55
  %v440 = vunpack.c.l.b16 %v56
  %v441 = vunpack.c.l.b16 %v57
  %v442 = vunpack.c.l.b16 %v58
  %v443 = vunpack.c.l.b16 %v59
  %v444 = vunpack.c.l.b16 %v60
  %v445 = vunpack.c.l.b16 %v61
  %v446 = vunpack.c.l.b16 %v62
  %v447 = vunpack.c.l.b16 %v63
  %v448 = vunpack.c.l.b16 %v64
  %v449 = vunpack.c.l.b16 %v65
  %v450 = vunpack.c.l.b16 %v66
  %v451 = vunpack.c.l.b16 %v67
  %v452 = vunpack.c.l.b16 %v68
  %v453 = vunpack.c.l.b16 %v69
  %v454 = vunpack.c.l.b16 %v70
  %v455 = vunpack.c.l.b16 %v71
  %v456 = vunpack.c.l.b16 %v72
  %v457 = vunpack.c.l.b16 %v73
  %v458 = vunpack.c.l.b16 %v74
  %v459 = vunpack.c.l.b16 %v75
  %v460 = vunpack.c.l.b16 %v76
  %v461 = vunpack.c.l.b16 %v77
  %v462 = vunpack.c.l.b16 %v78
  %v463 = vunpack.c.l.b16 %v79
  %v464 = vunpack.c.l.b16 %v80
  %v465 = vunpack.c.l.b16 %v81
  %v466 = vunpack.c.l.b16 %v82
  %v467 = vunpack.c.l.b16 %v83
  %v468 = vunpack.c.l.b16 %v84
  %v469 = vunpack.c.l.b16 %v85
  %v470 = vunpack.c.l.b16 %v86
  %v471 = vunpack.c.l.b16 %v87
  %v472 = vunpack.c.l.b16 %v88
  %v473 = vunpack.c.l.b16 %v89
  %v474 = vunpack.c.l.b16 %v90
  %v475 = vunpack.c.l.b16 %v91
  %v476 = vunpack.c.l.b16 %v92
  %v477 = vunpack.c.l.b16 %v93
  %v478 = vunpack.c.l.b16 %v94
  %v479 = vunpack.c.l.b16 %v95
  %v480 = vunpack.c.l.b16 %v96
  %v481 = vunpack.c.l.b16 %v97
  %v482 = vunpack.c.l.b16 %v98
  %v483 = vunpack.c.l.b16 %v99
  %v484 = vunpack.c.l.b16 %v100
  %v485 = vunpack.c.l.b16 %v101
  %v486 = vunpack.c.l.b16 %v102
  %v487 = vunpack.c.l.b16 %v103
  %v488 = vunpack.c.l.b16 %v104
  %v489 = vunpack.c.l.b16 %v105
  %v490 = vunpack.c.l.b16 %v106
  %v491 = vunpack.c.l.b16 %v107
  %v492 = vunpack.c.l.b16 %v108
  %v493 = vunpack.c.l.b16 %v109
  %v494 = vunpack.c.l.b16 %v110
  %v495 = vunpack.c.l.b16 %v111
  %v496 = vunpack.c.l.b16 %v112
  %v497 = vunpack.c.l.b16 %v113
  %v498 = vunpack.c.l.b16 %v114
  %v499 = vunpack.c.l.b16 %v115
  %v500 = vunpack.c.l.b16 %v116
  %v501 = vunpack.c.l.b16 %v117
  %v502 = vunpack.c.l.b16 %v118
  %v503 = vunpack.c.l.b16 %v119
  %v504 = vunpack.c.l.b16 %v120
  %v505 = vunpack.c.l.b16 %v121
  %v506 = vunpack.c.l.b16 %v122
  %v507 = vunpack.c.l.b16 %v123
  %v508 = vunpack.c.l.b16 %v124
  %v509 = vunpack.c.l.b16 %v125
  %v510 = vunpack.c.l.b16 %v126
  %v511 = vunpack.c.l.b16 %v127
  %v512 = vunpack.c.l.b16 %v128
  %v513 = vunpack.c.l.b16 %v129
  %v514 = vunpack.c.l.b16 %v130
  %v515 = vunpack.c.l.b16 %v131
  %v516 = vunpack.c.l.b16 %v132
  %v517 = vunpack.c.l.b16 %v133
  %v518 = vunpack.c.l.b16 %v134
  %v519 = vunpack.c.l.b16 %v135
  %v520 = vunpack.c.l.b16 %v136
  %v521 = vunpack.c.l.b16 %v137
  %v522 = vunpack.c.l.b16 %v138
  %v523 = vunpack.c.l.b16 %v139
  %v524 = vunpack.c.l.b16 %v140
  %v525 = vunpack.c.l.b16 %v141
  %v526 = vunpack.c.l.b16 %v142
  %v527 = vunpack.c.l.b16 %v143
  %v528 = vunpack.c.l.b16 %v144
  %v529 = vunpack.c.l.b16 %v145
  %v530 = vunpack.c.l.b16 %v146
  %v531 = vunpack.c.l.b16 %v147
  %v532 = vunpack.c.l.b16 %v148
  %v533 = vunpack.c.l.b16 %v149
  %v534 = vunpack.c.l.b16 %v150
  %v535 = vunpack.c.l.b16 %v151
  %v536 = vunpack.c.l.b16 %v152
  %v537 = vunpack.c.l.b16 %v153
  %v538 = vunpack.c.l.b16 %v154
  %v539 = vunpack.c.l.b16 %v155
  %v540 = vunpack.c.l.b16 %v156
  %v541 = vunpack.c.l.b16 %v157
  %v542 = vunpack.c.l.b16 %v158
  %v543 = vunpack.c.l.b16 %v159
  %v544 = vunpack.c.l.b16 %v160
  %v545 = vunpack.c.l.b16 %v161
  %v546 = vunpack.c.l.b16 %v162
  %v547 = vunpack.c.l.b16 %v163
  %v548 = vunpack.c.l.b16 %v164
  %v549 = vunpack.c.l.b16 %v165
  %v550 = vunpack.c.l.b16 %v166
  %v551 = vunpack.c.l.b16 %v167
  %v552 = vunpack.c.l.b16 %v168
  %v553 = vunpack.c.l.b16 %v169
  %v554 = vunpack.c.l.b16 %v170
  %v555 = vunpack.c.l.b16 %v171
  %v556 = vunpack.c.l.b16 %v172
  %v557 = vunpack.c.l.b16 %v173
  %v558 = vunpack.c.l.b16 %v174
  %v559 = vunpack.c.l.b16 %v175
  %v560 = vunpack.c.l.b16 %v176
  %v561 = vunpack.c.l.b16 %v177
  %v562 = vpack.c.b16 %v419, %v418
  %v563 = vpack.c.b16 %v421, %v420
  %v564 = vpack.c.b16 %v423, %v422
  %v565 = vpack.c.b16 %v425, %v424
  %v566 = vpack.c.b16 %v427, %v426
  %v567 = vpack.c.b16 %v429, %v428
  %v568 = vpack.c.b16 %v431, %v430
  %v569 = vpack.c.b16 %v433, %v432
  %v570 = vpack.c.b16 %v435, %v434
  %v571 = vpack.c.b16 %v437, %v436
  %v572 = vpack.c.b16 %v439, %v438
  %v573 = vpack.c.b16 %v441, %v440
  %v574 = vpack.c.b16 %v443, %v442
  %v575 = vpack.c.b16 %v445, %v444
  %v576 = vpack.c.b16 %v447, %v446
  %v577 = vpack.c.b16 %v449, %v448
  %v578 = vpack.c.b16 %v451, %v450
  %v579 = vpack.c.b16 %v453, %v452
  %v580 = vpack.c.b16 %v455, %v454
  %v581 = vpack.c.b16 %v457, %v456
  %v582 = vpack.c.b16 %v459, %v458
  %v583 = vpack.c.b16 %v461, %v460
  %v584 = vpack.c.b16 %v463, %v462
  %v585 = vpack.c.b16 %v465, %v464
  %v586 = vpack.c.b16 %v467, %v466
  %v587 = vpack.c.b16 %v469, %v468
  %v588 = vpack.c.b16 %v471, %v470
  %v589 = vpack.c.b16 %v473, %v472
  %v590 = vpack.c.b16 %v475, %v474
  %v591 = vpack.c.b16 %v477, %v476
  %v592 = vpack.c.b16 %v479, %v478
  %v593 = vpack.c.b16 %v481, %v480
  %v594 = vpack.c.b16 %v483, %v482
  %v595 = vpack.c.b16 %v485, %v484
  %v596 = vpack.c.b16 %v487, %v486
  %v597 = vpack.c.b16 %v489, %v488
  %v598 = vpack.c.b16 %v491, %v490
  %v599 = vpack.c.b16 %v493, %v492
  %v600 = vpack.c.b16 %v495, %v494
  %v601 = vpack.c.b16 %v497, %v496
  %v602 = vpack.c.b16 %v499, %v498
  %v603 = vpack.c.b16 %v501, %v500
  %v604 = vpack.c.b16 %v503, %v502
  %v605 = vpack.c.b16 %v505, %v504
  %v606 = vpack.c.b16 %v507, %v506
  %v607 = vpack.c.b16 %v509, %v508
  %v608 = vpack.c.b16 %v511, %v510
  %v609 = vpack.c.b16 %v513, %v512
  %v610 = vpack.c.b16 %v515, %v514
  %v611 = vpack.c.b16 %v517, %v516
  %v612 = vpack.c.b16 %v519, %v518
  %v613 = vpack.c.b16 %v521, %v520
  %v614 = vpack.c.b16 %v523, %v522
  %v615 = vpack.c.b16 %v525, %v524
  %v616 = vpack.c.b16 %v527, %v526
  %v617 = vpack.c.b16 %v529, %v528
  %v618 = vpack.c.b16 %v531, %v530
  %v619 = vpack.c.b16 %v533, %v532
  %v620 = vpack.c.b16 %v535, %v534
  %v621 = vpack.c.b16 %v537, %v536
  %v622 = vpack.c.b16 %v539, %v538
  %v623 = vpack.c.b16 %v541, %v540
  %v624 = vpack.c.b16 %v543, %v542
  %v625 = vpack.c.b16 %v545, %v544
  %v626 = vpack.c.b16 %v547, %v546
  %v627 = vpack.c.b16 %v549, %v548
  %v628 = vpack.c.b16 %v551, %v550
  %v629 = vpack.c.b16 %v553, %v552
  %v630 = vpack.c.b16 %v555, %v554
  %v631 = vpack.c.b16 %v557, %v556
  %v632 = vpack.c.b16 %v559, %v558
  %v633 = vpack.c.b16 %v561, %v560
  %706 = vmatpush.bf16.msra.mxu0 %v569
  %707 = vmatpush.bf16.msra.mxu0 %v568
  %708 = vmatpush.bf16.msra.mxu0 %v567
  %709 = vmatpush.bf16.msra.mxu0 %v566
  %710 = vmatpush.bf16.msra.mxu0 %v565
  %711 = vmatpush.bf16.msra.mxu0 %v564
  %712 = vmatpush.bf16.msra.mxu0 %v563
  %713 = vmatpush.bf16.msra.mxu0 %v562
  %714 = vmatmul.bf16.gmra.mxu0 %v238
  %v715 = vpop.f32.mrf.mxu0
  %v716 = vadd.f32 %v180, %v715
  %v717 = vpop.f32.mrf.mxu0
  %v718 = vadd.f32 %v180, %v717
  %719 = vmatmul.bf16.gmra.mxu0 %v247
  %v720 = vpop.f32.mrf.mxu0
  %v721 = vadd.f32 %v180, %v720
  %v722 = vpop.f32.mrf.mxu0
  %v723 = vadd.f32 %v180, %v722
  %724 = vdwg.mxu0
  %725 = vmatpush.bf16.msra.mxu0 %v577
  %726 = vmatpush.bf16.msra.mxu0 %v576
  %727 = vmatpush.bf16.msra.mxu0 %v575
  %728 = vmatpush.bf16.msra.mxu0 %v574
  %729 = vmatpush.bf16.msra.mxu0 %v573
  %730 = vmatpush.bf16.msra.mxu0 %v572
  %731 = vmatpush.bf16.msra.mxu0 %v571
  %732 = vmatpush.bf16.msra.mxu0 %v570
  %733 = vmatmul.bf16.gmra.mxu0 %v239
  %v734 = vpop.f32.mrf.mxu0
  %v735 = vadd.f32 %v716, %v734
  %v736 = vpop.f32.mrf.mxu0
  %v737 = vadd.f32 %v718, %v736
  %738 = vmatmul.bf16.gmra.mxu0 %v248
  %v739 = vpop.f32.mrf.mxu0
  %v740 = vadd.f32 %v721, %v739
  %v741 = vpop.f32.mrf.mxu0
  %v742 = vadd.f32 %v723, %v741
  %743 = vdwg.mxu0
  %744 = vmatpush.bf16.msra.mxu0 %v585
  %745 = vmatpush.bf16.msra.mxu0 %v584
  %746 = vmatpush.bf16.msra.mxu0 %v583
  %747 = vmatpush.bf16.msra.mxu0 %v582
  %748 = vmatpush.bf16.msra.mxu0 %v581
  %749 = vmatpush.bf16.msra.mxu0 %v580
  %750 = vmatpush.bf16.msra.mxu0 %v579
  %751 = vmatpush.bf16.msra.mxu0 %v578
  %752 = vmatmul.bf16.gmra.mxu0 %v240
  %v753 = vpop.f32.mrf.mxu0
  %v754 = vadd.f32 %v735, %v753
  %v755 = vpop.f32.mrf.mxu0
  %v756 = vadd.f32 %v737, %v755
  %757 = vmatmul.bf16.gmra.mxu0 %v249
  %v758 = vpop.f32.mrf.mxu0
  %v759 = vadd.f32 %v740, %v758
  %v760 = vpop.f32.mrf.mxu0
  %v761 = vadd.f32 %v742, %v760
  %762 = vdwg.mxu0
  %763 = vmatpush.bf16.msra.mxu0 %v593
  %764 = vmatpush.bf16.msra.mxu0 %v592
  %765 = vmatpush.bf16.msra.mxu0 %v591
  %766 = vmatpush.bf16.msra.mxu0 %v590
  %767 = vmatpush.bf16.msra.mxu0 %v589
  %768 = vmatpush.bf16.msra.mxu0 %v588
  %769 = vmatpush.bf16.msra.mxu0 %v587
  %770 = vmatpush.bf16.msra.mxu0 %v586
  %771 = vmatmul.bf16.gmra.mxu0 %v241
  %v772 = vpop.f32.mrf.mxu0
  %v773 = vadd.f32 %v754, %v772
  %v774 = vpop.f32.mrf.mxu0
  %v775 = vadd.f32 %v756, %v774
  %776 = vmatmul.bf16.gmra.mxu0 %v250
  %v777 = vpop.f32.mrf.mxu0
  %v778 = vadd.f32 %v759, %v777
  %v779 = vpop.f32.mrf.mxu0
  %v780 = vadd.f32 %v761, %v779
  %781 = vdwg.mxu0
  %782 = vmatpush.bf16.msra.mxu0 %v601
  %783 = vmatpush.bf16.msra.mxu0 %v600
  %784 = vmatpush.bf16.msra.mxu0 %v599
  %785 = vmatpush.bf16.msra.mxu0 %v598
  %786 = vmatpush.bf16.msra.mxu0 %v597
  %787 = vmatpush.bf16.msra.mxu0 %v596
  %788 = vmatpush.bf16.msra.mxu0 %v595
  %789 = vmatpush.bf16.msra.mxu0 %v594
  %790 = vmatmul.bf16.gmra.mxu0 %v242
  %v791 = vpop.f32.mrf.mxu0
  %v792 = vadd.f32 %v773, %v791
  %v793 = vpop.f32.mrf.mxu0
  %v794 = vadd.f32 %v775, %v793
  %795 = vmatmul.bf16.gmra.mxu0 %v251
  %v796 = vpop.f32.mrf.mxu0
  %v797 = vadd.f32 %v778, %v796
  %v798 = vpop.f32.mrf.mxu0
  %v799 = vadd.f32 %v780, %v798
  %800 = vdwg.mxu0
  %801 = vmatpush.bf16.msra.mxu0 %v609
  %802 = vmatpush.bf16.msra.mxu0 %v608
  %803 = vmatpush.bf16.msra.mxu0 %v607
  %804 = vmatpush.bf16.msra.mxu0 %v606
  %805 = vmatpush.bf16.msra.mxu0 %v605
  %806 = vmatpush.bf16.msra.mxu0 %v604
  %807 = vmatpush.bf16.msra.mxu0 %v603
  %808 = vmatpush.bf16.msra.mxu0 %v602
  %809 = vmatmul.bf16.gmra.mxu0 %v243
  %v810 = vpop.f32.mrf.mxu0
  %v811 = vadd.f32 %v792, %v810
  %v812 = vpop.f32.mrf.mxu0
  %v813 = vadd.f32 %v794, %v812
  %814 = vmatmul.bf16.gmra.mxu0 %v252
  %v815 = vpop.f32.mrf.mxu0
  %v816 = vadd.f32 %v797, %v815
  %v817 = vpop.f32.mrf.mxu0
  %v818 = vadd.f32 %v799, %v817
  %819 = vdwg.mxu0
  %820 = vmatpush.bf16.msra.mxu0 %v617
  %821 = vmatpush.bf16.msra.mxu0 %v616
  %822 = vmatpush.bf16.msra.mxu0 %v615
  %823 = vmatpush.bf16.msra.mxu0 %v614
  %824 = vmatpush.bf16.msra.mxu0 %v613
  %825 = vmatpush.bf16.msra.mxu0 %v612
  %826 = vmatpush.bf16.msra.mxu0 %v611
  %827 = vmatpush.bf16.msra.mxu0 %v610
  %828 = vmatmul.bf16.gmra.mxu0 %v244
  %v829 = vpop.f32.mrf.mxu0
  %v830 = vadd.f32 %v811, %v829
  %v831 = vpop.f32.mrf.mxu0
  %v832 = vadd.f32 %v813, %v831
  %833 = vmatmul.bf16.gmra.mxu0 %v253
  %v834 = vpop.f32.mrf.mxu0
  %v835 = vadd.f32 %v816, %v834
  %v836 = vpop.f32.mrf.mxu0
  %v837 = vadd.f32 %v818, %v836
  %838 = vdwg.mxu0
  %839 = vmatpush.bf16.msra.mxu0 %v625
  %840 = vmatpush.bf16.msra.mxu0 %v624
  %841 = vmatpush.bf16.msra.mxu0 %v623
  %842 = vmatpush.bf16.msra.mxu0 %v622
  %843 = vmatpush.bf16.msra.mxu0 %v621
  %844 = vmatpush.bf16.msra.mxu0 %v620
  %845 = vmatpush.bf16.msra.mxu0 %v619
  %846 = vmatpush.bf16.msra.mxu0 %v618
  %847 = vmatmul.bf16.gmra.mxu0 %v245
  %v848 = vpop.f32.mrf.mxu0
  %v849 = vadd.f32 %v830, %v848
  %v850 = vpop.f32.mrf.mxu0
  %v851 = vadd.f32 %v832, %v850
  %852 = vmatmul.bf16.gmra.mxu0 %v254
  %v853 = vpop.f32.mrf.mxu0
  %v854 = vadd.f32 %v835, %v853
  %v855 = vpop.f32.mrf.mxu0
  %v856 = vadd.f32 %v837, %v855
  %857 = vdwg.mxu0
  %858 = vmatpush.bf16.msra.mxu0 %v633
  %859 = vmatpush.bf16.msra.mxu0 %v632
  %860 = vmatpush.bf16.msra.mxu0 %v631
  %861 = vmatpush.bf16.msra.mxu0 %v630
  %862 = vmatpush.bf16.msra.mxu0 %v629
  %863 = vmatpush.bf16.msra.mxu0 %v628
  %864 = vmatpush.bf16.msra.mxu0 %v627
  %865 = vmatpush.bf16.msra.mxu0 %v626
  %866 = vmatmul.bf16.gmra.mxu0 %v246
  %v867 = vpop.f32.mrf.mxu0
  %v868 = vadd.f32 %v849, %v867
  %v869 = vpop.f32.mrf.mxu0
  %v870 = vadd.f32 %v851, %v869
  %871 = vmatmul.bf16.gmra.mxu0 %v255
  %v872 = vpop.f32.mrf.mxu0
  %v873 = vadd.f32 %v854, %v872
  %v874 = vpop.f32.mrf.mxu0
  %v875 = vadd.f32 %v856, %v874
  %876 = vdwg.mxu0
  %v877 = vmax.f32 %v868, 0.0
  %v878 = vmax.f32 %v870, 0.0
  %v879 = vmax.f32 %v873, 0.0
  %v880 = vmax.f32 %v875, 0.0
  %v881 = vpack.c.bf16 %v877, %v877
  %v882 = vpack.c.bf16 %v878, %v878
  %v883 = vpack.c.bf16 %v879, %v879
  %v884 = vpack.c.bf16 %v880, %v880
  %885 = vst [vmem:[%s3] sm:$0xf] %v881
  %886 = vst [vmem:[%s3 + $0x4] sm:$0xf] %v882
  %887 = vst [vmem:[%s3 + $0x8] sm:$0xf] %v883
  %888 = vst [vmem:[%s3 + $0xc] sm:$0xf] %v884
  // Predicated region
  $region14: #{flatten_mlp_img_forward.6} parent=0 // pred_check
    _
  $region15: #{flatten_mlp_img_forward.6} parent=0 // pred_check_branch
    %890 = sbr.rel (0) target = $region17
  $region16: #{flatten_mlp_img_forward.6} parent=0 // pred_region
    _
  $region17: #{flatten_mlp_img_forward.6} parent=0 // pred_fallthru
    _
  // Predicated region
  $region18: #{flatten_mlp_img_forward.6} parent=0 // pred_check
    _
  $region19: #{flatten_mlp_img_forward.6} parent=0 // pred_check_branch
    %892 = sbr.rel (0) target = $region21
  $region20: #{flatten_mlp_img_forward.6} parent=0 // pred_region
    _
  $region21: #{flatten_mlp_img_forward.6} parent=0 // pred_fallthru
    _

// kernel: flatten_mlp_img_forward.7
$region0: #{flatten_mlp_img_forward.7}
  #allocation0 [shape = 'u32[]', space=smem, size = 0x4, offset = 0x4, fixed_abs, tag = 'smem constant byte address 0x4 - core index']
  #allocation1 [shape = 'u32[72,128]{1,0:T(1,128)}', space=vmem, size = 0x9000, scoped, tag = 'internal scratch']
  #allocation2 [shape = 'f32[1]{0:T(128)S(6)}', space=smem, size = 0x200, scoped, tag = 'scoped memory for flatten_mlp_img_forward.7']
  %s0 = inlined_call_operand.vmem [shape: bf16[2,2048], index: 0, kind: input, shape index: {}]
  %s1 = inlined_call_operand.vmem [shape: f32[2,4], index: 1, kind: input, shape index: {}]
  %s2 = inlined_call_operand.vmem [shape: bf16[2048,32], index: 2, kind: input, shape index: {}]
  %s3 = inlined_call_operand.vmem [shape: f32[4,32], index: 3, kind: input, shape index: {}]
  %s4 = inlined_call_operand.vmem [shape: f32[1,32], index: 4, kind: input, shape index: {}]
  %s5 = inlined_call_operand.vmem [shape: bf16[32,32], index: 5, kind: input, shape index: {}]
  %s6 = inlined_call_operand.vmem [shape: f32[1,32], index: 6, kind: input, shape index: {}]
  %s7 = inlined_call_operand.vmem [shape: f32[1,32], index: 7, kind: input, shape index: {}]
  %s8 = inlined_call_operand.<no memory space> [shape: f32[1], index: 8, kind: input, shape index: {}]
  %s9 = inlined_call_operand.vmem [shape: f32[2,1], index: 9, kind: output, shape index: {}]
  %s10 = sld [smem:[#allocation0]]
  $region46: #{flatten_mlp_img_forward.7} parent=0
    _
  %s12 = ssub.s32 1, %s10
  %s13 = scalar_select 0, %s12, %s10
  %14 = sst [smem:[#allocation2]] %s8
  // Predicated region
  $region2: #{flatten_mlp_img_forward.7} parent=0 // pred_check
    _
  $region3: #{flatten_mlp_img_forward.7} parent=0 // pred_check_branch
    %16 = sbr.rel (0) target = $region5
  $region4: #{flatten_mlp_img_forward.7} parent=0 // pred_region
    _
  $region5: #{flatten_mlp_img_forward.7} parent=0 // pred_fallthru
    _
  // Predicated region
  $region6: #{flatten_mlp_img_forward.7} parent=0 // pred_check
    _
  $region7: #{flatten_mlp_img_forward.7} parent=0 // pred_check_branch
    %18 = sbr.rel (0) target = $region9
  $region8: #{flatten_mlp_img_forward.7} parent=0 // pred_region
    _
  $region9: #{flatten_mlp_img_forward.7} parent=0 // pred_fallthru
    _
  // Predicated region
  $region10: #{flatten_mlp_img_forward.7} parent=0 // pred_check
    _
  $region11: #{flatten_mlp_img_forward.7} parent=0 // pred_check_branch
    %20 = sbr.rel (0) target = $region13
  $region12: #{flatten_mlp_img_forward.7} parent=0 // pred_region
    _
  $region13: #{flatten_mlp_img_forward.7} parent=0 // pred_fallthru
    _
  // Predicated region
  $region14: #{flatten_mlp_img_forward.7} parent=0 // pred_check
    _
  $region15: #{flatten_mlp_img_forward.7} parent=0 // pred_check_branch
    %22 = sbr.rel (0) target = $region17
  $region16: #{flatten_mlp_img_forward.7} parent=0 // pred_region
    _
  $region17: #{flatten_mlp_img_forward.7} parent=0 // pred_fallthru
    _
  // Predicated region
  $region18: #{flatten_mlp_img_forward.7} parent=0 // pred_check
    _
  $region19: #{flatten_mlp_img_forward.7} parent=0 // pred_check_branch
    %24 = sbr.rel (0) target = $region21
  $region20: #{flatten_mlp_img_forward.7} parent=0 // pred_region
    _
  $region21: #{flatten_mlp_img_forward.7} parent=0 // pred_fallthru
    _
  // Predicated region
  $region22: #{flatten_mlp_img_forward.7} parent=0 // pred_check
    _
  $region23: #{flatten_mlp_img_forward.7} parent=0 // pred_check_branch
    %26 = sbr.rel (0) target = $region25
  $region24: #{flatten_mlp_img_forward.7} parent=0 // pred_region
    _
  $region25: #{flatten_mlp_img_forward.7} parent=0 // pred_fallthru
    _
  // Predicated region
  $region26: #{flatten_mlp_img_forward.7} parent=0 // pred_check
    _
  $region27: #{flatten_mlp_img_forward.7} parent=0 // pred_check_branch
    %28 = sbr.rel (0) target = $region29
  $region28: #{flatten_mlp_img_forward.7} parent=0 // pred_region
    _
  $region29: #{flatten_mlp_img_forward.7} parent=0 // pred_fallthru
    _
  // Predicated region
  $region30: #{flatten_mlp_img_forward.7} parent=0 // pred_check
    _
  $region31: #{flatten_mlp_img_forward.7} parent=0 // pred_check_branch
    %30 = sbr.rel (0) target = $region33
  $region32: #{flatten_mlp_img_forward.7} parent=0 // pred_region
    _
  $region33: #{flatten_mlp_img_forward.7} parent=0 // pred_fallthru
    _
  // Predicated region
  $region34: #{flatten_mlp_img_forward.7} parent=0 // pred_check
    _
  $region35: #{flatten_mlp_img_forward.7} parent=0 // pred_check_branch
    %32 = sbr.rel (0) target = $region37
  $region36: #{flatten_mlp_img_forward.7} parent=0 // pred_region
    _
  $region37: #{flatten_mlp_img_forward.7} parent=0 // pred_fallthru
    _
  %v34 = vld [vmem:[%s0] sm:$0xff]
  %v35 = vld [vmem:[%s0 + $0x8] sm:$0xff]
  %v36 = vld [vmem:[%s2] sm:$0xf]
  %v37 = vld [vmem:[%s2 + $0x4] sm:$0xf]
  %v38 = vld [vmem:[%s2 + $0x8] sm:$0xf]
  %v39 = vld [vmem:[%s2 + $0xc] sm:$0xf]
  %v40 = vld [vmem:[%s2 + $0x10] sm:$0xf]
  %v41 = vld [vmem:[%s2 + $0x14] sm:$0xf]
  %v42 = vld [vmem:[%s2 + $0x18] sm:$0xf]
  %v43 = vld [vmem:[%s2 + $0x1c] sm:$0xf]
  %v44 = vld [vmem:[%s2 + $0x20] sm:$0xf]
  %v45 = vld [vmem:[%s2 + $0x24] sm:$0xf]
  %v46 = vld [vmem:[%s2 + $0x28] sm:$0xf]
  %v47 = vld [vmem:[%s2 + $0x2c] sm:$0xf]
  %v48 = vld [vmem:[%s2 + $0x30] sm:$0xf]
  %v49 = vld [vmem:[%s2 + $0x34] sm:$0xf]
  %v50 = vld [vmem:[%s2 + $0x38] sm:$0xf]
  %v51 = vld [vmem:[%s2 + $0x3c] sm:$0xf]
  %v52 = vld [vmem:[%s2 + $0x40] sm:$0xf]
  %v53 = vld [vmem:[%s2 + $0x44] sm:$0xf]
  %v54 = vld [vmem:[%s2 + $0x48] sm:$0xf]
  %v55 = vld [vmem:[%s2 + $0x4c] sm:$0xf]
  %v56 = vld [vmem:[%s2 + $0x50] sm:$0xf]
  %v57 = vld [vmem:[%s2 + $0x54] sm:$0xf]
  %v58 = vld [vmem:[%s2 + $0x58] sm:$0xf]
  %v59 = vld [vmem:[%s2 + $0x5c] sm:$0xf]
  %v60 = vld [vmem:[%s2 + $0x60] sm:$0xf]
  %v61 = vld [vmem:[%s2 + $0x64] sm:$0xf]
  %v62 = vld [vmem:[%s2 + $0x68] sm:$0xf]
  %v63 = vld [vmem:[%s2 + $0x6c] sm:$0xf]
  %v64 = vld [vmem:[%s2 + $0x70] sm:$0xf]
  %v65 = vld [vmem:[%s2 + $0x74] sm:$0xf]
  %v66 = vld [vmem:[%s2 + $0x78] sm:$0xf]
  %v67 = vld [vmem:[%s2 + $0x7c] sm:$0xf]
  %v68 = vld [vmem:[%s2 + $0x80] sm:$0xf]
  %v69 = vld [vmem:[%s2 + $0x84] sm:$0xf]
  %v70 = vld [vmem:[%s2 + $0x88] sm:$0xf]
  %v71 = vld [vmem:[%s2 + $0x8c] sm:$0xf]
  %v72 = vld [vmem:[%s2 + $0x90] sm:$0xf]
  %v73 = vld [vmem:[%s2 + $0x94] sm:$0xf]
  %v74 = vld [vmem:[%s2 + $0x98] sm:$0xf]
  %v75 = vld [vmem:[%s2 + $0x9c] sm:$0xf]
  %v76 = vld [vmem:[%s2 + $0xa0] sm:$0xf]
  %v77 = vld [vmem:[%s2 + $0xa4] sm:$0xf]
  %v78 = vld [vmem:[%s2 + $0xa8] sm:$0xf]
  %v79 = vld [vmem:[%s2 + $0xac] sm:$0xf]
  %v80 = vld [vmem:[%s2 + $0xb0] sm:$0xf]
  %v81 = vld [vmem:[%s2 + $0xb4] sm:$0xf]
  %v82 = vld [vmem:[%s2 + $0xb8] sm:$0xf]
  %v83 = vld [vmem:[%s2 + $0xbc] sm:$0xf]
  %v84 = vld [vmem:[%s2 + $0xc0] sm:$0xf]
  %v85 = vld [vmem:[%s2 + $0xc4] sm:$0xf]
  %v86 = vld [vmem:[%s2 + $0xc8] sm:$0xf]
  %v87 = vld [vmem:[%s2 + $0xcc] sm:$0xf]
  %v88 = vld [vmem:[%s2 + $0xd0] sm:$0xf]
  %v89 = vld [vmem:[%s2 + $0xd4] sm:$0xf]
  %v90 = vld [vmem:[%s2 + $0xd8] sm:$0xf]
  %v91 = vld [vmem:[%s2 + $0xdc] sm:$0xf]
  %v92 = vld [vmem:[%s2 + $0xe0] sm:$0xf]
  %v93 = vld [vmem:[%s2 + $0xe4] sm:$0xf]
  %v94 = vld [vmem:[%s2 + $0xe8] sm:$0xf]
  %v95 = vld [vmem:[%s2 + $0xec] sm:$0xf]
  %v96 = vld [vmem:[%s2 + $0xf0] sm:$0xf]
  %v97 = vld [vmem:[%s2 + $0xf4] sm:$0xf]
  %v98 = vld [vmem:[%s2 + $0xf8] sm:$0xf]
  %v99 = vld [vmem:[%s2 + $0xfc] sm:$0xf]
  %v100 = vld [vmem:[%s2 + $0x100] sm:$0xf]
  %v101 = vld [vmem:[%s2 + $0x104] sm:$0xf]
  %v102 = vld [vmem:[%s2 + $0x108] sm:$0xf]
  %v103 = vld [vmem:[%s2 + $0x10c] sm:$0xf]
  %v104 = vld [vmem:[%s2 + $0x110] sm:$0xf]
  %v105 = vld [vmem:[%s2 + $0x114] sm:$0xf]
  %v106 = vld [vmem:[%s2 + $0x118] sm:$0xf]
  %v107 = vld [vmem:[%s2 + $0x11c] sm:$0xf]
  %v108 = vld [vmem:[%s2 + $0x120] sm:$0xf]
  %v109 = vld [vmem:[%s2 + $0x124] sm:$0xf]
  %v110 = vld [vmem:[%s2 + $0x128] sm:$0xf]
  %v111 = vld [vmem:[%s2 + $0x12c] sm:$0xf]
  %v112 = vld [vmem:[%s2 + $0x130] sm:$0xf]
  %v113 = vld [vmem:[%s2 + $0x134] sm:$0xf]
  %v114 = vld [vmem:[%s2 + $0x138] sm:$0xf]
  %v115 = vld [vmem:[%s2 + $0x13c] sm:$0xf]
  %v116 = vld [vmem:[%s2 + $0x140] sm:$0xf]
  %v117 = vld [vmem:[%s2 + $0x144] sm:$0xf]
  %v118 = vld [vmem:[%s2 + $0x148] sm:$0xf]
  %v119 = vld [vmem:[%s2 + $0x14c] sm:$0xf]
  %v120 = vld [vmem:[%s2 + $0x150] sm:$0xf]
  %v121 = vld [vmem:[%s2 + $0x154] sm:$0xf]
  %v122 = vld [vmem:[%s2 + $0x158] sm:$0xf]
  %v123 = vld [vmem:[%s2 + $0x15c] sm:$0xf]
  %v124 = vld [vmem:[%s2 + $0x160] sm:$0xf]
  %v125 = vld [vmem:[%s2 + $0x164] sm:$0xf]
  %v126 = vld [vmem:[%s2 + $0x168] sm:$0xf]
  %v127 = vld [vmem:[%s2 + $0x16c] sm:$0xf]
  %v128 = vld [vmem:[%s2 + $0x170] sm:$0xf]
  %v129 = vld [vmem:[%s2 + $0x174] sm:$0xf]
  %v130 = vld [vmem:[%s2 + $0x178] sm:$0xf]
  %v131 = vld [vmem:[%s2 + $0x17c] sm:$0xf]
  %v132 = vld [vmem:[%s2 + $0x180] sm:$0xf]
  %v133 = vld [vmem:[%s2 + $0x184] sm:$0xf]
  %v134 = vld [vmem:[%s2 + $0x188] sm:$0xf]
  %v135 = vld [vmem:[%s2 + $0x18c] sm:$0xf]
  %v136 = vld [vmem:[%s2 + $0x190] sm:$0xf]
  %v137 = vld [vmem:[%s2 + $0x194] sm:$0xf]
  %v138 = vld [vmem:[%s2 + $0x198] sm:$0xf]
  %v139 = vld [vmem:[%s2 + $0x19c] sm:$0xf]
  %v140 = vld [vmem:[%s2 + $0x1a0] sm:$0xf]
  %v141 = vld [vmem:[%s2 + $0x1a4] sm:$0xf]
  %v142 = vld [vmem:[%s2 + $0x1a8] sm:$0xf]
  %v143 = vld [vmem:[%s2 + $0x1ac] sm:$0xf]
  %v144 = vld [vmem:[%s2 + $0x1b0] sm:$0xf]
  %v145 = vld [vmem:[%s2 + $0x1b4] sm:$0xf]
  %v146 = vld [vmem:[%s2 + $0x1b8] sm:$0xf]
  %v147 = vld [vmem:[%s2 + $0x1bc] sm:$0xf]
  %v148 = vld [vmem:[%s2 + $0x1c0] sm:$0xf]
  %v149 = vld [vmem:[%s2 + $0x1c4] sm:$0xf]
  %v150 = vld [vmem:[%s2 + $0x1c8] sm:$0xf]
  %v151 = vld [vmem:[%s2 + $0x1cc] sm:$0xf]
  %v152 = vld [vmem:[%s2 + $0x1d0] sm:$0xf]
  %v153 = vld [vmem:[%s2 + $0x1d4] sm:$0xf]
  %v154 = vld [vmem:[%s2 + $0x1d8] sm:$0xf]
  %v155 = vld [vmem:[%s2 + $0x1dc] sm:$0xf]
  %v156 = vld [vmem:[%s2 + $0x1e0] sm:$0xf]
  %v157 = vld [vmem:[%s2 + $0x1e4] sm:$0xf]
  %v158 = vld [vmem:[%s2 + $0x1e8] sm:$0xf]
  %v159 = vld [vmem:[%s2 + $0x1ec] sm:$0xf]
  %v160 = vld [vmem:[%s2 + $0x1f0] sm:$0xf]
  %v161 = vld [vmem:[%s2 + $0x1f4] sm:$0xf]
  %v162 = vld [vmem:[%s2 + $0x1f8] sm:$0xf]
  %v163 = vld [vmem:[%s2 + $0x1fc] sm:$0xf]
  %v164 = vld [vmem:[%s2 + $0x200] sm:$0xf]
  %v165 = vld [vmem:[%s2 + $0x204] sm:$0xf]
  %v166 = vld [vmem:[%s2 + $0x208] sm:$0xf]
  %v167 = vld [vmem:[%s2 + $0x20c] sm:$0xf]
  %v168 = vld [vmem:[%s2 + $0x210] sm:$0xf]
  %v169 = vld [vmem:[%s2 + $0x214] sm:$0xf]
  %v170 = vld [vmem:[%s2 + $0x218] sm:$0xf]
  %v171 = vld [vmem:[%s2 + $0x21c] sm:$0xf]
  %v172 = vld [vmem:[%s2 + $0x220] sm:$0xf]
  %v173 = vld [vmem:[%s2 + $0x224] sm:$0xf]
  %v174 = vld [vmem:[%s2 + $0x228] sm:$0xf]
  %v175 = vld [vmem:[%s2 + $0x22c] sm:$0xf]
  %v176 = vld [vmem:[%s2 + $0x230] sm:$0xf]
  %v177 = vld [vmem:[%s2 + $0x234] sm:$0xf]
  %v178 = vld [vmem:[%s2 + $0x238] sm:$0xf]
  %v179 = vld [vmem:[%s2 + $0x23c] sm:$0xf]
  %v180 = vld [vmem:[%s2 + $0x240] sm:$0xf]
  %v181 = vld [vmem:[%s2 + $0x244] sm:$0xf]
  %v182 = vld [vmem:[%s2 + $0x248] sm:$0xf]
  %v183 = vld [vmem:[%s2 + $0x24c] sm:$0xf]
  %v184 = vld [vmem:[%s2 + $0x250] sm:$0xf]
  %v185 = vld [vmem:[%s2 + $0x254] sm:$0xf]
  %v186 = vld [vmem:[%s2 + $0x258] sm:$0xf]
  %v187 = vld [vmem:[%s2 + $0x25c] sm:$0xf]
  %v188 = vld [vmem:[%s2 + $0x260] sm:$0xf]
  %v189 = vld [vmem:[%s2 + $0x264] sm:$0xf]
  %v190 = vld [vmem:[%s2 + $0x268] sm:$0xf]
  %v191 = vld [vmem:[%s2 + $0x26c] sm:$0xf]
  %v192 = vld [vmem:[%s2 + $0x270] sm:$0xf]
  %v193 = vld [vmem:[%s2 + $0x274] sm:$0xf]
  %v194 = vld [vmem:[%s2 + $0x278] sm:$0xf]
  %v195 = vld [vmem:[%s2 + $0x27c] sm:$0xf]
  %v196 = vld [vmem:[%s2 + $0x280] sm:$0xf]
  %v197 = vld [vmem:[%s2 + $0x284] sm:$0xf]
  %v198 = vld [vmem:[%s2 + $0x288] sm:$0xf]
  %v199 = vld [vmem:[%s2 + $0x28c] sm:$0xf]
  %v200 = vld [vmem:[%s2 + $0x290] sm:$0xf]
  %v201 = vld [vmem:[%s2 + $0x294] sm:$0xf]
  %v202 = vld [vmem:[%s2 + $0x298] sm:$0xf]
  %v203 = vld [vmem:[%s2 + $0x29c] sm:$0xf]
  %v204 = vld [vmem:[%s2 + $0x2a0] sm:$0xf]
  %v205 = vld [vmem:[%s2 + $0x2a4] sm:$0xf]
  %v206 = vld [vmem:[%s2 + $0x2a8] sm:$0xf]
  %v207 = vld [vmem:[%s2 + $0x2ac] sm:$0xf]
  %v208 = vld [vmem:[%s2 + $0x2b0] sm:$0xf]
  %v209 = vld [vmem:[%s2 + $0x2b4] sm:$0xf]
  %v210 = vld [vmem:[%s2 + $0x2b8] sm:$0xf]
  %v211 = vld [vmem:[%s2 + $0x2bc] sm:$0xf]
  %v212 = vld [vmem:[%s2 + $0x2c0] sm:$0xf]
  %v213 = vld [vmem:[%s2 + $0x2c4] sm:$0xf]
  %v214 = vld [vmem:[%s2 + $0x2c8] sm:$0xf]
  %v215 = vld [vmem:[%s2 + $0x2cc] sm:$0xf]
  %v216 = vld [vmem:[%s2 + $0x2d0] sm:$0xf]
  %v217 = vld [vmem:[%s2 + $0x2d4] sm:$0xf]
  %v218 = vld [vmem:[%s2 + $0x2d8] sm:$0xf]
  %v219 = vld [vmem:[%s2 + $0x2dc] sm:$0xf]
  %v220 = vld [vmem:[%s2 + $0x2e0] sm:$0xf]
  %v221 = vld [vmem:[%s2 + $0x2e4] sm:$0xf]
  %v222 = vld [vmem:[%s2 + $0x2e8] sm:$0xf]
  %v223 = vld [vmem:[%s2 + $0x2ec] sm:$0xf]
  %v224 = vld [vmem:[%s2 + $0x2f0] sm:$0xf]
  %v225 = vld [vmem:[%s2 + $0x2f4] sm:$0xf]
  %v226 = vld [vmem:[%s2 + $0x2f8] sm:$0xf]
  %v227 = vld [vmem:[%s2 + $0x2fc] sm:$0xf]
  %v228 = vld [vmem:[%s2 + $0x300] sm:$0xf]
  %v229 = vld [vmem:[%s2 + $0x304] sm:$0xf]
  %v230 = vld [vmem:[%s2 + $0x308] sm:$0xf]
  %v231 = vld [vmem:[%s2 + $0x30c] sm:$0xf]
  %v232 = vld [vmem:[%s2 + $0x310] sm:$0xf]
  %v233 = vld [vmem:[%s2 + $0x314] sm:$0xf]
  %v234 = vld [vmem:[%s2 + $0x318] sm:$0xf]
  %v235 = vld [vmem:[%s2 + $0x31c] sm:$0xf]
  %v236 = vld [vmem:[%s2 + $0x320] sm:$0xf]
  %v237 = vld [vmem:[%s2 + $0x324] sm:$0xf]
  %v238 = vld [vmem:[%s2 + $0x328] sm:$0xf]
  %v239 = vld [vmem:[%s2 + $0x32c] sm:$0xf]
  %v240 = vld [vmem:[%s2 + $0x330] sm:$0xf]
  %v241 = vld [vmem:[%s2 + $0x334] sm:$0xf]
  %v242 = vld [vmem:[%s2 + $0x338] sm:$0xf]
  %v243 = vld [vmem:[%s2 + $0x33c] sm:$0xf]
  %v244 = vld [vmem:[%s2 + $0x340] sm:$0xf]
  %v245 = vld [vmem:[%s2 + $0x344] sm:$0xf]
  %v246 = vld [vmem:[%s2 + $0x348] sm:$0xf]
  %v247 = vld [vmem:[%s2 + $0x34c] sm:$0xf]
  %v248 = vld [vmem:[%s2 + $0x350] sm:$0xf]
  %v249 = vld [vmem:[%s2 + $0x354] sm:$0xf]
  %v250 = vld [vmem:[%s2 + $0x358] sm:$0xf]
  %v251 = vld [vmem:[%s2 + $0x35c] sm:$0xf]
  %v252 = vld [vmem:[%s2 + $0x360] sm:$0xf]
  %v253 = vld [vmem:[%s2 + $0x364] sm:$0xf]
  %v254 = vld [vmem:[%s2 + $0x368] sm:$0xf]
  %v255 = vld [vmem:[%s2 + $0x36c] sm:$0xf]
  %v256 = vld [vmem:[%s2 + $0x370] sm:$0xf]
  %v257 = vld [vmem:[%s2 + $0x374] sm:$0xf]
  %v258 = vld [vmem:[%s2 + $0x378] sm:$0xf]
  %v259 = vld [vmem:[%s2 + $0x37c] sm:$0xf]
  %v260 = vld [vmem:[%s2 + $0x380] sm:$0xf]
  %v261 = vld [vmem:[%s2 + $0x384] sm:$0xf]
  %v262 = vld [vmem:[%s2 + $0x388] sm:$0xf]
  %v263 = vld [vmem:[%s2 + $0x38c] sm:$0xf]
  %v264 = vld [vmem:[%s2 + $0x390] sm:$0xf]
  %v265 = vld [vmem:[%s2 + $0x394] sm:$0xf]
  %v266 = vld [vmem:[%s2 + $0x398] sm:$0xf]
  %v267 = vld [vmem:[%s2 + $0x39c] sm:$0xf]
  %v268 = vld [vmem:[%s2 + $0x3a0] sm:$0xf]
  %v269 = vld [vmem:[%s2 + $0x3a4] sm:$0xf]
  %v270 = vld [vmem:[%s2 + $0x3a8] sm:$0xf]
  %v271 = vld [vmem:[%s2 + $0x3ac] sm:$0xf]
  %v272 = vld [vmem:[%s2 + $0x3b0] sm:$0xf]
  %v273 = vld [vmem:[%s2 + $0x3b4] sm:$0xf]
  %v274 = vld [vmem:[%s2 + $0x3b8] sm:$0xf]
  %v275 = vld [vmem:[%s2 + $0x3bc] sm:$0xf]
  %v276 = vld [vmem:[%s2 + $0x3c0] sm:$0xf]
  %v277 = vld [vmem:[%s2 + $0x3c4] sm:$0xf]
  %v278 = vld [vmem:[%s2 + $0x3c8] sm:$0xf]
  %v279 = vld [vmem:[%s2 + $0x3cc] sm:$0xf]
  %v280 = vld [vmem:[%s2 + $0x3d0] sm:$0xf]
  %v281 = vld [vmem:[%s2 + $0x3d4] sm:$0xf]
  %v282 = vld [vmem:[%s2 + $0x3d8] sm:$0xf]
  %v283 = vld [vmem:[%s2 + $0x3dc] sm:$0xf]
  %v284 = vld [vmem:[%s2 + $0x3e0] sm:$0xf]
  %v285 = vld [vmem:[%s2 + $0x3e4] sm:$0xf]
  %v286 = vld [vmem:[%s2 + $0x3e8] sm:$0xf]
  %v287 = vld [vmem:[%s2 + $0x3ec] sm:$0xf]
  %v288 = vld [vmem:[%s2 + $0x3f0] sm:$0xf]
  %v289 = vld [vmem:[%s2 + $0x3f4] sm:$0xf]
  %v290 = vld [vmem:[%s2 + $0x3f8] sm:$0xf]
  %v291 = vld [vmem:[%s2 + $0x3fc] sm:$0xf]
  %v292 = vld [vmem:[%s1] sm:$0x3]
  %v293 = vld [vmem:[%s3] sm:$0xf]
  %295 = vset.pattern.permute.xlu0 0
  %296 = vperm.xlu0 %295, %v292
  %v297 = vpop.permute.xlu0 %296
  %v299 = vperm.slane %v293, 0
  %v300 = vmul.f32 %v297, %v299
  %302 = vst [vmem:[#allocation1] ss:$9 sm:$0xff] %v34
  %v303 = vld [vmem:[#allocation1] sm:$0xff]
  %v304 = vld [vmem:[#allocation1 + $0x9] sm:$0xff]
  %v305 = vld [vmem:[#allocation1 + $0x12] sm:$0xff]
  %v306 = vld [vmem:[#allocation1 + $0x1b] sm:$0xff]
  %v307 = vld [vmem:[#allocation1 + $0x24] sm:$0xff]
  %v308 = vld [vmem:[#allocation1 + $0x2d] sm:$0xff]
  %v309 = vld [vmem:[#allocation1 + $0x36] sm:$0xff]
  %v310 = vld [vmem:[#allocation1 + $0x3f] sm:$0xff]
  %312 = vst [vmem:[#allocation1] ss:$9 sm:$0xff] %v35
  %v313 = vld [vmem:[#allocation1] sm:$0xff]
  %v314 = vld [vmem:[#allocation1 + $0x9] sm:$0xff]
  %v315 = vld [vmem:[#allocation1 + $0x12] sm:$0xff]
  %v316 = vld [vmem:[#allocation1 + $0x1b] sm:$0xff]
  %v317 = vld [vmem:[#allocation1 + $0x24] sm:$0xff]
  %v318 = vld [vmem:[#allocation1 + $0x2d] sm:$0xff]
  %v319 = vld [vmem:[#allocation1 + $0x36] sm:$0xff]
  %v320 = vld [vmem:[#allocation1 + $0x3f] sm:$0xff]
  %v593 = vunpack.c.l.b16 %v36
  %v594 = vunpack.c.l.b16 %v37
  %v595 = vunpack.c.l.b16 %v38
  %v596 = vunpack.c.l.b16 %v39
  %v597 = vunpack.c.l.b16 %v40
  %v598 = vunpack.c.l.b16 %v41
  %v599 = vunpack.c.l.b16 %v42
  %v600 = vunpack.c.l.b16 %v43
  %v601 = vunpack.c.l.b16 %v44
  %v602 = vunpack.c.l.b16 %v45
  %v603 = vunpack.c.l.b16 %v46
  %v604 = vunpack.c.l.b16 %v47
  %v605 = vunpack.c.l.b16 %v48
  %v606 = vunpack.c.l.b16 %v49
  %v607 = vunpack.c.l.b16 %v50
  %v608 = vunpack.c.l.b16 %v51
  %v609 = vunpack.c.l.b16 %v52
  %v610 = vunpack.c.l.b16 %v53
  %v611 = vunpack.c.l.b16 %v54
  %v612 = vunpack.c.l.b16 %v55
  %v613 = vunpack.c.l.b16 %v56
  %v614 = vunpack.c.l.b16 %v57
  %v615 = vunpack.c.l.b16 %v58
  %v616 = vunpack.c.l.b16 %v59
  %v617 = vunpack.c.l.b16 %v60
  %v618 = vunpack.c.l.b16 %v61
  %v619 = vunpack.c.l.b16 %v62
  %v620 = vunpack.c.l.b16 %v63
  %v621 = vunpack.c.l.b16 %v64
  %v622 = vunpack.c.l.b16 %v65
  %v623 = vunpack.c.l.b16 %v66
  %v624 = vunpack.c.l.b16 %v67
  %v625 = vunpack.c.l.b16 %v68
  %v626 = vunpack.c.l.b16 %v69
  %v627 = vunpack.c.l.b16 %v70
  %v628 = vunpack.c.l.b16 %v71
  %v629 = vunpack.c.l.b16 %v72
  %v630 = vunpack.c.l.b16 %v73
  %v631 = vunpack.c.l.b16 %v74
  %v632 = vunpack.c.l.b16 %v75
  %v633 = vunpack.c.l.b16 %v76
  %v634 = vunpack.c.l.b16 %v77
  %v635 = vunpack.c.l.b16 %v78
  %v636 = vunpack.c.l.b16 %v79
  %v637 = vunpack.c.l.b16 %v80
  %v638 = vunpack.c.l.b16 %v81
  %v639 = vunpack.c.l.b16 %v82
  %v640 = vunpack.c.l.b16 %v83
  %v641 = vunpack.c.l.b16 %v84
  %v642 = vunpack.c.l.b16 %v85
  %v643 = vunpack.c.l.b16 %v86
  %v644 = vunpack.c.l.b16 %v87
  %v645 = vunpack.c.l.b16 %v88
  %v646 = vunpack.c.l.b16 %v89
  %v647 = vunpack.c.l.b16 %v90
  %v648 = vunpack.c.l.b16 %v91
  %v649 = vunpack.c.l.b16 %v92
  %v650 = vunpack.c.l.b16 %v93
  %v651 = vunpack.c.l.b16 %v94
  %v652 = vunpack.c.l.b16 %v95
  %v653 = vunpack.c.l.b16 %v96
  %v654 = vunpack.c.l.b16 %v97
  %v655 = vunpack.c.l.b16 %v98
  %v656 = vunpack.c.l.b16 %v99
  %v657 = vunpack.c.l.b16 %v100
  %v658 = vunpack.c.l.b16 %v101
  %v659 = vunpack.c.l.b16 %v102
  %v660 = vunpack.c.l.b16 %v103
  %v661 = vunpack.c.l.b16 %v104
  %v662 = vunpack.c.l.b16 %v105
  %v663 = vunpack.c.l.b16 %v106
  %v664 = vunpack.c.l.b16 %v107
  %v665 = vunpack.c.l.b16 %v108
  %v666 = vunpack.c.l.b16 %v109
  %v667 = vunpack.c.l.b16 %v110
  %v668 = vunpack.c.l.b16 %v111
  %v669 = vunpack.c.l.b16 %v112
  %v670 = vunpack.c.l.b16 %v113
  %v671 = vunpack.c.l.b16 %v114
  %v672 = vunpack.c.l.b16 %v115
  %v673 = vunpack.c.l.b16 %v116
  %v674 = vunpack.c.l.b16 %v117
  %v675 = vunpack.c.l.b16 %v118
  %v676 = vunpack.c.l.b16 %v119
  %v677 = vunpack.c.l.b16 %v120
  %v678 = vunpack.c.l.b16 %v121
  %v679 = vunpack.c.l.b16 %v122
  %v680 = vunpack.c.l.b16 %v123
  %v681 = vunpack.c.l.b16 %v124
  %v682 = vunpack.c.l.b16 %v125
  %v683 = vunpack.c.l.b16 %v126
  %v684 = vunpack.c.l.b16 %v127
  %v685 = vunpack.c.l.b16 %v128
  %v686 = vunpack.c.l.b16 %v129
  %v687 = vunpack.c.l.b16 %v130
  %v688 = vunpack.c.l.b16 %v131
  %v689 = vunpack.c.l.b16 %v132
  %v690 = vunpack.c.l.b16 %v133
  %v691 = vunpack.c.l.b16 %v134
  %v692 = vunpack.c.l.b16 %v135
  %v693 = vunpack.c.l.b16 %v136
  %v694 = vunpack.c.l.b16 %v137
  %v695 = vunpack.c.l.b16 %v138
  %v696 = vunpack.c.l.b16 %v139
  %v697 = vunpack.c.l.b16 %v140
  %v698 = vunpack.c.l.b16 %v141
  %v699 = vunpack.c.l.b16 %v142
  %v700 = vunpack.c.l.b16 %v143
  %v701 = vunpack.c.l.b16 %v144
  %v702 = vunpack.c.l.b16 %v145
  %v703 = vunpack.c.l.b16 %v146
  %v704 = vunpack.c.l.b16 %v147
  %v705 = vunpack.c.l.b16 %v148
  %v706 = vunpack.c.l.b16 %v149
  %v707 = vunpack.c.l.b16 %v150
  %v708 = vunpack.c.l.b16 %v151
  %v709 = vunpack.c.l.b16 %v152
  %v710 = vunpack.c.l.b16 %v153
  %v711 = vunpack.c.l.b16 %v154
  %v712 = vunpack.c.l.b16 %v155
  %v713 = vunpack.c.l.b16 %v156
  %v714 = vunpack.c.l.b16 %v157
  %v715 = vunpack.c.l.b16 %v158
  %v716 = vunpack.c.l.b16 %v159
  %v717 = vunpack.c.l.b16 %v160
  %v718 = vunpack.c.l.b16 %v161
  %v719 = vunpack.c.l.b16 %v162
  %v720 = vunpack.c.l.b16 %v163
  %v721 = vunpack.c.l.b16 %v164
  %v722 = vunpack.c.l.b16 %v165
  %v723 = vunpack.c.l.b16 %v166
  %v724 = vunpack.c.l.b16 %v167
  %v725 = vunpack.c.l.b16 %v168
  %v726 = vunpack.c.l.b16 %v169
  %v727 = vunpack.c.l.b16 %v170
  %v728 = vunpack.c.l.b16 %v171
  %v729 = vunpack.c.l.b16 %v172
  %v730 = vunpack.c.l.b16 %v173
  %v731 = vunpack.c.l.b16 %v174
  %v732 = vunpack.c.l.b16 %v175
  %v733 = vunpack.c.l.b16 %v176
  %v734 = vunpack.c.l.b16 %v177
  %v735 = vunpack.c.l.b16 %v178
  %v736 = vunpack.c.l.b16 %v179
  %v737 = vunpack.c.l.b16 %v180
  %v738 = vunpack.c.l.b16 %v181
  %v739 = vunpack.c.l.b16 %v182
  %v740 = vunpack.c.l.b16 %v183
  %v741 = vunpack.c.l.b16 %v184
  %v742 = vunpack.c.l.b16 %v185
  %v743 = vunpack.c.l.b16 %v186
  %v744 = vunpack.c.l.b16 %v187
  %v745 = vunpack.c.l.b16 %v188
  %v746 = vunpack.c.l.b16 %v189
  %v747 = vunpack.c.l.b16 %v190
  %v748 = vunpack.c.l.b16 %v191
  %v749 = vunpack.c.l.b16 %v192
  %v750 = vunpack.c.l.b16 %v193
  %v751 = vunpack.c.l.b16 %v194
  %v752 = vunpack.c.l.b16 %v195
  %v753 = vunpack.c.l.b16 %v196
  %v754 = vunpack.c.l.b16 %v197
  %v755 = vunpack.c.l.b16 %v198
  %v756 = vunpack.c.l.b16 %v199
  %v757 = vunpack.c.l.b16 %v200
  %v758 = vunpack.c.l.b16 %v201
  %v759 = vunpack.c.l.b16 %v202
  %v760 = vunpack.c.l.b16 %v203
  %v761 = vunpack.c.l.b16 %v204
  %v762 = vunpack.c.l.b16 %v205
  %v763 = vunpack.c.l.b16 %v206
  %v764 = vunpack.c.l.b16 %v207
  %v765 = vunpack.c.l.b16 %v208
  %v766 = vunpack.c.l.b16 %v209
  %v767 = vunpack.c.l.b16 %v210
  %v768 = vunpack.c.l.b16 %v211
  %v769 = vunpack.c.l.b16 %v212
  %v770 = vunpack.c.l.b16 %v213
  %v771 = vunpack.c.l.b16 %v214
  %v772 = vunpack.c.l.b16 %v215
  %v773 = vunpack.c.l.b16 %v216
  %v774 = vunpack.c.l.b16 %v217
  %v775 = vunpack.c.l.b16 %v218
  %v776 = vunpack.c.l.b16 %v219
  %v777 = vunpack.c.l.b16 %v220
  %v778 = vunpack.c.l.b16 %v221
  %v779 = vunpack.c.l.b16 %v222
  %v780 = vunpack.c.l.b16 %v223
  %v781 = vunpack.c.l.b16 %v224
  %v782 = vunpack.c.l.b16 %v225
  %v783 = vunpack.c.l.b16 %v226
  %v784 = vunpack.c.l.b16 %v227
  %v785 = vunpack.c.l.b16 %v228
  %v786 = vunpack.c.l.b16 %v229
  %v787 = vunpack.c.l.b16 %v230
  %v788 = vunpack.c.l.b16 %v231
  %v789 = vunpack.c.l.b16 %v232
  %v790 = vunpack.c.l.b16 %v233
  %v791 = vunpack.c.l.b16 %v234
  %v792 = vunpack.c.l.b16 %v235
  %v793 = vunpack.c.l.b16 %v236
  %v794 = vunpack.c.l.b16 %v237
  %v795 = vunpack.c.l.b16 %v238
  %v796 = vunpack.c.l.b16 %v239
  %v797 = vunpack.c.l.b16 %v240
  %v798 = vunpack.c.l.b16 %v241
  %v799 = vunpack.c.l.b16 %v242
  %v800 = vunpack.c.l.b16 %v243
  %v801 = vunpack.c.l.b16 %v244
  %v802 = vunpack.c.l.b16 %v245
  %v803 = vunpack.c.l.b16 %v246
  %v804 = vunpack.c.l.b16 %v247
  %v805 = vunpack.c.l.b16 %v248
  %v806 = vunpack.c.l.b16 %v249
  %v807 = vunpack.c.l.b16 %v250
  %v808 = vunpack.c.l.b16 %v251
  %v809 = vunpack.c.l.b16 %v252
  %v810 = vunpack.c.l.b16 %v253
  %v811 = vunpack.c.l.b16 %v254
  %v812 = vunpack.c.l.b16 %v255
  %v813 = vunpack.c.l.b16 %v256
  %v814 = vunpack.c.l.b16 %v257
  %v815 = vunpack.c.l.b16 %v258
  %v816 = vunpack.c.l.b16 %v259
  %v817 = vunpack.c.l.b16 %v260
  %v818 = vunpack.c.l.b16 %v261
  %v819 = vunpack.c.l.b16 %v262
  %v820 = vunpack.c.l.b16 %v263
  %v821 = vunpack.c.l.b16 %v264
  %v822 = vunpack.c.l.b16 %v265
  %v823 = vunpack.c.l.b16 %v266
  %v824 = vunpack.c.l.b16 %v267
  %v825 = vunpack.c.l.b16 %v268
  %v826 = vunpack.c.l.b16 %v269
  %v827 = vunpack.c.l.b16 %v270
  %v828 = vunpack.c.l.b16 %v271
  %v829 = vunpack.c.l.b16 %v272
  %v830 = vunpack.c.l.b16 %v273
  %v831 = vunpack.c.l.b16 %v274
  %v832 = vunpack.c.l.b16 %v275
  %v833 = vunpack.c.l.b16 %v276
  %v834 = vunpack.c.l.b16 %v277
  %v835 = vunpack.c.l.b16 %v278
  %v836 = vunpack.c.l.b16 %v279
  %v837 = vunpack.c.l.b16 %v280
  %v838 = vunpack.c.l.b16 %v281
  %v839 = vunpack.c.l.b16 %v282
  %v840 = vunpack.c.l.b16 %v283
  %v841 = vunpack.c.l.b16 %v284
  %v842 = vunpack.c.l.b16 %v285
  %v843 = vunpack.c.l.b16 %v286
  %v844 = vunpack.c.l.b16 %v287
  %v845 = vunpack.c.l.b16 %v288
  %v846 = vunpack.c.l.b16 %v289
  %v847 = vunpack.c.l.b16 %v290
  %v848 = vunpack.c.l.b16 %v291
  %v849 = vpack.c.b16 %v594, %v593
  %v850 = vpack.c.b16 %v596, %v595
  %v851 = vpack.c.b16 %v598, %v597
  %v852 = vpack.c.b16 %v600, %v599
  %v853 = vpack.c.b16 %v602, %v601
  %v854 = vpack.c.b16 %v604, %v603
  %v855 = vpack.c.b16 %v606, %v605
  %v856 = vpack.c.b16 %v608, %v607
  %v857 = vpack.c.b16 %v610, %v609
  %v858 = vpack.c.b16 %v612, %v611
  %v859 = vpack.c.b16 %v614, %v613
  %v860 = vpack.c.b16 %v616, %v615
  %v861 = vpack.c.b16 %v618, %v617
  %v862 = vpack.c.b16 %v620, %v619
  %v863 = vpack.c.b16 %v622, %v621
  %v864 = vpack.c.b16 %v624, %v623
  %v865 = vpack.c.b16 %v626, %v625
  %v866 = vpack.c.b16 %v628, %v627
  %v867 = vpack.c.b16 %v630, %v629
  %v868 = vpack.c.b16 %v632, %v631
  %v869 = vpack.c.b16 %v634, %v633
  %v870 = vpack.c.b16 %v636, %v635
  %v871 = vpack.c.b16 %v638, %v637
  %v872 = vpack.c.b16 %v640, %v639
  %v873 = vpack.c.b16 %v642, %v641
  %v874 = vpack.c.b16 %v644, %v643
  %v875 = vpack.c.b16 %v646, %v645
  %v876 = vpack.c.b16 %v648, %v647
  %v877 = vpack.c.b16 %v650, %v649
  %v878 = vpack.c.b16 %v652, %v651
  %v879 = vpack.c.b16 %v654, %v653
  %v880 = vpack.c.b16 %v656, %v655
  %v881 = vpack.c.b16 %v658, %v657
  %v882 = vpack.c.b16 %v660, %v659
  %v883 = vpack.c.b16 %v662, %v661
  %v884 = vpack.c.b16 %v664, %v663
  %v885 = vpack.c.b16 %v666, %v665
  %v886 = vpack.c.b16 %v668, %v667
  %v887 = vpack.c.b16 %v670, %v669
  %v888 = vpack.c.b16 %v672, %v671
  %v889 = vpack.c.b16 %v674, %v673
  %v890 = vpack.c.b16 %v676, %v675
  %v891 = vpack.c.b16 %v678, %v677
  %v892 = vpack.c.b16 %v680, %v679
  %v893 = vpack.c.b16 %v682, %v681
  %v894 = vpack.c.b16 %v684, %v683
  %v895 = vpack.c.b16 %v686, %v685
  %v896 = vpack.c.b16 %v688, %v687
  %v897 = vpack.c.b16 %v690, %v689
  %v898 = vpack.c.b16 %v692, %v691
  %v899 = vpack.c.b16 %v694, %v693
  %v900 = vpack.c.b16 %v696, %v695
  %v901 = vpack.c.b16 %v698, %v697
  %v902 = vpack.c.b16 %v700, %v699
  %v903 = vpack.c.b16 %v702, %v701
  %v904 = vpack.c.b16 %v704, %v703
  %v905 = vpack.c.b16 %v706, %v705
  %v906 = vpack.c.b16 %v708, %v707
  %v907 = vpack.c.b16 %v710, %v709
  %v908 = vpack.c.b16 %v712, %v711
  %v909 = vpack.c.b16 %v714, %v713
  %v910 = vpack.c.b16 %v716, %v715
  %v911 = vpack.c.b16 %v718, %v717
  %v912 = vpack.c.b16 %v720, %v719
  %v913 = vpack.c.b16 %v722, %v721
  %v914 = vpack.c.b16 %v724, %v723
  %v915 = vpack.c.b16 %v726, %v725
  %v916 = vpack.c.b16 %v728, %v727
  %v917 = vpack.c.b16 %v730, %v729
  %v918 = vpack.c.b16 %v732, %v731
  %v919 = vpack.c.b16 %v734, %v733
  %v920 = vpack.c.b16 %v736, %v735
  %v921 = vpack.c.b16 %v738, %v737
  %v922 = vpack.c.b16 %v740, %v739
  %v923 = vpack.c.b16 %v742, %v741
  %v924 = vpack.c.b16 %v744, %v743
  %v925 = vpack.c.b16 %v746, %v745
  %v926 = vpack.c.b16 %v748, %v747
  %v927 = vpack.c.b16 %v750, %v749
  %v928 = vpack.c.b16 %v752, %v751
  %v929 = vpack.c.b16 %v754, %v753
  %v930 = vpack.c.b16 %v756, %v755
  %v931 = vpack.c.b16 %v758, %v757
  %v932 = vpack.c.b16 %v760, %v759
  %v933 = vpack.c.b16 %v762, %v761
  %v934 = vpack.c.b16 %v764, %v763
  %v935 = vpack.c.b16 %v766, %v765
  %v936 = vpack.c.b16 %v768, %v767
  %v937 = vpack.c.b16 %v770, %v769
  %v938 = vpack.c.b16 %v772, %v771
  %v939 = vpack.c.b16 %v774, %v773
  %v940 = vpack.c.b16 %v776, %v775
  %v941 = vpack.c.b16 %v778, %v777
  %v942 = vpack.c.b16 %v780, %v779
  %v943 = vpack.c.b16 %v782, %v781
  %v944 = vpack.c.b16 %v784, %v783
  %v945 = vpack.c.b16 %v786, %v785
  %v946 = vpack.c.b16 %v788, %v787
  %v947 = vpack.c.b16 %v790, %v789
  %v948 = vpack.c.b16 %v792, %v791
  %v949 = vpack.c.b16 %v794, %v793
  %v950 = vpack.c.b16 %v796, %v795
  %v951 = vpack.c.b16 %v798, %v797
  %v952 = vpack.c.b16 %v800, %v799
  %v953 = vpack.c.b16 %v802, %v801
  %v954 = vpack.c.b16 %v804, %v803
  %v955 = vpack.c.b16 %v806, %v805
  %v956 = vpack.c.b16 %v808, %v807
  %v957 = vpack.c.b16 %v810, %v809
  %v958 = vpack.c.b16 %v812, %v811
  %v959 = vpack.c.b16 %v814, %v813
  %v960 = vpack.c.b16 %v816, %v815
  %v961 = vpack.c.b16 %v818, %v817
  %v962 = vpack.c.b16 %v820, %v819
  %v963 = vpack.c.b16 %v822, %v821
  %v964 = vpack.c.b16 %v824, %v823
  %v965 = vpack.c.b16 %v826, %v825
  %v966 = vpack.c.b16 %v828, %v827
  %v967 = vpack.c.b16 %v830, %v829
  %v968 = vpack.c.b16 %v832, %v831
  %v969 = vpack.c.b16 %v834, %v833
  %v970 = vpack.c.b16 %v836, %v835
  %v971 = vpack.c.b16 %v838, %v837
  %v972 = vpack.c.b16 %v840, %v839
  %v973 = vpack.c.b16 %v842, %v841
  %v974 = vpack.c.b16 %v844, %v843
  %v975 = vpack.c.b16 %v846, %v845
  %v976 = vpack.c.b16 %v848, %v847
  %1105 = vmatpush.bf16.msra.mxu0 %v856
  %1106 = vmatpush.bf16.msra.mxu0 %v855
  %1107 = vmatpush.bf16.msra.mxu0 %v854
  %1108 = vmatpush.bf16.msra.mxu0 %v853
  %1109 = vmatpush.bf16.msra.mxu0 %v852
  %1110 = vmatpush.bf16.msra.mxu0 %v851
  %1111 = vmatpush.bf16.msra.mxu0 %v850
  %1112 = vmatpush.bf16.msra.mxu0 %v849
  %1113 = vmatmul.bf16.gmra.mxu0 %v303
  %v1114 = vpop.f32.mrf.mxu0
  %v1115 = vadd.f32 %v300, %v1114
  %v1116 = vpop.f32.mrf.mxu0
  %1117 = vdwg.mxu0
  %1118 = vmatpush.bf16.msra.mxu0 %v864
  %1119 = vmatpush.bf16.msra.mxu0 %v863
  %1120 = vmatpush.bf16.msra.mxu0 %v862
  %1121 = vmatpush.bf16.msra.mxu0 %v861
  %1122 = vmatpush.bf16.msra.mxu0 %v860
  %1123 = vmatpush.bf16.msra.mxu0 %v859
  %1124 = vmatpush.bf16.msra.mxu0 %v858
  %1125 = vmatpush.bf16.msra.mxu0 %v857
  %1126 = vmatmul.bf16.gmra.mxu0 %v304
  %v1127 = vpop.f32.mrf.mxu0
  %v1128 = vadd.f32 %v1115, %v1127
  %v1129 = vpop.f32.mrf.mxu0
  %1130 = vdwg.mxu0
  %1131 = vmatpush.bf16.msra.mxu0 %v872
  %1132 = vmatpush.bf16.msra.mxu0 %v871
  %1133 = vmatpush.bf16.msra.mxu0 %v870
  %1134 = vmatpush.bf16.msra.mxu0 %v869
  %1135 = vmatpush.bf16.msra.mxu0 %v868
  %1136 = vmatpush.bf16.msra.mxu0 %v867
  %1137 = vmatpush.bf16.msra.mxu0 %v866
  %1138 = vmatpush.bf16.msra.mxu0 %v865
  %1139 = vmatmul.bf16.gmra.mxu0 %v305
  %v1140 = vpop.f32.mrf.mxu0
  %v1141 = vadd.f32 %v1128, %v1140
  %v1142 = vpop.f32.mrf.mxu0
  %1143 = vdwg.mxu0
  %1144 = vmatpush.bf16.msra.mxu0 %v880
  %1145 = vmatpush.bf16.msra.mxu0 %v879
  %1146 = vmatpush.bf16.msra.mxu0 %v878
  %1147 = vmatpush.bf16.msra.mxu0 %v877
  %1148 = vmatpush.bf16.msra.mxu0 %v876
  %1149 = vmatpush.bf16.msra.mxu0 %v875
  %1150 = vmatpush.bf16.msra.mxu0 %v874
  %1151 = vmatpush.bf16.msra.mxu0 %v873
  %1152 = vmatmul.bf16.gmra.mxu0 %v306
  %v1153 = vpop.f32.mrf.mxu0
  %v1154 = vadd.f32 %v1141, %v1153
  %v1155 = vpop.f32.mrf.mxu0
  %1156 = vdwg.mxu0
  %1157 = vmatpush.bf16.msra.mxu0 %v888
  %1158 = vmatpush.bf16.msra.mxu0 %v887
  %1159 = vmatpush.bf16.msra.mxu0 %v886
  %1160 = vmatpush.bf16.msra.mxu0 %v885
  %1161 = vmatpush.bf16.msra.mxu0 %v884
  %1162 = vmatpush.bf16.msra.mxu0 %v883
  %1163 = vmatpush.bf16.msra.mxu0 %v882
  %1164 = vmatpush.bf16.msra.mxu0 %v881
  %1165 = vmatmul.bf16.gmra.mxu0 %v307
  %v1166 = vpop.f32.mrf.mxu0
  %v1167 = vadd.f32 %v1154, %v1166
  %v1168 = vpop.f32.mrf.mxu0
  %1169 = vdwg.mxu0
  %1170 = vmatpush.bf16.msra.mxu0 %v896
  %1171 = vmatpush.bf16.msra.mxu0 %v895
  %1172 = vmatpush.bf16.msra.mxu0 %v894
  %1173 = vmatpush.bf16.msra.mxu0 %v893
  %1174 = vmatpush.bf16.msra.mxu0 %v892
  %1175 = vmatpush.bf16.msra.mxu0 %v891
  %1176 = vmatpush.bf16.msra.mxu0 %v890
  %1177 = vmatpush.bf16.msra.mxu0 %v889
  %1178 = vmatmul.bf16.gmra.mxu0 %v308
  %v1179 = vpop.f32.mrf.mxu0
  %v1180 = vadd.f32 %v1167, %v1179
  %v1181 = vpop.f32.mrf.mxu0
  %1182 = vdwg.mxu0
  %1183 = vmatpush.bf16.msra.mxu0 %v904
  %1184 = vmatpush.bf16.msra.mxu0 %v903
  %1185 = vmatpush.bf16.msra.mxu0 %v902
  %1186 = vmatpush.bf16.msra.mxu0 %v901
  %1187 = vmatpush.bf16.msra.mxu0 %v900
  %1188 = vmatpush.bf16.msra.mxu0 %v899
  %1189 = vmatpush.bf16.msra.mxu0 %v898
  %1190 = vmatpush.bf16.msra.mxu0 %v897
  %1191 = vmatmul.bf16.gmra.mxu0 %v309
  %v1192 = vpop.f32.mrf.mxu0
  %v1193 = vadd.f32 %v1180, %v1192
  %v1194 = vpop.f32.mrf.mxu0
  %1195 = vdwg.mxu0
  %1196 = vmatpush.bf16.msra.mxu0 %v912
  %1197 = vmatpush.bf16.msra.mxu0 %v911
  %1198 = vmatpush.bf16.msra.mxu0 %v910
  %1199 = vmatpush.bf16.msra.mxu0 %v909
  %1200 = vmatpush.bf16.msra.mxu0 %v908
  %1201 = vmatpush.bf16.msra.mxu0 %v907
  %1202 = vmatpush.bf16.msra.mxu0 %v906
  %1203 = vmatpush.bf16.msra.mxu0 %v905
  %1204 = vmatmul.bf16.gmra.mxu0 %v310
  %v1205 = vpop.f32.mrf.mxu0
  %v1206 = vadd.f32 %v1193, %v1205
  %v1207 = vpop.f32.mrf.mxu0
  %1208 = vdwg.mxu0
  %1209 = vmatpush.bf16.msra.mxu0 %v920
  %1210 = vmatpush.bf16.msra.mxu0 %v919
  %1211 = vmatpush.bf16.msra.mxu0 %v918
  %1212 = vmatpush.bf16.msra.mxu0 %v917
  %1213 = vmatpush.bf16.msra.mxu0 %v916
  %1214 = vmatpush.bf16.msra.mxu0 %v915
  %1215 = vmatpush.bf16.msra.mxu0 %v914
  %1216 = vmatpush.bf16.msra.mxu0 %v913
  %1217 = vmatmul.bf16.gmra.mxu0 %v313
  %v1218 = vpop.f32.mrf.mxu0
  %v1219 = vadd.f32 %v1206, %v1218
  %v1220 = vpop.f32.mrf.mxu0
  %1221 = vdwg.mxu0
  %1222 = vmatpush.bf16.msra.mxu0 %v928
  %1223 = vmatpush.bf16.msra.mxu0 %v927
  %1224 = vmatpush.bf16.msra.mxu0 %v926
  %1225 = vmatpush.bf16.msra.mxu0 %v925
  %1226 = vmatpush.bf16.msra.mxu0 %v924
  %1227 = vmatpush.bf16.msra.mxu0 %v923
  %1228 = vmatpush.bf16.msra.mxu0 %v922
  %1229 = vmatpush.bf16.msra.mxu0 %v921
  %1230 = vmatmul.bf16.gmra.mxu0 %v314
  %v1231 = vpop.f32.mrf.mxu0
  %v1232 = vadd.f32 %v1219, %v1231
  %v1233 = vpop.f32.mrf.mxu0
  %1234 = vdwg.mxu0
  %1235 = vmatpush.bf16.msra.mxu0 %v936
  %1236 = vmatpush.bf16.msra.mxu0 %v935
  %1237 = vmatpush.bf16.msra.mxu0 %v934
  %1238 = vmatpush.bf16.msra.mxu0 %v933
  %1239 = vmatpush.bf16.msra.mxu0 %v932
  %1240 = vmatpush.bf16.msra.mxu0 %v931
  %1241 = vmatpush.bf16.msra.mxu0 %v930
  %1242 = vmatpush.bf16.msra.mxu0 %v929
  %1243 = vmatmul.bf16.gmra.mxu0 %v315
  %v1244 = vpop.f32.mrf.mxu0
  %v1245 = vadd.f32 %v1232, %v1244
  %v1246 = vpop.f32.mrf.mxu0
  %1247 = vdwg.mxu0
  %1248 = vmatpush.bf16.msra.mxu0 %v944
  %1249 = vmatpush.bf16.msra.mxu0 %v943
  %1250 = vmatpush.bf16.msra.mxu0 %v942
  %1251 = vmatpush.bf16.msra.mxu0 %v941
  %1252 = vmatpush.bf16.msra.mxu0 %v940
  %1253 = vmatpush.bf16.msra.mxu0 %v939
  %1254 = vmatpush.bf16.msra.mxu0 %v938
  %1255 = vmatpush.bf16.msra.mxu0 %v937
  %1256 = vmatmul.bf16.gmra.mxu0 %v316
  %v1257 = vpop.f32.mrf.mxu0
  %v1258 = vadd.f32 %v1245, %v1257
  %v1259 = vpop.f32.mrf.mxu0
  %1260 = vdwg.mxu0
  %1261 = vmatpush.bf16.msra.mxu0 %v952
  %1262 = vmatpush.bf16.msra.mxu0 %v951
  %1263 = vmatpush.bf16.msra.mxu0 %v950
  %1264 = vmatpush.bf16.msra.mxu0 %v949
  %1265 = vmatpush.bf16.msra.mxu0 %v948
  %1266 = vmatpush.bf16.msra.mxu0 %v947
  %1267 = vmatpush.bf16.msra.mxu0 %v946
  %1268 = vmatpush.bf16.msra.mxu0 %v945
  %1269 = vmatmul.bf16.gmra.mxu0 %v317
  %v1270 = vpop.f32.mrf.mxu0
  %v1271 = vadd.f32 %v1258, %v1270
  %v1272 = vpop.f32.mrf.mxu0
  %1273 = vdwg.mxu0
  %1274 = vmatpush.bf16.msra.mxu0 %v960
  %1275 = vmatpush.bf16.msra.mxu0 %v959
  %1276 = vmatpush.bf16.msra.mxu0 %v958
  %1277 = vmatpush.bf16.msra.mxu0 %v957
  %1278 = vmatpush.bf16.msra.mxu0 %v956
  %1279 = vmatpush.bf16.msra.mxu0 %v955
  %1280 = vmatpush.bf16.msra.mxu0 %v954
  %1281 = vmatpush.bf16.msra.mxu0 %v953
  %1282 = vmatmul.bf16.gmra.mxu0 %v318
  %v1283 = vpop.f32.mrf.mxu0
  %v1284 = vadd.f32 %v1271, %v1283
  %v1285 = vpop.f32.mrf.mxu0
  %1286 = vdwg.mxu0
  %1287 = vmatpush.bf16.msra.mxu0 %v968
  %1288 = vmatpush.bf16.msra.mxu0 %v967
  %1289 = vmatpush.bf16.msra.mxu0 %v966
  %1290 = vmatpush.bf16.msra.mxu0 %v965
  %1291 = vmatpush.bf16.msra.mxu0 %v964
  %1292 = vmatpush.bf16.msra.mxu0 %v963
  %1293 = vmatpush.bf16.msra.mxu0 %v962
  %1294 = vmatpush.bf16.msra.mxu0 %v961
  %1295 = vmatmul.bf16.gmra.mxu0 %v319
  %v1296 = vpop.f32.mrf.mxu0
  %v1297 = vadd.f32 %v1284, %v1296
  %v1298 = vpop.f32.mrf.mxu0
  %1299 = vdwg.mxu0
  %1300 = vmatpush.bf16.msra.mxu0 %v976
  %1301 = vmatpush.bf16.msra.mxu0 %v975
  %1302 = vmatpush.bf16.msra.mxu0 %v974
  %1303 = vmatpush.bf16.msra.mxu0 %v973
  %1304 = vmatpush.bf16.msra.mxu0 %v972
  %1305 = vmatpush.bf16.msra.mxu0 %v971
  %1306 = vmatpush.bf16.msra.mxu0 %v970
  %1307 = vmatpush.bf16.msra.mxu0 %v969
  %1308 = vmatmul.bf16.gmra.mxu0 %v320
  %v1309 = vpop.f32.mrf.mxu0
  %v1310 = vadd.f32 %v1297, %v1309
  %v1311 = vpop.f32.mrf.mxu0
  %1312 = vdwg.mxu0
  %1313 = vset.pattern.permute.xlu0 1
  %1314 = vperm.xlu0 %1313, %v292
  %v1315 = vpop.permute.xlu0 %1314
  %v1317 = vperm.slane %v293, 1
  %v1318 = vmul.f32 %v1315, %v1317
  %v1319 = vadd.f32 %v1310, %v1318
  %1320 = vset.pattern.permute.xlu0 2
  %1321 = vperm.xlu0 %1320, %v292
  %v1322 = vpop.permute.xlu0 %1321
  %v1324 = vperm.slane %v293, 2
  %v1325 = vmul.f32 %v1322, %v1324
  %v1326 = vadd.f32 %v1319, %v1325
  %1327 = vset.pattern.permute.xlu0 3
  %1328 = vperm.xlu0 %1327, %v292
  %v1329 = vpop.permute.xlu0 %1328
  %v1331 = vperm.slane %v293, 3
  %v1332 = vmul.f32 %v1329, %v1331
  %v1333 = vadd.f32 %v1326, %v1332
  %v1334 = vld [vmem:[%s4] sm:$0x1]
  %v1336 = vperm.slane %v1334, 0
  %v1338 = vadd.f32 %v1333, %v1336
  %v1339 = vmax.f32 %v1338, 0.0
  %v1340 = vpack.c.bf16 %v1339, %v1339
  %v1341 = vld [vmem:[%s5] sm:$0xf]
  %v1342 = vld [vmem:[%s5 + $0x4] sm:$0xf]
  %v1343 = vld [vmem:[%s5 + $0x8] sm:$0xf]
  %v1344 = vld [vmem:[%s5 + $0xc] sm:$0xf]
  %v1345 = vld [vmem:[%s6] sm:$0x1]
  %v1347 = vperm.slane %v1345, 0
  %v1353 = vunpack.c.l.b16 %v1341
  %v1354 = vunpack.c.l.b16 %v1342
  %v1355 = vunpack.c.l.b16 %v1343
  %v1356 = vunpack.c.l.b16 %v1344
  %v1357 = vpack.c.b16 %v1354, %v1353
  %v1358 = vpack.c.b16 %v1356, %v1355
  %vm1361 = vcmask 261120
  %v1363 = vsel %vm1361, %v1340, 0
  %1365 = vmatpush.bf16.msra.mxu0 0
  %1366 = vmatpush.bf16.msra.mxu0 0
  %1367 = vmatpush.bf16.msra.mxu0 0
  %1368 = vmatpush.bf16.msra.mxu0 0
  %1369 = vmatpush.bf16.msra.mxu0 0
  %1370 = vmatpush.bf16.msra.mxu0 0
  %1371 = vmatpush.bf16.msra.mxu0 %v1358
  %1372 = vmatpush.bf16.msra.mxu0 %v1357
  %1373 = vmatmul.bf16.gmra.mxu0 %v1363
  %v1374 = vpop.f32.mrf.mxu0
  %v1375 = vadd.f32 %v1347, %v1374
  %v1376 = vpop.f32.mrf.mxu0
  %1377 = vdwg.mxu0
  %v1378 = vmax.f32 %v1375, 0.0
  %v1379 = vld [vmem:[%s7] sm:$0x1]
  %v1381 = vperm.slane %v1379, 0
  %v1383 = vmul.f32 %v1378, %v1381
  %vm1384 = vcmask 254976
  %v1385 = vsel %vm1384, %v1383, 0.0
  %1386 = vadd.xlane.f32.xlu0 %v1385
  %v1387 = vpop.xlane.xlu0 %1386
  %s1388 = sld [smem:[#allocation2]]
  %v1389 = vstv %s1388
  %v1390 = vadd.f32 %v1387, %v1389
  %vm1391 = vcmask 1024
  %1392 = vst.msk [vmem:[%s9] sm:$0x3] %vm1391, %v1390
  // Predicated region
  $region38: #{flatten_mlp_img_forward.7} parent=0 // pred_check
    _
  $region39: #{flatten_mlp_img_forward.7} parent=0 // pred_check_branch
    %1394 = sbr.rel (0) target = $region41
  $region40: #{flatten_mlp_img_forward.7} parent=0 // pred_region
    _
  $region41: #{flatten_mlp_img_forward.7} parent=0 // pred_fallthru
    _
  // Predicated region
  $region42: #{flatten_mlp_img_forward.7} parent=0 // pred_check
    _
  $region43: #{flatten_mlp_img_forward.7} parent=0 // pred_check_branch
    %1396 = sbr.rel (0) target = $region45
  $region44: #{flatten_mlp_img_forward.7} parent=0 // pred_region
    _
  $region45: #{flatten_mlp_img_forward.7} parent=0 // pred_fallthru
    _

</llo_original>
